<compile_context>
chip_gen: v6e
topology: v6e:2x2x1
jax: 0.10.0
libtpu: 0.0.40
codegen_flags: <defaults>
</compile_context>

<pallas_src>
import functools

import jax
import jax.numpy as jnp
import numpy as np
from jax.experimental import pallas as pl
from jax.experimental.pallas import tpu as pltpu


# ------------------------------ fused kernel ------------------------------- #

def _category_fused_kernel(x_ref, w_ref, gamma_ref, beta_ref, gcg_ref, ggc_ref,
                           o_ref, act_ref, acc_ref, *, pad, eps):
    """One grid step = layer `l` applied to image `n`.

    x_ref:     (1, H, W, C)         unpadded input image (consumed at l == 0)
    w_ref:     (1, KH, KW*C, Cmax)  layer-l conv weight, kw-concat along K
    gamma_ref: (1, 1, Cmax)         GN gamma (layers) / ones (head, unused)
    beta_ref:  (1, 1, Cmax)         GN beta  (layers) / conv bias (head)
    gcg_ref:   (C, G)               one-hot channel->group scatter
    ggc_ref:   (G, C)               one-hot group->channel gather
    o_ref:     (1, H, W, Cmax)      output (written only at the last layer)
    act_ref:   (H+2p, W+2p, C)      VMEM-resident padded activation (persists)
    acc_ref:   (H*W, Cmax)          f32 conv accumulator scratch
    """
    H, W, Cmax = o_ref.shape[1], o_ref.shape[2], o_ref.shape[3]
    Cin = act_ref.shape[2]
    KH = w_ref.shape[1]
    KW = w_ref.shape[2] // Cin

    l = pl.program_id(1)
    n_layers = pl.num_programs(1)

    # First layer of each image: zero the padded buffer once (establishes the
    # 'same'-conv halo) and load the unpadded input into its interior.
    @pl.when(l == 0)
    def _():
        act_ref[...] = jnp.zeros_like(act_ref)
        act_ref[pad:pad + H, pad:pad + W, :] = x_ref[0].astype(jnp.float32)

    # 3x3 conv as KH matmuls with widened contraction K = KW*Cin: for each kh,
    # concatenate the KW shifted windows along the channel axis (matches the
    # (KH, KW*Cin, Cout) weight reshape done in the wrapper).
    for kh in range(KH):
        patch = jnp.concatenate(
            [act_ref[kh:kh + H, kw:kw + W, :] for kw in range(KW)],
            axis=-1).reshape(H * W, KW * Cin)
        contrib = jnp.dot(patch, w_ref[0, kh],
                          preferred_element_type=jnp.float32)
        if kh == 0:
            acc_ref[...] = contrib
        else:
            acc_ref[...] += contrib

    gamma = gamma_ref[0]          # (1, Cmax)
    beta = beta_ref[0]            # (1, Cmax)

    # Hidden layers: GroupNorm (one-hot matmul reduction, avoids lane-splitting
    # reshapes) + folded affine + ReLU, written back into the resident
    # activation buffer's interior.  Reads of act_ref complete before this
    # store (data dependence through acc), so one buffer suffices.
    @pl.when(l < n_layers - 1)
    def _():
        acc = acc_ref[...]                                   # (H*W, C)
        gcg = gcg_ref[...]                                   # (C, G)
        ggc = ggc_ref[...]                                   # (G, C)
        G = gcg.shape[1]
        cnt = jnp.float32(H * W * (Cin // G))
        gsum = jnp.sum(jnp.dot(acc, gcg, preferred_element_type=jnp.float32),
                       axis=0, keepdims=True)                # (1, G)
        gsq = jnp.sum(jnp.dot(acc * acc, gcg,
                              preferred_element_type=jnp.float32),
                      axis=0, keepdims=True)                 # (1, G)
        mean_g = gsum / cnt
        var_g = gsq / cnt - mean_g * mean_g
        mean_c = jnp.dot(mean_g, ggc, preferred_element_type=jnp.float32)
        inv_c = jax.lax.rsqrt(
            jnp.dot(var_g, ggc, preferred_element_type=jnp.float32) + eps)
        scale = inv_c * gamma                                # (1, C)
        shift = beta - mean_c * scale                        # (1, C)
        y = jnp.maximum(acc * scale + shift, 0.0)            # GN affine + ReLU
        act_ref[pad:pad + H, pad:pad + W, :] = y.reshape(H, W, Cin)

    # Head layer: conv + bias -> sigmoid, store the (channel-padded) output.
    @pl.when(l == n_layers - 1)
    def _():
        y = jax.nn.sigmoid(acc_ref[...] + beta)
        o_ref[...] = y.reshape(1, H, W, Cmax).astype(o_ref.dtype)


# -------------------------------- wrapper ----------------------------------- #

def category_forward(x, params, level, *, num_groups=32, eps=1e-5):
    """x: (N, H, W, channels) NHWC.  Returns (N, H, W, C-1) in (0, 1)."""
    N, H, W, Cch = x.shape
    layers = params["cnn"]
    head = params["heads"][level]
    KH, KW, _, channels = layers[0]["w"].shape
    assert Cch == channels
    Cout_head = head["w"].shape[-1]                 # C - 1
    Cmax = channels                                 # head lanes padded to channels
    pad = (KH - 1) // 2
    Hp, Wp = H + 2 * pad, W + 2 * pad
    L = len(layers) + 1                             # 7 GN layers + 1 head

    # Stack per-layer parameters so the layer grid axis can stream them.
    # Conv weight (KH, KW, Cin, Cout) -> (KH, KW*Cin, Cout) with kw-major rows,
    # matching the kw-concat patch layout in the kernel.
    w_list = [lyr["w"].reshape(KH, KW * channels, channels) for lyr in layers]
    w_head = jnp.pad(head["w"],
                     ((0, 0), (0, 0), (0, 0), (0, Cmax - Cout_head)))
    w_list.append(w_head.reshape(KH, KW * channels, Cmax))
    w_all = jnp.stack(w_list, axis=0)               # (L, KH, KW*C, Cmax)

    gamma_all = jnp.stack([lyr["gamma"] for lyr in layers]
                          + [jnp.ones((Cmax,), jnp.float32)]
                          ).reshape(L, 1, Cmax)
    beta_all = jnp.stack([lyr["beta"] for lyr in layers]
                         + [jnp.pad(head["b"], (0, Cmax - Cout_head))]
                         ).reshape(L, 1, Cmax)

    # PyTorch GroupNorm groups channels contiguously: group(c) = c // (C / G).
    cpg = channels // num_groups
    gcg = (jnp.arange(channels)[:, None] // cpg ==
           jnp.arange(num_groups)[None, :]).astype(jnp.float32)   # (C, G)
    ggc = gcg.T                                                   # (G, C)

    kern = functools.partial(_category_fused_kernel, pad=pad, eps=eps)
    out = pl.pallas_call(
        kern,
        out_shape=jax.ShapeDtypeStruct((N, H, W, Cmax), x.dtype),
        grid=(N, L),
        in_specs=[
            pl.BlockSpec((1, H, W, channels), lambda n, l: (n, 0, 0, 0)),
            pl.BlockSpec((1, KH, KW * channels, Cmax),
                         lambda n, l: (l, 0, 0, 0)),
            pl.BlockSpec((1, 1, Cmax), lambda n, l: (l, 0, 0)),
            pl.BlockSpec((1, 1, Cmax), lambda n, l: (l, 0, 0)),
            pl.BlockSpec((channels, num_groups), lambda n, l: (0, 0)),
            pl.BlockSpec((num_groups, channels), lambda n, l: (0, 0)),
        ],
        out_specs=pl.BlockSpec((1, H, W, Cmax), lambda n, l: (n, 0, 0, 0)),
        scratch_shapes=[
            pltpu.VMEM((Hp, Wp, channels), jnp.float32),   # resident activation
            pltpu.VMEM((H * W, Cmax), jnp.float32),        # conv accumulator
        ],
        compiler_params=pltpu.CompilerParams(
            dimension_semantics=("parallel", "arbitrary")),
    )(x, w_all, gamma_all, beta_all, gcg, ggc)
    return out[..., :Cout_head]


# --------------------------- parameter setup -------------------------------- #

def init_category_params(key, *, channels, C, num_levels, kernel_size=3):
    """Deterministic parameter init matching the module's shapes."""
    params = {"cnn": [], "heads": []}
    ks = jax.random.split(key, 7 + num_levels)
    fan_in = kernel_size * kernel_size * channels
    std = np.sqrt(2.0 / fan_in).astype(np.float32)
    for i in range(7):
        w = (jax.random.normal(ks[i],
                               (kernel_size, kernel_size, channels, channels),
                               jnp.float32) * std)
        gamma = jnp.ones((channels,), jnp.float32)   # PyTorch GroupNorm default
        beta = jnp.zeros((channels,), jnp.float32)
        params["cnn"].append({"w": w, "gamma": gamma, "beta": beta})
    for l in range(num_levels):
        w = (jax.random.normal(ks[7 + l],
                               (kernel_size, kernel_size, channels, C - 1),
                               jnp.float32) * std)
        b = jnp.full((C - 1,), 0.01 * (l + 1), jnp.float32)
        params["heads"].append({"w": w, "b": b})
    return params


# --------------------------- pure-JAX reference ----------------------------- #

def _ref_conv(x, w, precision=jax.lax.Precision.HIGHEST):
    return jax.lax.conv_general_dilated(
        x, w, window_strides=(1, 1), padding="SAME",
        dimension_numbers=("NHWC", "HWIO", "NHWC"), precision=precision)


def _ref_groupnorm(x, gamma, beta, num_groups, eps=1e-5):
    N, H, W, Cc = x.shape
    xg = x.reshape(N, H, W, num_groups, Cc // num_groups)
    mean = xg.mean(axis=(1, 2, 4), keepdims=True)
    var = ((xg - mean) ** 2).mean(axis=(1, 2, 4), keepdims=True)
    xn = ((xg - mean) * jax.lax.rsqrt(var + eps)).reshape(N, H, W, Cc)
    return xn * gamma + beta


def category_forward_ref(x, params, level, *, num_groups=32):
    for layer in params["cnn"]:
        x = jax.nn.relu(_ref_groupnorm(_ref_conv(x, layer["w"]),
                                       layer["gamma"], layer["beta"],
                                       num_groups))
    head = params["heads"][level]
    return jax.nn.sigmoid(_ref_conv(x, head["w"]) + head["b"])


# ------------------------------- main --------------------------------------- #

if __name__ == "__main__":
    # Small config consistent with the module: Category(C=2, num_levels=5,
    # channels=64).  num_groups=32 still divides 64.  Input is NHWC
    # (2, 16, 16, 64)  ==  NCHW (2, 64, 16, 16).
    N, H, W = 2, 16, 16
    channels, C, num_levels, num_groups = 64, 2, 5, 32
    level = 2

    key = jax.random.PRNGKey(0)
    kx, kp = jax.random.split(key)
    x = jax.random.normal(kx, (N, H, W, channels), jnp.float32)
    params = init_category_params(kp, channels=channels, C=C,
                                  num_levels=num_levels)

    out = category_forward(x, params, level, num_groups=num_groups)
    out = jax.block_until_ready(out)
    assert out.shape == (N, H, W, C - 1), out.shape

    ref = jax.block_until_ready(category_forward_ref(x, params, level,
                                                     num_groups=num_groups))
    np.testing.assert_allclose(np.asarray(out), np.asarray(ref),
                               atol=5e-2, rtol=5e-2)

    print("KERNEL_OK")
</pallas_src>

<mosaic_0001>
module attributes {stable_mosaic.version = 11 : i64} {
  func.func @_category_fused_kernel(%arg0: i32, %arg1: i32, %arg2: memref<1x16x16x64xf32, #tpu.memory_space<vmem>>, %arg3: memref<1x3x192x64xf32, #tpu.memory_space<vmem>>, %arg4: memref<1x1x64xf32, #tpu.memory_space<vmem>>, %arg5: memref<1x1x64xf32, #tpu.memory_space<vmem>>, %arg6: memref<64x32xf32, #tpu.memory_space<vmem>>, %arg7: memref<32x64xf32, #tpu.memory_space<vmem>>, %arg8: memref<1x16x16x64xf32, #tpu.memory_space<vmem>>, %arg9: memref<18x18x64xf32, #tpu.memory_space<vmem>>, %arg10: memref<256x64xf32, #tpu.memory_space<vmem>>) attributes {dimension_semantics = [#tpu.dimension_semantics<parallel>, #tpu.dimension_semantics<arbitrary>], iteration_bounds = array<i64: 2, 8>, scalar_prefetch = 0 : i64, scratch_operands = 2 : i64, tpu.core_type = #tpu.core_type<tc>, window_params = [{transform_indices = @transform_0, window_bounds = array<i64: 1, 16, 16, 64>}, {transform_indices = @transform_1, window_bounds = array<i64: 1, 3, 192, 64>}, {transform_indices = @transform_2, window_bounds = array<i64: 1, 1, 64>}, {transform_indices = @transform_3, window_bounds = array<i64: 1, 1, 64>}, {pipeline_mode = #tpu.pipeline_mode<synchronous>, transform_indices = @transform_4, window_bounds = array<i64: 64, 32>}, {pipeline_mode = #tpu.pipeline_mode<synchronous>, transform_indices = @transform_5, window_bounds = array<i64: 32, 64>}, {transform_indices = @transform_6, window_bounds = array<i64: 1, 16, 16, 64>}]} {
    %c0_i32 = arith.constant 0 : i32
    %0 = arith.cmpi eq, %arg1, %c0_i32 : i32
    %1 = arith.extui %0 : i1 to i32
    %c0_i32_0 = arith.constant 0 : i32
    %2 = arith.cmpi ne, %1, %c0_i32_0 : i32
    scf.if %2 {
      %cst_58 = arith.constant 0.000000e+00 : f32
      %44 = vector.broadcast %cst_58 : f32 to vector<18x18x64xf32>
      %c0_59 = arith.constant 0 : index
      %c0_60 = arith.constant 0 : index
      %c0_61 = arith.constant 0 : index
      %45 = vector.load %arg9[%c0_59, %c0_60, %c0_61] : memref<18x18x64xf32, #tpu.memory_space<vmem>>, vector<18x18x64xf32>
      tpu.vector_store %arg9[%c0_59, %c0_60, %c0_61], %44 {strides = array<i32>} : memref<18x18x64xf32, #tpu.memory_space<vmem>>, vector<18x18x64xf32>,
      %c0_62 = arith.constant 0 : index
      %c0_63 = arith.constant 0 : index
      %c0_64 = arith.constant 0 : index
      %c0_65 = arith.constant 0 : index
      %46 = vector.load %arg2[%c0_62, %c0_63, %c0_64, %c0_65] : memref<1x16x16x64xf32, #tpu.memory_space<vmem>>, vector<1x16x16x64xf32>
      %47 = vector.shape_cast %46 : vector<1x16x16x64xf32> to vector<16x16x64xf32>
      %c1_66 = arith.constant 1 : index
      %c1_67 = arith.constant 1 : index
      %c0_68 = arith.constant 0 : index
      %48 = vector.load %arg9[%c1_66, %c1_67, %c0_68] : memref<18x18x64xf32, #tpu.memory_space<vmem>>, vector<16x16x64xf32>
      tpu.vector_store %arg9[%c1_66, %c1_67, %c0_68], %47 {strides = array<i32>} : memref<18x18x64xf32, #tpu.memory_space<vmem>>, vector<16x16x64xf32>,
    } else {
    }
    %c0 = arith.constant 0 : index
    %c0_1 = arith.constant 0 : index
    %c0_2 = arith.constant 0 : index
    %3 = vector.load %arg9[%c0, %c0_1, %c0_2] : memref<18x18x64xf32, #tpu.memory_space<vmem>>, vector<16x16x64xf32>
    %c0_3 = arith.constant 0 : index
    %c1 = arith.constant 1 : index
    %c0_4 = arith.constant 0 : index
    %4 = vector.load %arg9[%c0_3, %c1, %c0_4] : memref<18x18x64xf32, #tpu.memory_space<vmem>>, vector<16x16x64xf32>
    %c0_5 = arith.constant 0 : index
    %c2 = arith.constant 2 : index
    %c0_6 = arith.constant 0 : index
    %5 = vector.load %arg9[%c0_5, %c2, %c0_6] : memref<18x18x64xf32, #tpu.memory_space<vmem>>, vector<16x16x64xf32>
    %6 = tpu.concatenate %3, %4, %5 in 2 : vector<16x16x64xf32>, vector<16x16x64xf32>, vector<16x16x64xf32> -> vector<16x16x192xf32>
    %7 = vector.shape_cast %6 : vector<16x16x192xf32> to vector<256x192xf32>
    %c0_7 = arith.constant 0 : index
    %c0_8 = arith.constant 0 : index
    %c0_9 = arith.constant 0 : index
    %c0_10 = arith.constant 0 : index
    %8 = vector.load %arg3[%c0_7, %c0_8, %c0_9, %c0_10] : memref<1x3x192x64xf32, #tpu.memory_space<vmem>>, vector<1x1x192x64xf32>
    %9 = vector.shape_cast %8 : vector<1x1x192x64xf32> to vector<192x64xf32>
    %cst = arith.constant dense<0.000000e+00> : vector<256x64xf32>
    %10 = tpu.matmul %7, %9, %cst {dimension_numbers = #tpu.dot_dimension_numbers<[1], [0], [0], [1], [0, 0, 1, 1], [], []>} : vector<256x192xf32>, vector<192x64xf32>, vector<256x64xf32> -> vector<256x64xf32>
    %c0_11 = arith.constant 0 : index
    %c0_12 = arith.constant 0 : index
    %11 = vector.load %arg10[%c0_11, %c0_12] : memref<256x64xf32, #tpu.memory_space<vmem>>, vector<256x64xf32>
    tpu.vector_store %arg10[%c0_11, %c0_12], %10 {strides = array<i32>} : memref<256x64xf32, #tpu.memory_space<vmem>>, vector<256x64xf32>,
    %c1_13 = arith.constant 1 : index
    %c0_14 = arith.constant 0 : index
    %c0_15 = arith.constant 0 : index
    %12 = vector.load %arg9[%c1_13, %c0_14, %c0_15] : memref<18x18x64xf32, #tpu.memory_space<vmem>>, vector<16x16x64xf32>
    %c1_16 = arith.constant 1 : index
    %c1_17 = arith.constant 1 : index
    %c0_18 = arith.constant 0 : index
    %13 = vector.load %arg9[%c1_16, %c1_17, %c0_18] : memref<18x18x64xf32, #tpu.memory_space<vmem>>, vector<16x16x64xf32>
    %c1_19 = arith.constant 1 : index
    %c2_20 = arith.constant 2 : index
    %c0_21 = arith.constant 0 : index
    %14 = vector.load %arg9[%c1_19, %c2_20, %c0_21] : memref<18x18x64xf32, #tpu.memory_space<vmem>>, vector<16x16x64xf32>
    %15 = tpu.concatenate %12, %13, %14 in 2 : vector<16x16x64xf32>, vector<16x16x64xf32>, vector<16x16x64xf32> -> vector<16x16x192xf32>
    %16 = vector.shape_cast %15 : vector<16x16x192xf32> to vector<256x192xf32>
    %c0_22 = arith.constant 0 : index
    %c1_23 = arith.constant 1 : index
    %c0_24 = arith.constant 0 : index
    %c0_25 = arith.constant 0 : index
    %17 = vector.load %arg3[%c0_22, %c1_23, %c0_24, %c0_25] : memref<1x3x192x64xf32, #tpu.memory_space<vmem>>, vector<1x1x192x64xf32>
    %18 = vector.shape_cast %17 : vector<1x1x192x64xf32> to vector<192x64xf32>
    %cst_26 = arith.constant dense<0.000000e+00> : vector<256x64xf32>
    %19 = tpu.matmul %16, %18, %cst_26 {dimension_numbers = #tpu.dot_dimension_numbers<[1], [0], [0], [1], [0, 0, 1, 1], [], []>} : vector<256x192xf32>, vector<192x64xf32>, vector<256x64xf32> -> vector<256x64xf32>
    %c0_27 = arith.constant 0 : index
    %c0_28 = arith.constant 0 : index
    %20 = vector.load %arg10[%c0_27, %c0_28] : memref<256x64xf32, #tpu.memory_space<vmem>>, vector<256x64xf32>
    %21 = arith.addf %20, %19 : vector<256x64xf32>
    %c0_29 = arith.constant 0 : index
    %c0_30 = arith.constant 0 : index
    %22 = vector.load %arg10[%c0_29, %c0_30] : memref<256x64xf32, #tpu.memory_space<vmem>>, vector<256x64xf32>
    tpu.vector_store %arg10[%c0_29, %c0_30], %21 {strides = array<i32>} : memref<256x64xf32, #tpu.memory_space<vmem>>, vector<256x64xf32>,
    %c2_31 = arith.constant 2 : index
    %c0_32 = arith.constant 0 : index
    %c0_33 = arith.constant 0 : index
    %23 = vector.load %arg9[%c2_31, %c0_32, %c0_33] : memref<18x18x64xf32, #tpu.memory_space<vmem>>, vector<16x16x64xf32>
    %c2_34 = arith.constant 2 : index
    %c1_35 = arith.constant 1 : index
    %c0_36 = arith.constant 0 : index
    %24 = vector.load %arg9[%c2_34, %c1_35, %c0_36] : memref<18x18x64xf32, #tpu.memory_space<vmem>>, vector<16x16x64xf32>
    %c2_37 = arith.constant 2 : index
    %c2_38 = arith.constant 2 : index
    %c0_39 = arith.constant 0 : index
    %25 = vector.load %arg9[%c2_37, %c2_38, %c0_39] : memref<18x18x64xf32, #tpu.memory_space<vmem>>, vector<16x16x64xf32>
    %26 = tpu.concatenate %23, %24, %25 in 2 : vector<16x16x64xf32>, vector<16x16x64xf32>, vector<16x16x64xf32> -> vector<16x16x192xf32>
    %27 = vector.shape_cast %26 : vector<16x16x192xf32> to vector<256x192xf32>
    %c0_40 = arith.constant 0 : index
    %c2_41 = arith.constant 2 : index
    %c0_42 = arith.constant 0 : index
    %c0_43 = arith.constant 0 : index
    %28 = vector.load %arg3[%c0_40, %c2_41, %c0_42, %c0_43] : memref<1x3x192x64xf32, #tpu.memory_space<vmem>>, vector<1x1x192x64xf32>
    %29 = vector.shape_cast %28 : vector<1x1x192x64xf32> to vector<192x64xf32>
    %cst_44 = arith.constant dense<0.000000e+00> : vector<256x64xf32>
    %30 = tpu.matmul %27, %29, %cst_44 {dimension_numbers = #tpu.dot_dimension_numbers<[1], [0], [0], [1], [0, 0, 1, 1], [], []>} : vector<256x192xf32>, vector<192x64xf32>, vector<256x64xf32> -> vector<256x64xf32>
    %c0_45 = arith.constant 0 : index
    %c0_46 = arith.constant 0 : index
    %31 = vector.load %arg10[%c0_45, %c0_46] : memref<256x64xf32, #tpu.memory_space<vmem>>, vector<256x64xf32>
    %32 = arith.addf %31, %30 : vector<256x64xf32>
    %c0_47 = arith.constant 0 : index
    %c0_48 = arith.constant 0 : index
    %33 = vector.load %arg10[%c0_47, %c0_48] : memref<256x64xf32, #tpu.memory_space<vmem>>, vector<256x64xf32>
    tpu.vector_store %arg10[%c0_47, %c0_48], %32 {strides = array<i32>} : memref<256x64xf32, #tpu.memory_space<vmem>>, vector<256x64xf32>,
    %c0_49 = arith.constant 0 : index
    %c0_50 = arith.constant 0 : index
    %c0_51 = arith.constant 0 : index
    %34 = vector.load %arg4[%c0_49, %c0_50, %c0_51] : memref<1x1x64xf32, #tpu.memory_space<vmem>>, vector<1x1x64xf32>
    %35 = vector.shape_cast %34 : vector<1x1x64xf32> to vector<1x64xf32>
    %c0_52 = arith.constant 0 : index
    %c0_53 = arith.constant 0 : index
    %c0_54 = arith.constant 0 : index
    %36 = vector.load %arg5[%c0_52, %c0_53, %c0_54] : memref<1x1x64xf32, #tpu.memory_space<vmem>>, vector<1x1x64xf32>
    %37 = vector.shape_cast %36 : vector<1x1x64xf32> to vector<1x64xf32>
    %c7_i32 = arith.constant 7 : i32
    %38 = arith.cmpi slt, %arg1, %c7_i32 : i32
    %39 = arith.extui %38 : i1 to i32
    %c0_i32_55 = arith.constant 0 : i32
    %40 = arith.cmpi ne, %39, %c0_i32_55 : i32
    scf.if %40 {
      %c0_58 = arith.constant 0 : index
      %c0_59 = arith.constant 0 : index
      %44 = vector.load %arg10[%c0_58, %c0_59] : memref<256x64xf32, #tpu.memory_space<vmem>>, vector<256x64xf32>
      %c0_60 = arith.constant 0 : index
      %c0_61 = arith.constant 0 : index
      %45 = vector.load %arg6[%c0_60, %c0_61] : memref<64x32xf32, #tpu.memory_space<vmem>>, vector<64x32xf32>
      %c0_62 = arith.constant 0 : index
      %c0_63 = arith.constant 0 : index
      %46 = vector.load %arg7[%c0_62, %c0_63] : memref<32x64xf32, #tpu.memory_space<vmem>>, vector<32x64xf32>
      %cst_64 = arith.constant dense<0.000000e+00> : vector<256x32xf32>
      %47 = tpu.matmul %44, %45, %cst_64 {dimension_numbers = #tpu.dot_dimension_numbers<[1], [0], [0], [1], [0, 0, 1, 1], [], []>} : vector<256x64xf32>, vector<64x32xf32>, vector<256x32xf32> -> vector<256x32xf32>
      %cst_65 = arith.constant dense<0.000000e+00> : vector<32xf32>
      %48 = vector.multi_reduction <add>, %47, %cst_65 [0] : vector<256x32xf32> to vector<32xf32>
      %49 = vector.shape_cast %48 : vector<32xf32> to vector<1x32xf32>
      %50 = arith.mulf %44, %44 : vector<256x64xf32>
      %cst_66 = arith.constant dense<0.000000e+00> : vector<256x32xf32>
      %51 = tpu.matmul %50, %45, %cst_66 {dimension_numbers = #tpu.dot_dimension_numbers<[1], [0], [0], [1], [0, 0, 1, 1], [], []>} : vector<256x64xf32>, vector<64x32xf32>, vector<256x32xf32> -> vector<256x32xf32>
      %cst_67 = arith.constant dense<0.000000e+00> : vector<32xf32>
      %52 = vector.multi_reduction <add>, %51, %cst_67 [0] : vector<256x32xf32> to vector<32xf32>
      %53 = vector.shape_cast %52 : vector<32xf32> to vector<1x32xf32>
      %cst_68 = arith.constant 5.120000e+02 : f32
      %54 = vector.broadcast %cst_68 : f32 to vector<1x32xf32>
      %55 = arith.divf %49, %54 : vector<1x32xf32>
      %cst_69 = arith.constant 5.120000e+02 : f32
      %56 = vector.broadcast %cst_69 : f32 to vector<1x32xf32>
      %57 = arith.divf %53, %56 : vector<1x32xf32>
      %58 = arith.mulf %55, %55 : vector<1x32xf32>
      %59 = arith.subf %57, %58 : vector<1x32xf32>
      %cst_70 = arith.constant dense<0.000000e+00> : vector<1x64xf32>
      %60 = tpu.matmul %55, %46, %cst_70 {dimension_numbers = #tpu.dot_dimension_numbers<[1], [0], [0], [1], [0, 0, 1, 1], [], []>} : vector<1x32xf32>, vector<32x64xf32>, vector<1x64xf32> -> vector<1x64xf32>
      %cst_71 = arith.constant dense<0.000000e+00> : vector<1x64xf32>
      %61 = tpu.matmul %59, %46, %cst_71 {dimension_numbers = #tpu.dot_dimension_numbers<[1], [0], [0], [1], [0, 0, 1, 1], [], []>} : vector<1x32xf32>, vector<32x64xf32>, vector<1x64xf32> -> vector<1x64xf32>
      %cst_72 = arith.constant 9.99999974E-6 : f32
      %62 = vector.broadcast %cst_72 : f32 to vector<1x64xf32>
      %63 = arith.addf %61, %62 : vector<1x64xf32>
      %64 = math.rsqrt %63 : vector<1x64xf32>
      %65 = arith.mulf %64, %35 : vector<1x64xf32>
      %66 = arith.mulf %60, %65 : vector<1x64xf32>
      %67 = arith.subf %37, %66 : vector<1x64xf32>
      %68 = vector.broadcast %65 : vector<1x64xf32> to vector<256x64xf32>
      %69 = arith.mulf %44, %68 : vector<256x64xf32>
      %70 = vector.broadcast %67 : vector<1x64xf32> to vector<256x64xf32>
      %71 = arith.addf %69, %70 : vector<256x64xf32>
      %cst_73 = arith.constant 0.000000e+00 : f32
      %72 = vector.broadcast %cst_73 : f32 to vector<256x64xf32>
      %73 = arith.maximumf %71, %72 : vector<256x64xf32>
      %74 = vector.shape_cast %73 : vector<256x64xf32> to vector<16x16x64xf32>
      %c1_74 = arith.constant 1 : index
      %c1_75 = arith.constant 1 : index
      %c0_76 = arith.constant 0 : index
      %75 = vector.load %arg9[%c1_74, %c1_75, %c0_76] : memref<18x18x64xf32, #tpu.memory_space<vmem>>, vector<16x16x64xf32>
      tpu.vector_store %arg9[%c1_74, %c1_75, %c0_76], %74 {strides = array<i32>} : memref<18x18x64xf32, #tpu.memory_space<vmem>>, vector<16x16x64xf32>,
    } else {
    }
    %c7_i32_56 = arith.constant 7 : i32
    %41 = arith.cmpi eq, %arg1, %c7_i32_56 : i32
    %42 = arith.extui %41 : i1 to i32
    %c0_i32_57 = arith.constant 0 : i32
    %43 = arith.cmpi ne, %42, %c0_i32_57 : i32
    scf.if %43 {
      %c0_58 = arith.constant 0 : index
      %c0_59 = arith.constant 0 : index
      %44 = vector.load %arg10[%c0_58, %c0_59] : memref<256x64xf32, #tpu.memory_space<vmem>>, vector<256x64xf32>
      %45 = vector.broadcast %37 : vector<1x64xf32> to vector<256x64xf32>
      %46 = arith.addf %44, %45 : vector<256x64xf32>
      %47 = arith.negf %46 : vector<256x64xf32>
      %48 = math.exp %47 : vector<256x64xf32>
      %cst_60 = arith.constant 1.000000e+00 : f32
      %49 = vector.broadcast %cst_60 : f32 to vector<256x64xf32>
      %50 = arith.addf %49, %48 : vector<256x64xf32>
      %51 = arith.divf %49, %50 : vector<256x64xf32>
      %52 = vector.shape_cast %51 : vector<256x64xf32> to vector<1x16x16x64xf32>
      %c0_61 = arith.constant 0 : index
      %c0_62 = arith.constant 0 : index
      %c0_63 = arith.constant 0 : index
      %c0_64 = arith.constant 0 : index
      %53 = vector.load %arg8[%c0_61, %c0_62, %c0_63, %c0_64] : memref<1x16x16x64xf32, #tpu.memory_space<vmem>>, vector<1x16x16x64xf32>
      tpu.vector_store %arg8[%c0_61, %c0_62, %c0_63, %c0_64], %52 {strides = array<i32>} : memref<1x16x16x64xf32, #tpu.memory_space<vmem>>, vector<1x16x16x64xf32>,
    } else {
    }
    return
  }
  func.func @transform_0(%arg0: i32, %arg1: i32) -> (i32, i32, i32, i32) {
    %c0_i32 = arith.constant 0 : i32
    %c0_i32_0 = arith.constant 0 : i32
    %c0_i32_1 = arith.constant 0 : i32
    %c0_i32_2 = arith.constant 0 : i32
    return %arg0, %c0_i32, %c0_i32_0, %c0_i32_1 : i32, i32, i32, i32
  }
  func.func @transform_1(%arg0: i32, %arg1: i32) -> (i32, i32, i32, i32) {
    %c0_i32 = arith.constant 0 : i32
    %c0_i32_0 = arith.constant 0 : i32
    %c0_i32_1 = arith.constant 0 : i32
    %c0_i32_2 = arith.constant 0 : i32
    return %arg1, %c0_i32, %c0_i32_0, %c0_i32_1 : i32, i32, i32, i32
  }
  func.func @transform_2(%arg0: i32, %arg1: i32) -> (i32, i32, i32) {
    %c0_i32 = arith.constant 0 : i32
    %c0_i32_0 = arith.constant 0 : i32
    %c0_i32_1 = arith.constant 0 : i32
    return %arg1, %c0_i32, %c0_i32_0 : i32, i32, i32
  }
  func.func @transform_3(%arg0: i32, %arg1: i32) -> (i32, i32, i32) {
    %c0_i32 = arith.constant 0 : i32
    %c0_i32_0 = arith.constant 0 : i32
    %c0_i32_1 = arith.constant 0 : i32
    return %arg1, %c0_i32, %c0_i32_0 : i32, i32, i32
  }
  func.func @transform_4(%arg0: i32, %arg1: i32) -> (i32, i32) {
    %c0_i32 = arith.constant 0 : i32
    %c0_i32_0 = arith.constant 0 : i32
    %c0_i32_1 = arith.constant 0 : i32
    return %c0_i32, %c0_i32_0 : i32, i32
  }
  func.func @transform_5(%arg0: i32, %arg1: i32) -> (i32, i32) {
    %c0_i32 = arith.constant 0 : i32
    %c0_i32_0 = arith.constant 0 : i32
    %c0_i32_1 = arith.constant 0 : i32
    return %c0_i32, %c0_i32_0 : i32, i32
  }
  func.func @transform_6(%arg0: i32, %arg1: i32) -> (i32, i32, i32, i32) {
    %c0_i32 = arith.constant 0 : i32
    %c0_i32_0 = arith.constant 0 : i32
    %c0_i32_1 = arith.constant 0 : i32
    %c0_i32_2 = arith.constant 0 : i32
    return %arg0, %c0_i32, %c0_i32_0, %c0_i32_1 : i32, i32, i32, i32
  }
}

</mosaic_0001>

<llo_original>
// kernel: tpu_custom_call.1
$region0: #{tpu_custom_call.1}
  #allocation0 [shape = 'u32[]', space=smem, size = 0x4, offset = 0x4, fixed_abs, tag = 'smem constant byte address 0x4 - core index']
  #allocation1 [shape = 'u32[144,128]{1,0:T(1,128)}', space=vmem, size = 0x12000, scoped, tag = 'internal scratch']
  #allocation2 [shape = 'f32[18,18,64]{2,1,0:T(8,128)}', space=vmem, size = 0x36000, scoped, tag = 'scratch operand']
  #allocation3 [shape = 'f32[256,64]{1,0:T(8,128)}', space=vmem, size = 0x20000, scoped, tag = 'scratch operand']
  %s0 = inlined_call_operand.vmem [shape: f32[2,16,16,64], index: 0, kind: input, shape index: {}]
  %s1 = inlined_call_operand.vmem [shape: f32[8,3,192,64], index: 1, kind: input, shape index: {}]
  %s2 = inlined_call_operand.vmem [shape: f32[8,1,64], index: 2, kind: input, shape index: {}]
  %s3 = inlined_call_operand.vmem [shape: f32[8,1,64], index: 3, kind: input, shape index: {}]
  %s4 = inlined_call_operand.vmem [shape: f32[64,32], index: 4, kind: input, shape index: {}]
  %s5 = inlined_call_operand.vmem [shape: f32[32,64], index: 5, kind: input, shape index: {}]
  %s6 = inlined_call_operand.hbm [shape: f32[2,16,16,64], index: 6, kind: output, shape index: {}]
  %s7 = sld [smem:[#allocation0]]
  $region69: #{tpu_custom_call.1} parent=0
    _
  %s9 = ssub.s32 1, %s7
  %s10 = scalar_select 0, %s9, %s7
  $region1: #{tpu_custom_call.1} parent=0
    #allocation4 [shape = 'u8[262144]{0}', space=vmem, size = 0x40000, scoped, tag = 'output window, operand 0']
    #allocation5 [shape = 's32[2]{0}', space=sflag, size = 0x8, scoped, tag = 'scoped memory for tpu_custom_call.1']
    %11 = vsyncpa [#allocation5], 0
    %s12 = scalar_lea.sflag [#allocation5], 1
    %13 = vsyncpa %s12, 0
    loop: start=0, step=1, limit=18
    $region2: #{tpu_custom_call.1} parent=1 // loop_pre_header
      _
    $region3: #{tpu_custom_call.1} parent=1 // loop_header
      %s15 = sphi 0, %s19
      %p16 = scmp.ge.s32.totalorder %s15, 18
      %s22 = sphi 0, %s34
      %s23 = sphi 0, %s30
      %s24 = sphi 0, %s22
      %s25 = sphi 0, %s23
      %s26 = sphi 0, %s24
      %s27 = sphi 0, %s25
      %s37 = sphi 0, %s39
      %s40 = sphi 0, %s37
      %s41 = sphi 0, %s40
      %s57 = sphi 0, %s41
      %s63 = sphi 0, %s65
      %s66 = sphi 0, %s63
      %s67 = sphi 0, %s66
      %s83 = sphi 0, %s67
      %s89 = sphi 0, %s91
      %s92 = sphi 0, %s89
      %s93 = sphi 0, %s92
      %s109 = sphi 0, %s93
      %s115 = sphi 0, %s117
      %s118 = sphi 0, %s115
      %s119 = sphi 0, %s118
      %s135 = sphi 0, %s119
      %s139 = sphi 0, %s139
      %s141 = sphi 0, %s139
      %s142 = sphi 0, %s141
      %s156 = sphi 0, %s142
      %s160 = sphi 0, %s160
      %s162 = sphi 0, %s160
      %s163 = sphi 0, %s162
      %s177 = sphi 0, %s163
      %s183 = sphi 0, %s185
      %s186 = sphi 0, %s183
      %s187 = sphi 0, %s186
      %s203 = sphi 0, %s187
    $region4: #{tpu_custom_call.1} parent=1 // loop_header_branch
      %18 = sbr.rel (%p16) target = $region8
    $region5: #{tpu_custom_call.1} parent=1 // loop_body
      %s20 = ssub.s32 %s15, 1
      %s21 = ssub.s32 %s15, 2
      %s28 = sadd.s32 1, %s23
      %p29 = scmp.ge.s32.totalorder %s28, 8
      %s30 = scalar_select %p29, 0, %s28
      %s31 = sadd.s32 1, %s22
      %s32 = scalar_select %p29, %s31, %s22
      %p33 = scmp.ge.s32.totalorder %s32, 2
      %s34 = scalar_select %p33, 0, %s32
      %s35 = ssub.s32 %s22, %s34
      %p36 = scmp.eq.s32.totalorder %s35, 0
      %s38 = sadd.s32 %s37, 1
      %s39 = scalar_select %p36, %s37, %s38
      %p42 = pneg %p36
      %p43 = scmp.eq.s32.totalorder %s15, 15
      %p44 = por %p42, %p43
      %p45 = scmp.ne.s32.totalorder %s37, %s40
      %p46 = scmp.eq.s32.totalorder %s15, 0
      %p47 = por %p45, %p46
      %p48 = scmp.ne.s32.totalorder %s37, %s40
      %p49 = scmp.eq.s32.totalorder %s20, 15
      %p50 = por %p48, %p49
      %p51 = scmp.ne.s32.totalorder %s40, %s41
      %p52 = scmp.eq.s32.totalorder %s20, 0
      %p53 = por %p51, %p52
      %p54 = scmp.ne.s32.totalorder %s40, %s41
      %p55 = scmp.eq.s32.totalorder %s21, 15
      %p56 = por %p54, %p55
      %p58 = scmp.ne.s32.totalorder %s41, %s57
      %p59 = scmp.eq.s32.totalorder %s21, 0
      %p60 = por %p58, %p59
      %s61 = ssub.s32 %s23, %s30
      %p62 = scmp.eq.s32.totalorder %s61, 0
      %s64 = sadd.s32 %s63, 1
      %s65 = scalar_select %p62, %s63, %s64
      %p68 = pneg %p62
      %p69 = scmp.eq.s32.totalorder %s15, 15
      %p70 = por %p68, %p69
      %p71 = scmp.ne.s32.totalorder %s63, %s66
      %p72 = scmp.eq.s32.totalorder %s15, 0
      %p73 = por %p71, %p72
      %p74 = scmp.ne.s32.totalorder %s63, %s66
      %p75 = scmp.eq.s32.totalorder %s20, 15
      %p76 = por %p74, %p75
      %p77 = scmp.ne.s32.totalorder %s66, %s67
      %p78 = scmp.eq.s32.totalorder %s20, 0
      %p79 = por %p77, %p78
      %p80 = scmp.ne.s32.totalorder %s66, %s67
      %p81 = scmp.eq.s32.totalorder %s21, 15
      %p82 = por %p80, %p81
      %p84 = scmp.ne.s32.totalorder %s67, %s83
      %p85 = scmp.eq.s32.totalorder %s21, 0
      %p86 = por %p84, %p85
      %s87 = ssub.s32 %s23, %s30
      %p88 = scmp.eq.s32.totalorder %s87, 0
      %s90 = sadd.s32 %s89, 1
      %s91 = scalar_select %p88, %s89, %s90
      %p94 = pneg %p88
      %p95 = scmp.eq.s32.totalorder %s15, 15
      %p96 = por %p94, %p95
      %p97 = scmp.ne.s32.totalorder %s89, %s92
      %p98 = scmp.eq.s32.totalorder %s15, 0
      %p99 = por %p97, %p98
      %p100 = scmp.ne.s32.totalorder %s89, %s92
      %p101 = scmp.eq.s32.totalorder %s20, 15
      %p102 = por %p100, %p101
      %p103 = scmp.ne.s32.totalorder %s92, %s93
      %p104 = scmp.eq.s32.totalorder %s20, 0
      %p105 = por %p103, %p104
      %p106 = scmp.ne.s32.totalorder %s92, %s93
      %p107 = scmp.eq.s32.totalorder %s21, 15
      %p108 = por %p106, %p107
      %p110 = scmp.ne.s32.totalorder %s93, %s109
      %p111 = scmp.eq.s32.totalorder %s21, 0
      %p112 = por %p110, %p111
      %s113 = ssub.s32 %s23, %s30
      %p114 = scmp.eq.s32.totalorder %s113, 0
      %s116 = sadd.s32 %s115, 1
      %s117 = scalar_select %p114, %s115, %s116
      %p120 = pneg %p114
      %p121 = scmp.eq.s32.totalorder %s15, 15
      %p122 = por %p120, %p121
      %p123 = scmp.ne.s32.totalorder %s115, %s118
      %p124 = scmp.eq.s32.totalorder %s15, 0
      %p125 = por %p123, %p124
      %p126 = scmp.ne.s32.totalorder %s115, %s118
      %p127 = scmp.eq.s32.totalorder %s20, 15
      %p128 = por %p126, %p127
      %p129 = scmp.ne.s32.totalorder %s118, %s119
      %p130 = scmp.eq.s32.totalorder %s20, 0
      %p131 = por %p129, %p130
      %p132 = scmp.ne.s32.totalorder %s118, %s119
      %p133 = scmp.eq.s32.totalorder %s21, 15
      %p134 = por %p132, %p133
      %p136 = scmp.ne.s32.totalorder %s119, %s135
      %p137 = scmp.eq.s32.totalorder %s21, 0
      %p138 = por %p136, %p137
      %s140 = sadd.s32 %s139, 1
      %p143 = scmp.eq.s32.totalorder %s15, 15
      %p144 = scmp.ne.s32.totalorder %s139, %s141
      %p145 = scmp.eq.s32.totalorder %s15, 0
      %p146 = por %p144, %p145
      %p147 = scmp.ne.s32.totalorder %s139, %s141
      %p148 = scmp.eq.s32.totalorder %s20, 15
      %p149 = por %p147, %p148
      %p150 = scmp.ne.s32.totalorder %s141, %s142
      %p151 = scmp.eq.s32.totalorder %s20, 0
      %p152 = por %p150, %p151
      %p153 = scmp.ne.s32.totalorder %s141, %s142
      %p154 = scmp.eq.s32.totalorder %s21, 15
      %p155 = por %p153, %p154
      %p157 = scmp.ne.s32.totalorder %s142, %s156
      %p158 = scmp.eq.s32.totalorder %s21, 0
      %p159 = por %p157, %p158
      %s161 = sadd.s32 %s160, 1
      %p164 = scmp.eq.s32.totalorder %s15, 15
      %p165 = scmp.ne.s32.totalorder %s160, %s162
      %p166 = scmp.eq.s32.totalorder %s15, 0
      %p167 = por %p165, %p166
      %p168 = scmp.ne.s32.totalorder %s160, %s162
      %p169 = scmp.eq.s32.totalorder %s20, 15
      %p170 = por %p168, %p169
      %p171 = scmp.ne.s32.totalorder %s162, %s163
      %p172 = scmp.eq.s32.totalorder %s20, 0
      %p173 = por %p171, %p172
      %p174 = scmp.ne.s32.totalorder %s162, %s163
      %p175 = scmp.eq.s32.totalorder %s21, 15
      %p176 = por %p174, %p175
      %p178 = scmp.ne.s32.totalorder %s163, %s177
      %p179 = scmp.eq.s32.totalorder %s21, 0
      %p180 = por %p178, %p179
      %s181 = ssub.s32 %s22, %s34
      %p182 = scmp.eq.s32.totalorder %s181, 0
      %s184 = sadd.s32 %s183, 1
      %s185 = scalar_select %p182, %s183, %s184
      %p188 = pneg %p182
      %p189 = scmp.eq.s32.totalorder %s15, 15
      %p190 = por %p188, %p189
      %p191 = scmp.ne.s32.totalorder %s183, %s186
      %p192 = scmp.eq.s32.totalorder %s15, 0
      %p193 = por %p191, %p192
      %p194 = scmp.ne.s32.totalorder %s183, %s186
      %p195 = scmp.eq.s32.totalorder %s20, 15
      %p196 = por %p194, %p195
      %p197 = scmp.ne.s32.totalorder %s186, %s187
      %p198 = scmp.eq.s32.totalorder %s20, 0
      %p199 = por %p197, %p198
      %p200 = scmp.ne.s32.totalorder %s186, %s187
      %p201 = scmp.eq.s32.totalorder %s21, 15
      %p202 = por %p200, %p201
      %p204 = scmp.ne.s32.totalorder %s187, %s203
      %p205 = scmp.eq.s32.totalorder %s21, 0
      %p206 = por %p204, %p205
      %p207 = scmp.le.s32.totalorder 1, %s15
      %p208 = scmp.lt.s32.totalorder %s15, 17
      %p209 = pnand %p207, %p208
      %p210 = pneg %p209
      // Predicated region
      $region9: #{tpu_custom_call.1} parent=5 // pred_check
        _
      $region10: #{tpu_custom_call.1} parent=5 // pred_check_branch
        %212 = sbr.rel (%p209) target = $region12
      $region11: #{tpu_custom_call.1} parent=5 // pred_region
        %s213 = ssub.s32 %s15, 1
        // Predicated region
        $region13: #{tpu_custom_call.1} parent=11 // pred_check
          %p214 = pneg %p152
        $region14: #{tpu_custom_call.1} parent=11 // pred_check_branch
          %216 = sbr.rel (%p214) target = $region16
        $region15: #{tpu_custom_call.1} parent=11 // pred_region
          _
        $region16: #{tpu_custom_call.1} parent=11 // pred_fallthru
          _
        // Predicated region
        $region17: #{tpu_custom_call.1} parent=11 // pred_check
          %p217 = pneg %p173
        $region18: #{tpu_custom_call.1} parent=11 // pred_check_branch
          %219 = sbr.rel (%p217) target = $region20
        $region19: #{tpu_custom_call.1} parent=11 // pred_region
          _
        $region20: #{tpu_custom_call.1} parent=11 // pred_fallthru
          _
      $region12: #{tpu_custom_call.1} parent=5 // pred_fallthru
        _
      %p220 = scmp.lt.s32.totalorder %s15, 16
      // Predicated region
      $region21: #{tpu_custom_call.1} parent=5 // pred_check
        %p221 = pneg %p220
      $region22: #{tpu_custom_call.1} parent=5 // pred_check_branch
        %223 = sbr.rel (%p221) target = $region24
      $region23: #{tpu_custom_call.1} parent=5 // pred_region
        // Predicated region
        $region25: #{tpu_custom_call.1} parent=23 // pred_check
          %p224 = pneg %p47
        $region26: #{tpu_custom_call.1} parent=23 // pred_check_branch
          %226 = sbr.rel (%p224) target = $region28
        $region27: #{tpu_custom_call.1} parent=23 // pred_region
          %p227 = scmp.lt.s32.totalorder %s22, 1
          %s228 = scalar_select %p227, %s22, 1
          %s229 = smul.addr %s228, 32
          %s230 = smul.addr %s229, 8
          %s231 = scalar_lea.vmem %s0, %s230
        $region28: #{tpu_custom_call.1} parent=23 // pred_fallthru
          _
        // Predicated region
        $region29: #{tpu_custom_call.1} parent=23 // pred_check
          %p232 = pneg %p73
        $region30: #{tpu_custom_call.1} parent=23 // pred_check_branch
          %234 = sbr.rel (%p232) target = $region32
        $region31: #{tpu_custom_call.1} parent=23 // pred_region
          %p235 = scmp.lt.s32.totalorder %s23, 7
          %s236 = scalar_select %p235, %s23, 7
          %s237 = smul.addr %s236, 72
          %s238 = smul.addr %s237, 8
          %s239 = scalar_lea.vmem %s1, %s238
        $region32: #{tpu_custom_call.1} parent=23 // pred_fallthru
          _
        // Predicated region
        $region33: #{tpu_custom_call.1} parent=23 // pred_check
          %p240 = pneg %p99
        $region34: #{tpu_custom_call.1} parent=23 // pred_check_branch
          %242 = sbr.rel (%p240) target = $region36
        $region35: #{tpu_custom_call.1} parent=23 // pred_region
          %p243 = scmp.lt.s32.totalorder %s23, 7
          %s244 = scalar_select %p243, %s23, 7
          %s245 = scalar_lea.vmem %s2, %s244
        $region36: #{tpu_custom_call.1} parent=23 // pred_fallthru
          _
        // Predicated region
        $region37: #{tpu_custom_call.1} parent=23 // pred_check
          %p246 = pneg %p125
        $region38: #{tpu_custom_call.1} parent=23 // pred_check_branch
          %248 = sbr.rel (%p246) target = $region40
        $region39: #{tpu_custom_call.1} parent=23 // pred_region
          %p249 = scmp.lt.s32.totalorder %s23, 7
          %s250 = scalar_select %p249, %s23, 7
          %s251 = scalar_lea.vmem %s3, %s250
        $region40: #{tpu_custom_call.1} parent=23 // pred_fallthru
          _
      $region24: #{tpu_custom_call.1} parent=5 // pred_fallthru
        _
      %p252 = scmp.le.s32.totalorder 1, %s15
      %p253 = scmp.lt.s32.totalorder %s15, 17
      %p254 = pnand %p252, %p253
      %p255 = pneg %p254
      // Predicated region
      $region41: #{tpu_custom_call.1} parent=5 // pred_check
        _
      $region42: #{tpu_custom_call.1} parent=5 // pred_check_branch
        %257 = sbr.rel (%p254) target = $region44
      $region43: #{tpu_custom_call.1} parent=5 // pred_region
        %s258 = ssub.s32 %s15, 1
        %p259 = scmp.lt.s32.totalorder %s24, 1
        %s260 = scalar_select %p259, %s24, 1
        %s261 = smul.addr %s260, 32
        %s262 = smul.addr %s261, 8
        %s263 = scalar_lea.vmem %s0, %s262
        %p264 = pneg %p53
        %p265 = pneg %p50
        %p266 = scmp.lt.s32.totalorder %s25, 7
        %s267 = scalar_select %p266, %s25, 7
        %s268 = smul.addr %s267, 72
        %s269 = smul.addr %s268, 8
        %s270 = scalar_lea.vmem %s1, %s269
        %p271 = pneg %p79
        %p272 = pneg %p76
        %p273 = scmp.lt.s32.totalorder %s25, 7
        %s274 = scalar_select %p273, %s25, 7
        %s275 = scalar_lea.vmem %s2, %s274
        %p276 = pneg %p105
        %p277 = pneg %p102
        %p278 = scmp.lt.s32.totalorder %s25, 7
        %s279 = scalar_select %p278, %s25, 7
        %s280 = scalar_lea.vmem %s3, %s279
        %p281 = pneg %p131
        %p282 = pneg %p128
        %p283 = pneg %p152
        %p284 = pneg %p149
        %p285 = pneg %p173
        %p286 = pneg %p170
        %p287 = pneg %p199
        %p288 = pneg %p196
        %s289 = sand.u32 %s186, 1
        %s290 = scalar_lea.sflag [#allocation5], %s289
        %s291 = sand.u32 %s186, 1
        %s292 = smul.addr %s291, 256
        %s293 = scalar_lea.vmem [#allocation4], %s292
        %p294 = scmp.lt.s32.totalorder %s24, 1
        %s295 = scalar_select %p294, %s24, 1
        %s296 = smul.addr %s295, 32
        %s297 = smul.addr %s296, 8
        %s298 = scalar_lea.vmem %s0, %s297
        %p299 = scmp.lt.s32.totalorder %s25, 7
        %s300 = scalar_select %p299, %s25, 7
        %s301 = smul.addr %s300, 72
        %s302 = smul.addr %s301, 8
        %s303 = scalar_lea.vmem %s1, %s302
        %p304 = scmp.lt.s32.totalorder %s25, 7
        %s305 = scalar_select %p304, %s25, 7
        %s306 = scalar_lea.vmem %s2, %s305
        %p307 = scmp.lt.s32.totalorder %s25, 7
        %s308 = scalar_select %p307, %s25, 7
        %s309 = scalar_lea.vmem %s3, %s308
        %p310 = scmp.eq.s32.totalorder %s25, 0
        // Predicated region
        $region45: #{tpu_custom_call.1} parent=43 // pred_check
          %p311 = pneg %p310
        $region46: #{tpu_custom_call.1} parent=43 // pred_check_branch
          %313 = sbr.rel (%p311) target = $region48
        $region47: #{tpu_custom_call.1} parent=43 // pred_region
          %vm314 = vcmask 523264
          %315 = vst.msk [vmem:[#allocation2] sm:$0xff] %vm314, 0.0
          %316 = vst.msk [vmem:[#allocation2 + $0x8] sm:$0xff] %vm314, 0.0
          %vm317 = vcmask 517120
          %318 = vst.msk [vmem:[#allocation2 + $0x10] sm:$0x3] %vm317, 0.0
          %319 = vst.msk [vmem:[#allocation2 + $0x18] sm:$0xff] %vm314, 0.0
          %320 = vst.msk [vmem:[#allocation2 + $0x20] sm:$0xff] %vm314, 0.0
          %321 = vst.msk [vmem:[#allocation2 + $0x28] sm:$0x3] %vm317, 0.0
          %322 = vst.msk [vmem:[#allocation2 + $0x30] sm:$0xff] %vm314, 0.0
          %323 = vst.msk [vmem:[#allocation2 + $0x38] sm:$0xff] %vm314, 0.0
          %324 = vst.msk [vmem:[#allocation2 + $0x40] sm:$0x3] %vm317, 0.0
          %325 = vst.msk [vmem:[#allocation2 + $0x48] sm:$0xff] %vm314, 0.0
          %326 = vst.msk [vmem:[#allocation2 + $0x50] sm:$0xff] %vm314, 0.0
          %327 = vst.msk [vmem:[#allocation2 + $0x58] sm:$0x3] %vm317, 0.0
          %328 = vst.msk [vmem:[#allocation2 + $0x60] sm:$0xff] %vm314, 0.0
          %329 = vst.msk [vmem:[#allocation2 + $0x68] sm:$0xff] %vm314, 0.0
          %330 = vst.msk [vmem:[#allocation2 + $0x70] sm:$0x3] %vm317, 0.0
          %331 = vst.msk [vmem:[#allocation2 + $0x78] sm:$0xff] %vm314, 0.0
          %332 = vst.msk [vmem:[#allocation2 + $0x80] sm:$0xff] %vm314, 0.0
          %333 = vst.msk [vmem:[#allocation2 + $0x88] sm:$0x3] %vm317, 0.0
          %334 = vst.msk [vmem:[#allocation2 + $0x90] sm:$0xff] %vm314, 0.0
          %335 = vst.msk [vmem:[#allocation2 + $0x98] sm:$0xff] %vm314, 0.0
          %336 = vst.msk [vmem:[#allocation2 + $0xa0] sm:$0x3] %vm317, 0.0
          %337 = vst.msk [vmem:[#allocation2 + $0xa8] sm:$0xff] %vm314, 0.0
          %338 = vst.msk [vmem:[#allocation2 + $0xb0] sm:$0xff] %vm314, 0.0
          %339 = vst.msk [vmem:[#allocation2 + $0xb8] sm:$0x3] %vm317, 0.0
          %340 = vst.msk [vmem:[#allocation2 + $0xc0] sm:$0xff] %vm314, 0.0
          %341 = vst.msk [vmem:[#allocation2 + $0xc8] sm:$0xff] %vm314, 0.0
          %342 = vst.msk [vmem:[#allocation2 + $0xd0] sm:$0x3] %vm317, 0.0
          %343 = vst.msk [vmem:[#allocation2 + $0xd8] sm:$0xff] %vm314, 0.0
          %344 = vst.msk [vmem:[#allocation2 + $0xe0] sm:$0xff] %vm314, 0.0
          %345 = vst.msk [vmem:[#allocation2 + $0xe8] sm:$0x3] %vm317, 0.0
          %346 = vst.msk [vmem:[#allocation2 + $0xf0] sm:$0xff] %vm314, 0.0
          %347 = vst.msk [vmem:[#allocation2 + $0xf8] sm:$0xff] %vm314, 0.0
          %348 = vst.msk [vmem:[#allocation2 + $0x100] sm:$0x3] %vm317, 0.0
          %349 = vst.msk [vmem:[#allocation2 + $0x108] sm:$0xff] %vm314, 0.0
          %350 = vst.msk [vmem:[#allocation2 + $0x110] sm:$0xff] %vm314, 0.0
          %351 = vst.msk [vmem:[#allocation2 + $0x118] sm:$0x3] %vm317, 0.0
          %352 = vst.msk [vmem:[#allocation2 + $0x120] sm:$0xff] %vm314, 0.0
          %353 = vst.msk [vmem:[#allocation2 + $0x128] sm:$0xff] %vm314, 0.0
          %354 = vst.msk [vmem:[#allocation2 + $0x130] sm:$0x3] %vm317, 0.0
          %355 = vst.msk [vmem:[#allocation2 + $0x138] sm:$0xff] %vm314, 0.0
          %356 = vst.msk [vmem:[#allocation2 + $0x140] sm:$0xff] %vm314, 0.0
          %357 = vst.msk [vmem:[#allocation2 + $0x148] sm:$0x3] %vm317, 0.0
          %358 = vst.msk [vmem:[#allocation2 + $0x150] sm:$0xff] %vm314, 0.0
          %359 = vst.msk [vmem:[#allocation2 + $0x158] sm:$0xff] %vm314, 0.0
          %360 = vst.msk [vmem:[#allocation2 + $0x160] sm:$0x3] %vm317, 0.0
          %361 = vst.msk [vmem:[#allocation2 + $0x168] sm:$0xff] %vm314, 0.0
          %362 = vst.msk [vmem:[#allocation2 + $0x170] sm:$0xff] %vm314, 0.0
          %363 = vst.msk [vmem:[#allocation2 + $0x178] sm:$0x3] %vm317, 0.0
          %364 = vst.msk [vmem:[#allocation2 + $0x180] sm:$0xff] %vm314, 0.0
          %365 = vst.msk [vmem:[#allocation2 + $0x188] sm:$0xff] %vm314, 0.0
          %366 = vst.msk [vmem:[#allocation2 + $0x190] sm:$0x3] %vm317, 0.0
          %367 = vst.msk [vmem:[#allocation2 + $0x198] sm:$0xff] %vm314, 0.0
          %368 = vst.msk [vmem:[#allocation2 + $0x1a0] sm:$0xff] %vm314, 0.0
          %369 = vst.msk [vmem:[#allocation2 + $0x1a8] sm:$0x3] %vm317, 0.0
          %v370 = vld [vmem:[%s298] sm:$0xff]
          %v371 = vld [vmem:[%s298 + $0x8] sm:$0xff]
          %v372 = vld [vmem:[%s298 + $0x10] sm:$0xff]
          %v373 = vld [vmem:[%s298 + $0x18] sm:$0xff]
          %v374 = vld [vmem:[%s298 + $0x20] sm:$0xff]
          %v375 = vld [vmem:[%s298 + $0x28] sm:$0xff]
          %v376 = vld [vmem:[%s298 + $0x30] sm:$0xff]
          %v377 = vld [vmem:[%s298 + $0x38] sm:$0xff]
          %v378 = vld [vmem:[%s298 + $0x40] sm:$0xff]
          %v379 = vld [vmem:[%s298 + $0x48] sm:$0xff]
          %v380 = vld [vmem:[%s298 + $0x50] sm:$0xff]
          %v381 = vld [vmem:[%s298 + $0x58] sm:$0xff]
          %v382 = vld [vmem:[%s298 + $0x60] sm:$0xff]
          %v383 = vld [vmem:[%s298 + $0x68] sm:$0xff]
          %v384 = vld [vmem:[%s298 + $0x70] sm:$0xff]
          %v385 = vld [vmem:[%s298 + $0x78] sm:$0xff]
          %v386 = vld [vmem:[%s298 + $0x80] sm:$0xff]
          %v387 = vld [vmem:[%s298 + $0x88] sm:$0xff]
          %v388 = vld [vmem:[%s298 + $0x90] sm:$0xff]
          %v389 = vld [vmem:[%s298 + $0x98] sm:$0xff]
          %v390 = vld [vmem:[%s298 + $0xa0] sm:$0xff]
          %v391 = vld [vmem:[%s298 + $0xa8] sm:$0xff]
          %v392 = vld [vmem:[%s298 + $0xb0] sm:$0xff]
          %v393 = vld [vmem:[%s298 + $0xb8] sm:$0xff]
          %v394 = vld [vmem:[%s298 + $0xc0] sm:$0xff]
          %v395 = vld [vmem:[%s298 + $0xc8] sm:$0xff]
          %v396 = vld [vmem:[%s298 + $0xd0] sm:$0xff]
          %v397 = vld [vmem:[%s298 + $0xd8] sm:$0xff]
          %v398 = vld [vmem:[%s298 + $0xe0] sm:$0xff]
          %v399 = vld [vmem:[%s298 + $0xe8] sm:$0xff]
          %v400 = vld [vmem:[%s298 + $0xf0] sm:$0xff]
          %v401 = vld [vmem:[%s298 + $0xf8] sm:$0xff]
          %s402 = scalar_lea.vmem [#allocation2], 24
          %403 = vst.msk [vmem:[%s402 + $0x1] sm:$0xff] %vm314, %v370
          %404 = vst.msk [vmem:[%s402 + $0x9] sm:$0xff] %vm314, %v371
          %405 = vst.msk [vmem:[%s402 + $0x19] sm:$0xff] %vm314, %v372
          %406 = vst.msk [vmem:[%s402 + $0x21] sm:$0xff] %vm314, %v373
          %407 = vst.msk [vmem:[%s402 + $0x31] sm:$0xff] %vm314, %v374
          %408 = vst.msk [vmem:[%s402 + $0x39] sm:$0xff] %vm314, %v375
          %409 = vst.msk [vmem:[%s402 + $0x49] sm:$0xff] %vm314, %v376
          %410 = vst.msk [vmem:[%s402 + $0x51] sm:$0xff] %vm314, %v377
          %411 = vst.msk [vmem:[%s402 + $0x61] sm:$0xff] %vm314, %v378
          %412 = vst.msk [vmem:[%s402 + $0x69] sm:$0xff] %vm314, %v379
          %413 = vst.msk [vmem:[%s402 + $0x79] sm:$0xff] %vm314, %v380
          %414 = vst.msk [vmem:[%s402 + $0x81] sm:$0xff] %vm314, %v381
          %415 = vst.msk [vmem:[%s402 + $0x91] sm:$0xff] %vm314, %v382
          %416 = vst.msk [vmem:[%s402 + $0x99] sm:$0xff] %vm314, %v383
          %417 = vst.msk [vmem:[%s402 + $0xa9] sm:$0xff] %vm314, %v384
          %418 = vst.msk [vmem:[%s402 + $0xb1] sm:$0xff] %vm314, %v385
          %419 = vst.msk [vmem:[%s402 + $0xc1] sm:$0xff] %vm314, %v386
          %420 = vst.msk [vmem:[%s402 + $0xc9] sm:$0xff] %vm314, %v387
          %421 = vst.msk [vmem:[%s402 + $0xd9] sm:$0xff] %vm314, %v388
          %422 = vst.msk [vmem:[%s402 + $0xe1] sm:$0xff] %vm314, %v389
          %423 = vst.msk [vmem:[%s402 + $0xf1] sm:$0xff] %vm314, %v390
          %424 = vst.msk [vmem:[%s402 + $0xf9] sm:$0xff] %vm314, %v391
          %425 = vst.msk [vmem:[%s402 + $0x109] sm:$0xff] %vm314, %v392
          %426 = vst.msk [vmem:[%s402 + $0x111] sm:$0xff] %vm314, %v393
          %427 = vst.msk [vmem:[%s402 + $0x121] sm:$0xff] %vm314, %v394
          %428 = vst.msk [vmem:[%s402 + $0x129] sm:$0xff] %vm314, %v395
          %429 = vst.msk [vmem:[%s402 + $0x139] sm:$0xff] %vm314, %v396
          %430 = vst.msk [vmem:[%s402 + $0x141] sm:$0xff] %vm314, %v397
          %431 = vst.msk [vmem:[%s402 + $0x151] sm:$0xff] %vm314, %v398
          %432 = vst.msk [vmem:[%s402 + $0x159] sm:$0xff] %vm314, %v399
          %433 = vst.msk [vmem:[%s402 + $0x169] sm:$0xff] %vm314, %v400
          %434 = vst.msk [vmem:[%s402 + $0x171] sm:$0xff] %vm314, %v401
        $region48: #{tpu_custom_call.1} parent=43 // pred_fallthru
          _
        %v435 = vld [vmem:[#allocation2] sm:$0xff]
        %v436 = vld [vmem:[#allocation2 + $0x8] sm:$0xff]
        %v437 = vld [vmem:[#allocation2 + $0x18] sm:$0xff]
        %v438 = vld [vmem:[#allocation2 + $0x20] sm:$0xff]
        %v439 = vld [vmem:[#allocation2 + $0x30] sm:$0xff]
        %v440 = vld [vmem:[#allocation2 + $0x38] sm:$0xff]
        %v441 = vld [vmem:[#allocation2 + $0x48] sm:$0xff]
        %v442 = vld [vmem:[#allocation2 + $0x50] sm:$0xff]
        %v443 = vld [vmem:[#allocation2 + $0x60] sm:$0xff]
        %v444 = vld [vmem:[#allocation2 + $0x68] sm:$0xff]
        %v445 = vld [vmem:[#allocation2 + $0x78] sm:$0xff]
        %v446 = vld [vmem:[#allocation2 + $0x80] sm:$0xff]
        %v447 = vld [vmem:[#allocation2 + $0x90] sm:$0xff]
        %v448 = vld [vmem:[#allocation2 + $0x98] sm:$0xff]
        %v449 = vld [vmem:[#allocation2 + $0xa8] sm:$0xff]
        %v450 = vld [vmem:[#allocation2 + $0xb0] sm:$0xff]
        %v451 = vld [vmem:[#allocation2 + $0xc0] sm:$0xff]
        %v452 = vld [vmem:[#allocation2 + $0xc8] sm:$0xff]
        %v453 = vld [vmem:[#allocation2 + $0xd8] sm:$0xff]
        %v454 = vld [vmem:[#allocation2 + $0xe0] sm:$0xff]
        %v455 = vld [vmem:[#allocation2 + $0xf0] sm:$0xff]
        %v456 = vld [vmem:[#allocation2 + $0xf8] sm:$0xff]
        %v457 = vld [vmem:[#allocation2 + $0x108] sm:$0xff]
        %v458 = vld [vmem:[#allocation2 + $0x110] sm:$0xff]
        %v459 = vld [vmem:[#allocation2 + $0x120] sm:$0xff]
        %v460 = vld [vmem:[#allocation2 + $0x128] sm:$0xff]
        %v461 = vld [vmem:[#allocation2 + $0x138] sm:$0xff]
        %v462 = vld [vmem:[#allocation2 + $0x140] sm:$0xff]
        %v463 = vld [vmem:[#allocation2 + $0x150] sm:$0xff]
        %v464 = vld [vmem:[#allocation2 + $0x158] sm:$0xff]
        %v465 = vld [vmem:[#allocation2 + $0x168] sm:$0xff]
        %v466 = vld [vmem:[#allocation2 + $0x170] sm:$0xff]
        %v467 = vld [vmem:[#allocation2 + $0x1] sm:$0xff]
        %v468 = vld [vmem:[#allocation2 + $0x9] sm:$0xff]
        %v469 = vld [vmem:[#allocation2 + $0x19] sm:$0xff]
        %v470 = vld [vmem:[#allocation2 + $0x21] sm:$0xff]
        %v471 = vld [vmem:[#allocation2 + $0x31] sm:$0xff]
        %v472 = vld [vmem:[#allocation2 + $0x39] sm:$0xff]
        %v473 = vld [vmem:[#allocation2 + $0x49] sm:$0xff]
        %v474 = vld [vmem:[#allocation2 + $0x51] sm:$0xff]
        %v475 = vld [vmem:[#allocation2 + $0x61] sm:$0xff]
        %v476 = vld [vmem:[#allocation2 + $0x69] sm:$0xff]
        %v477 = vld [vmem:[#allocation2 + $0x79] sm:$0xff]
        %v478 = vld [vmem:[#allocation2 + $0x81] sm:$0xff]
        %v479 = vld [vmem:[#allocation2 + $0x91] sm:$0xff]
        %v480 = vld [vmem:[#allocation2 + $0x99] sm:$0xff]
        %v481 = vld [vmem:[#allocation2 + $0xa9] sm:$0xff]
        %v482 = vld [vmem:[#allocation2 + $0xb1] sm:$0xff]
        %v483 = vld [vmem:[#allocation2 + $0xc1] sm:$0xff]
        %v484 = vld [vmem:[#allocation2 + $0xc9] sm:$0xff]
        %v485 = vld [vmem:[#allocation2 + $0xd9] sm:$0xff]
        %v486 = vld [vmem:[#allocation2 + $0xe1] sm:$0xff]
        %v487 = vld [vmem:[#allocation2 + $0xf1] sm:$0xff]
        %v488 = vld [vmem:[#allocation2 + $0xf9] sm:$0xff]
        %v489 = vld [vmem:[#allocation2 + $0x109] sm:$0xff]
        %v490 = vld [vmem:[#allocation2 + $0x111] sm:$0xff]
        %v491 = vld [vmem:[#allocation2 + $0x121] sm:$0xff]
        %v492 = vld [vmem:[#allocation2 + $0x129] sm:$0xff]
        %v493 = vld [vmem:[#allocation2 + $0x139] sm:$0xff]
        %v494 = vld [vmem:[#allocation2 + $0x141] sm:$0xff]
        %v495 = vld [vmem:[#allocation2 + $0x151] sm:$0xff]
        %v496 = vld [vmem:[#allocation2 + $0x159] sm:$0xff]
        %v497 = vld [vmem:[#allocation2 + $0x169] sm:$0xff]
        %v498 = vld [vmem:[#allocation2 + $0x171] sm:$0xff]
        %v499 = vld [vmem:[#allocation2 + $0x2] sm:$0xff]
        %v500 = vld [vmem:[#allocation2 + $0xa] sm:$0xff]
        %v501 = vld [vmem:[#allocation2 + $0x1a] sm:$0xff]
        %v502 = vld [vmem:[#allocation2 + $0x22] sm:$0xff]
        %v503 = vld [vmem:[#allocation2 + $0x32] sm:$0xff]
        %v504 = vld [vmem:[#allocation2 + $0x3a] sm:$0xff]
        %v505 = vld [vmem:[#allocation2 + $0x4a] sm:$0xff]
        %v506 = vld [vmem:[#allocation2 + $0x52] sm:$0xff]
        %v507 = vld [vmem:[#allocation2 + $0x62] sm:$0xff]
        %v508 = vld [vmem:[#allocation2 + $0x6a] sm:$0xff]
        %v509 = vld [vmem:[#allocation2 + $0x7a] sm:$0xff]
        %v510 = vld [vmem:[#allocation2 + $0x82] sm:$0xff]
        %v511 = vld [vmem:[#allocation2 + $0x92] sm:$0xff]
        %v512 = vld [vmem:[#allocation2 + $0x9a] sm:$0xff]
        %v513 = vld [vmem:[#allocation2 + $0xaa] sm:$0xff]
        %v514 = vld [vmem:[#allocation2 + $0xb2] sm:$0xff]
        %v515 = vld [vmem:[#allocation2 + $0xc2] sm:$0xff]
        %v516 = vld [vmem:[#allocation2 + $0xca] sm:$0xff]
        %v517 = vld [vmem:[#allocation2 + $0xda] sm:$0xff]
        %v518 = vld [vmem:[#allocation2 + $0xe2] sm:$0xff]
        %v519 = vld [vmem:[#allocation2 + $0xf2] sm:$0xff]
        %v520 = vld [vmem:[#allocation2 + $0xfa] sm:$0xff]
        %v521 = vld [vmem:[#allocation2 + $0x10a] sm:$0xff]
        %v522 = vld [vmem:[#allocation2 + $0x112] sm:$0xff]
        %v523 = vld [vmem:[#allocation2 + $0x122] sm:$0xff]
        %v524 = vld [vmem:[#allocation2 + $0x12a] sm:$0xff]
        %v525 = vld [vmem:[#allocation2 + $0x13a] sm:$0xff]
        %v526 = vld [vmem:[#allocation2 + $0x142] sm:$0xff]
        %v527 = vld [vmem:[#allocation2 + $0x152] sm:$0xff]
        %v528 = vld [vmem:[#allocation2 + $0x15a] sm:$0xff]
        %v529 = vld [vmem:[#allocation2 + $0x16a] sm:$0xff]
        %v530 = vld [vmem:[#allocation2 + $0x172] sm:$0xff]
        %563 = vrot.lane.b32.xlu0 %v467, 64
        %v564 = vpop.permute.xlu0 %563
        %565 = vrot.lane.b32.xlu0 %v468, 64
        %v566 = vpop.permute.xlu0 %565
        %567 = vrot.lane.b32.xlu0 %v469, 64
        %v568 = vpop.permute.xlu0 %567
        %569 = vrot.lane.b32.xlu0 %v470, 64
        %v570 = vpop.permute.xlu0 %569
        %571 = vrot.lane.b32.xlu0 %v471, 64
        %v572 = vpop.permute.xlu0 %571
        %573 = vrot.lane.b32.xlu0 %v472, 64
        %v574 = vpop.permute.xlu0 %573
        %575 = vrot.lane.b32.xlu0 %v473, 64
        %v576 = vpop.permute.xlu0 %575
        %577 = vrot.lane.b32.xlu0 %v474, 64
        %v578 = vpop.permute.xlu0 %577
        %579 = vrot.lane.b32.xlu0 %v475, 64
        %v580 = vpop.permute.xlu0 %579
        %581 = vrot.lane.b32.xlu0 %v476, 64
        %v582 = vpop.permute.xlu0 %581
        %583 = vrot.lane.b32.xlu0 %v477, 64
        %v584 = vpop.permute.xlu0 %583
        %585 = vrot.lane.b32.xlu0 %v478, 64
        %v586 = vpop.permute.xlu0 %585
        %587 = vrot.lane.b32.xlu0 %v479, 64
        %v588 = vpop.permute.xlu0 %587
        %589 = vrot.lane.b32.xlu0 %v480, 64
        %v590 = vpop.permute.xlu0 %589
        %591 = vrot.lane.b32.xlu0 %v481, 64
        %v592 = vpop.permute.xlu0 %591
        %593 = vrot.lane.b32.xlu0 %v482, 64
        %v594 = vpop.permute.xlu0 %593
        %595 = vrot.lane.b32.xlu0 %v483, 64
        %v596 = vpop.permute.xlu0 %595
        %597 = vrot.lane.b32.xlu0 %v484, 64
        %v598 = vpop.permute.xlu0 %597
        %599 = vrot.lane.b32.xlu0 %v485, 64
        %v600 = vpop.permute.xlu0 %599
        %601 = vrot.lane.b32.xlu0 %v486, 64
        %v602 = vpop.permute.xlu0 %601
        %603 = vrot.lane.b32.xlu0 %v487, 64
        %v604 = vpop.permute.xlu0 %603
        %605 = vrot.lane.b32.xlu0 %v488, 64
        %v606 = vpop.permute.xlu0 %605
        %607 = vrot.lane.b32.xlu0 %v489, 64
        %v608 = vpop.permute.xlu0 %607
        %609 = vrot.lane.b32.xlu0 %v490, 64
        %v610 = vpop.permute.xlu0 %609
        %611 = vrot.lane.b32.xlu0 %v491, 64
        %v612 = vpop.permute.xlu0 %611
        %613 = vrot.lane.b32.xlu0 %v492, 64
        %v614 = vpop.permute.xlu0 %613
        %615 = vrot.lane.b32.xlu0 %v493, 64
        %v616 = vpop.permute.xlu0 %615
        %617 = vrot.lane.b32.xlu0 %v494, 64
        %v618 = vpop.permute.xlu0 %617
        %619 = vrot.lane.b32.xlu0 %v495, 64
        %v620 = vpop.permute.xlu0 %619
        %621 = vrot.lane.b32.xlu0 %v496, 64
        %v622 = vpop.permute.xlu0 %621
        %623 = vrot.lane.b32.xlu0 %v497, 64
        %v624 = vpop.permute.xlu0 %623
        %625 = vrot.lane.b32.xlu0 %v498, 64
        %v626 = vpop.permute.xlu0 %625
        %vm659 = vcmask 523264
        %v660 = vsel %vm659, %v435, %v564
        %v661 = vsel %vm659, %v436, %v566
        %v662 = vsel %vm659, %v437, %v568
        %v663 = vsel %vm659, %v438, %v570
        %v664 = vsel %vm659, %v439, %v572
        %v665 = vsel %vm659, %v440, %v574
        %v666 = vsel %vm659, %v441, %v576
        %v667 = vsel %vm659, %v442, %v578
        %v668 = vsel %vm659, %v443, %v580
        %v669 = vsel %vm659, %v444, %v582
        %v670 = vsel %vm659, %v445, %v584
        %v671 = vsel %vm659, %v446, %v586
        %v672 = vsel %vm659, %v447, %v588
        %v673 = vsel %vm659, %v448, %v590
        %v674 = vsel %vm659, %v449, %v592
        %v675 = vsel %vm659, %v450, %v594
        %v676 = vsel %vm659, %v451, %v596
        %v677 = vsel %vm659, %v452, %v598
        %v678 = vsel %vm659, %v453, %v600
        %v679 = vsel %vm659, %v454, %v602
        %v680 = vsel %vm659, %v455, %v604
        %v681 = vsel %vm659, %v456, %v606
        %v682 = vsel %vm659, %v457, %v608
        %v683 = vsel %vm659, %v458, %v610
        %v684 = vsel %vm659, %v459, %v612
        %v685 = vsel %vm659, %v460, %v614
        %v686 = vsel %vm659, %v461, %v616
        %v687 = vsel %vm659, %v462, %v618
        %v688 = vsel %vm659, %v463, %v620
        %v689 = vsel %vm659, %v464, %v622
        %v690 = vsel %vm659, %v465, %v624
        %v691 = vsel %vm659, %v466, %v626
        %v692 = vld [vmem:[%s303] sm:$0xff]
        %v693 = vld [vmem:[%s303 + $0x8] sm:$0xff]
        %v694 = vld [vmem:[%s303 + $0x10] sm:$0xff]
        %v695 = vld [vmem:[%s303 + $0x18] sm:$0xff]
        %v696 = vld [vmem:[%s303 + $0x20] sm:$0xff]
        %v697 = vld [vmem:[%s303 + $0x28] sm:$0xff]
        %v698 = vld [vmem:[%s303 + $0x30] sm:$0xff]
        %v699 = vld [vmem:[%s303 + $0x38] sm:$0xff]
        %v700 = vld [vmem:[%s303 + $0x40] sm:$0xff]
        %v701 = vld [vmem:[%s303 + $0x48] sm:$0xff]
        %v702 = vld [vmem:[%s303 + $0x50] sm:$0xff]
        %v703 = vld [vmem:[%s303 + $0x58] sm:$0xff]
        %v704 = vld [vmem:[%s303 + $0x60] sm:$0xff]
        %v705 = vld [vmem:[%s303 + $0x68] sm:$0xff]
        %v706 = vld [vmem:[%s303 + $0x70] sm:$0xff]
        %v707 = vld [vmem:[%s303 + $0x78] sm:$0xff]
        %v708 = vld [vmem:[%s303 + $0x80] sm:$0xff]
        %v709 = vld [vmem:[%s303 + $0x88] sm:$0xff]
        %v710 = vld [vmem:[%s303 + $0x90] sm:$0xff]
        %v711 = vld [vmem:[%s303 + $0x98] sm:$0xff]
        %v712 = vld [vmem:[%s303 + $0xa0] sm:$0xff]
        %v713 = vld [vmem:[%s303 + $0xa8] sm:$0xff]
        %v714 = vld [vmem:[%s303 + $0xb0] sm:$0xff]
        %v715 = vld [vmem:[%s303 + $0xb8] sm:$0xff]
        %v717 = vsel %vm659, %v499, 0
        %v720 = vsel %vm659, %v500, 0
        %v723 = vsel %vm659, %v501, 0
        %v726 = vsel %vm659, %v502, 0
        %v729 = vsel %vm659, %v503, 0
        %v732 = vsel %vm659, %v504, 0
        %v735 = vsel %vm659, %v505, 0
        %v738 = vsel %vm659, %v506, 0
        %v741 = vsel %vm659, %v507, 0
        %v744 = vsel %vm659, %v508, 0
        %v747 = vsel %vm659, %v509, 0
        %v750 = vsel %vm659, %v510, 0
        %v753 = vsel %vm659, %v511, 0
        %v756 = vsel %vm659, %v512, 0
        %v759 = vsel %vm659, %v513, 0
        %v762 = vsel %vm659, %v514, 0
        %v765 = vsel %vm659, %v515, 0
        %v768 = vsel %vm659, %v516, 0
        %v771 = vsel %vm659, %v517, 0
        %v774 = vsel %vm659, %v518, 0
        %v777 = vsel %vm659, %v519, 0
        %v780 = vsel %vm659, %v520, 0
        %v783 = vsel %vm659, %v521, 0
        %v786 = vsel %vm659, %v522, 0
        %v789 = vsel %vm659, %v523, 0
        %v792 = vsel %vm659, %v524, 0
        %v795 = vsel %vm659, %v525, 0
        %v798 = vsel %vm659, %v526, 0
        %v801 = vsel %vm659, %v527, 0
        %v804 = vsel %vm659, %v528, 0
        %v807 = vsel %vm659, %v529, 0
        %v810 = vsel %vm659, %v530, 0
        %812 = vmatprep.subr.mxu0 0.0
        %813 = vmatpush1.msra.mxu0 %v707
        %814 = vmatprep.subr.mxu0 0.0
        %815 = vmatpush1.msra.mxu0 %v706
        %816 = vmatprep.subr.mxu0 0.0
        %817 = vmatpush1.msra.mxu0 %v705
        %818 = vmatprep.subr.mxu0 0.0
        %819 = vmatpush1.msra.mxu0 %v704
        %820 = vmatprep.subr.mxu0 0.0
        %821 = vmatpush1.msra.mxu0 %v703
        %822 = vmatprep.subr.mxu0 0.0
        %823 = vmatpush1.msra.mxu0 %v702
        %824 = vmatprep.subr.mxu0 0.0
        %825 = vmatpush1.msra.mxu0 %v701
        %826 = vmatprep.subr.mxu0 0.0
        %827 = vmatpush1.msra.mxu0 %v700
        %828 = vmatprep.subr.mxu0 0.0
        %829 = vmatpush1.msra.mxu0 %v699
        %830 = vmatprep.subr.mxu0 0.0
        %831 = vmatpush1.msra.mxu0 %v698
        %832 = vmatprep.subr.mxu0 0.0
        %833 = vmatpush1.msra.mxu0 %v697
        %834 = vmatprep.subr.mxu0 0.0
        %835 = vmatpush1.msra.mxu0 %v696
        %836 = vmatprep.subr.mxu0 0.0
        %837 = vmatpush1.msra.mxu0 %v695
        %838 = vmatprep.subr.mxu0 0.0
        %839 = vmatpush1.msra.mxu0 %v694
        %840 = vmatprep.subr.mxu0 0.0
        %841 = vmatpush1.msra.mxu0 %v693
        %842 = vmatprep.subr.mxu0 0.0
        %843 = vmatpush1.msra.mxu0 %v692
        %844 = vmatprep.subr.mxu0 0.0
        %845 = vmatpush2.msra.mxu0 0.0
        %846 = vmatprep.subr.mxu0 0.0
        %847 = vmatpush2.msra.mxu0 0.0
        %848 = vmatprep.subr.mxu0 0.0
        %849 = vmatpush2.msra.mxu0 0.0
        %850 = vmatprep.subr.mxu0 0.0
        %851 = vmatpush2.msra.mxu0 0.0
        %852 = vmatprep.subr.mxu0 0.0
        %853 = vmatpush2.msra.mxu0 0.0
        %854 = vmatprep.subr.mxu0 0.0
        %855 = vmatpush2.msra.mxu0 0.0
        %856 = vmatprep.subr.mxu0 0.0
        %857 = vmatpush2.msra.mxu0 0.0
        %858 = vmatprep.subr.mxu0 0.0
        %859 = vmatpush2.msra.mxu0 0.0
        %860 = vmatprep.subr.mxu0 0.0
        %861 = vmatpush2.msra.mxu0 %v715
        %862 = vmatprep.subr.mxu0 0.0
        %863 = vmatpush2.msra.mxu0 %v714
        %864 = vmatprep.subr.mxu0 0.0
        %865 = vmatpush2.msra.mxu0 %v713
        %866 = vmatprep.subr.mxu0 0.0
        %867 = vmatpush2.msra.mxu0 %v712
        %868 = vmatprep.subr.mxu0 0.0
        %869 = vmatpush2.msra.mxu0 %v711
        %870 = vmatprep.subr.mxu0 0.0
        %871 = vmatpush2.msra.mxu0 %v710
        %872 = vmatprep.subr.mxu0 0.0
        %873 = vmatpush2.msra.mxu0 %v709
        %874 = vmatprep.subr.mxu0 0.0
        %875 = vmatpush2.msra.mxu0 %v708
        %876 = vmatprep.mubr.f32.mxu0 %v717
        %877 = vmatmul.mubr.f32.gmra.mxu0 %v660
        %v878 = vpop.f32.mrf.mxu0
        %v879 = vadd.f32 0.0, %v878
        %v880 = vpop.f32.mrf.mxu0
        %881 = vmatprep.mubr.f32.mxu0 %v720
        %882 = vmatmul.mubr.f32.gmra.mxu0 %v661
        %v883 = vpop.f32.mrf.mxu0
        %v884 = vadd.f32 0.0, %v883
        %v885 = vpop.f32.mrf.mxu0
        %886 = vmatprep.mubr.f32.mxu0 %v723
        %887 = vmatmul.mubr.f32.gmra.mxu0 %v662
        %v888 = vpop.f32.mrf.mxu0
        %v889 = vadd.f32 0.0, %v888
        %v890 = vpop.f32.mrf.mxu0
        %891 = vmatprep.mubr.f32.mxu0 %v726
        %892 = vmatmul.mubr.f32.gmra.mxu0 %v663
        %v893 = vpop.f32.mrf.mxu0
        %v894 = vadd.f32 0.0, %v893
        %v895 = vpop.f32.mrf.mxu0
        %896 = vmatprep.mubr.f32.mxu0 %v729
        %897 = vmatmul.mubr.f32.gmra.mxu0 %v664
        %v898 = vpop.f32.mrf.mxu0
        %v899 = vadd.f32 0.0, %v898
        %v900 = vpop.f32.mrf.mxu0
        %901 = vmatprep.mubr.f32.mxu0 %v732
        %902 = vmatmul.mubr.f32.gmra.mxu0 %v665
        %v903 = vpop.f32.mrf.mxu0
        %v904 = vadd.f32 0.0, %v903
        %v905 = vpop.f32.mrf.mxu0
        %906 = vmatprep.mubr.f32.mxu0 %v735
        %907 = vmatmul.mubr.f32.gmra.mxu0 %v666
        %v908 = vpop.f32.mrf.mxu0
        %v909 = vadd.f32 0.0, %v908
        %v910 = vpop.f32.mrf.mxu0
        %911 = vmatprep.mubr.f32.mxu0 %v738
        %912 = vmatmul.mubr.f32.gmra.mxu0 %v667
        %v913 = vpop.f32.mrf.mxu0
        %v914 = vadd.f32 0.0, %v913
        %v915 = vpop.f32.mrf.mxu0
        %916 = vmatprep.mubr.f32.mxu0 %v741
        %917 = vmatmul.mubr.f32.gmra.mxu0 %v668
        %v918 = vpop.f32.mrf.mxu0
        %v919 = vadd.f32 0.0, %v918
        %v920 = vpop.f32.mrf.mxu0
        %921 = vmatprep.mubr.f32.mxu0 %v744
        %922 = vmatmul.mubr.f32.gmra.mxu0 %v669
        %v923 = vpop.f32.mrf.mxu0
        %v924 = vadd.f32 0.0, %v923
        %v925 = vpop.f32.mrf.mxu0
        %926 = vmatprep.mubr.f32.mxu0 %v747
        %927 = vmatmul.mubr.f32.gmra.mxu0 %v670
        %v928 = vpop.f32.mrf.mxu0
        %v929 = vadd.f32 0.0, %v928
        %v930 = vpop.f32.mrf.mxu0
        %931 = vmatprep.mubr.f32.mxu0 %v750
        %932 = vmatmul.mubr.f32.gmra.mxu0 %v671
        %v933 = vpop.f32.mrf.mxu0
        %v934 = vadd.f32 0.0, %v933
        %v935 = vpop.f32.mrf.mxu0
        %936 = vmatprep.mubr.f32.mxu0 %v753
        %937 = vmatmul.mubr.f32.gmra.mxu0 %v672
        %v938 = vpop.f32.mrf.mxu0
        %v939 = vadd.f32 0.0, %v938
        %v940 = vpop.f32.mrf.mxu0
        %941 = vmatprep.mubr.f32.mxu0 %v756
        %942 = vmatmul.mubr.f32.gmra.mxu0 %v673
        %v943 = vpop.f32.mrf.mxu0
        %v944 = vadd.f32 0.0, %v943
        %v945 = vpop.f32.mrf.mxu0
        %946 = vmatprep.mubr.f32.mxu0 %v759
        %947 = vmatmul.mubr.f32.gmra.mxu0 %v674
        %v948 = vpop.f32.mrf.mxu0
        %v949 = vadd.f32 0.0, %v948
        %v950 = vpop.f32.mrf.mxu0
        %951 = vmatprep.mubr.f32.mxu0 %v762
        %952 = vmatmul.mubr.f32.gmra.mxu0 %v675
        %v953 = vpop.f32.mrf.mxu0
        %v954 = vadd.f32 0.0, %v953
        %v955 = vpop.f32.mrf.mxu0
        %956 = vmatprep.mubr.f32.mxu0 %v765
        %957 = vmatmul.mubr.f32.gmra.mxu0 %v676
        %v958 = vpop.f32.mrf.mxu0
        %v959 = vadd.f32 0.0, %v958
        %v960 = vpop.f32.mrf.mxu0
        %961 = vmatprep.mubr.f32.mxu0 %v768
        %962 = vmatmul.mubr.f32.gmra.mxu0 %v677
        %v963 = vpop.f32.mrf.mxu0
        %v964 = vadd.f32 0.0, %v963
        %v965 = vpop.f32.mrf.mxu0
        %966 = vmatprep.mubr.f32.mxu0 %v771
        %967 = vmatmul.mubr.f32.gmra.mxu0 %v678
        %v968 = vpop.f32.mrf.mxu0
        %v969 = vadd.f32 0.0, %v968
        %v970 = vpop.f32.mrf.mxu0
        %971 = vmatprep.mubr.f32.mxu0 %v774
        %972 = vmatmul.mubr.f32.gmra.mxu0 %v679
        %v973 = vpop.f32.mrf.mxu0
        %v974 = vadd.f32 0.0, %v973
        %v975 = vpop.f32.mrf.mxu0
        %976 = vmatprep.mubr.f32.mxu0 %v777
        %977 = vmatmul.mubr.f32.gmra.mxu0 %v680
        %v978 = vpop.f32.mrf.mxu0
        %v979 = vadd.f32 0.0, %v978
        %v980 = vpop.f32.mrf.mxu0
        %981 = vmatprep.mubr.f32.mxu0 %v780
        %982 = vmatmul.mubr.f32.gmra.mxu0 %v681
        %v983 = vpop.f32.mrf.mxu0
        %v984 = vadd.f32 0.0, %v983
        %v985 = vpop.f32.mrf.mxu0
        %986 = vmatprep.mubr.f32.mxu0 %v783
        %987 = vmatmul.mubr.f32.gmra.mxu0 %v682
        %v988 = vpop.f32.mrf.mxu0
        %v989 = vadd.f32 0.0, %v988
        %v990 = vpop.f32.mrf.mxu0
        %991 = vmatprep.mubr.f32.mxu0 %v786
        %992 = vmatmul.mubr.f32.gmra.mxu0 %v683
        %v993 = vpop.f32.mrf.mxu0
        %v994 = vadd.f32 0.0, %v993
        %v995 = vpop.f32.mrf.mxu0
        %996 = vmatprep.mubr.f32.mxu0 %v789
        %997 = vmatmul.mubr.f32.gmra.mxu0 %v684
        %v998 = vpop.f32.mrf.mxu0
        %v999 = vadd.f32 0.0, %v998
        %v1000 = vpop.f32.mrf.mxu0
        %1001 = vmatprep.mubr.f32.mxu0 %v792
        %1002 = vmatmul.mubr.f32.gmra.mxu0 %v685
        %v1003 = vpop.f32.mrf.mxu0
        %v1004 = vadd.f32 0.0, %v1003
        %v1005 = vpop.f32.mrf.mxu0
        %1006 = vmatprep.mubr.f32.mxu0 %v795
        %1007 = vmatmul.mubr.f32.gmra.mxu0 %v686
        %v1008 = vpop.f32.mrf.mxu0
        %v1009 = vadd.f32 0.0, %v1008
        %v1010 = vpop.f32.mrf.mxu0
        %1011 = vmatprep.mubr.f32.mxu0 %v798
        %1012 = vmatmul.mubr.f32.gmra.mxu0 %v687
        %v1013 = vpop.f32.mrf.mxu0
        %v1014 = vadd.f32 0.0, %v1013
        %v1015 = vpop.f32.mrf.mxu0
        %1016 = vmatprep.mubr.f32.mxu0 %v801
        %1017 = vmatmul.mubr.f32.gmra.mxu0 %v688
        %v1018 = vpop.f32.mrf.mxu0
        %v1019 = vadd.f32 0.0, %v1018
        %v1020 = vpop.f32.mrf.mxu0
        %1021 = vmatprep.mubr.f32.mxu0 %v804
        %1022 = vmatmul.mubr.f32.gmra.mxu0 %v689
        %v1023 = vpop.f32.mrf.mxu0
        %v1024 = vadd.f32 0.0, %v1023
        %v1025 = vpop.f32.mrf.mxu0
        %1026 = vmatprep.mubr.f32.mxu0 %v807
        %1027 = vmatmul.mubr.f32.gmra.mxu0 %v690
        %v1028 = vpop.f32.mrf.mxu0
        %v1029 = vadd.f32 0.0, %v1028
        %v1030 = vpop.f32.mrf.mxu0
        %1031 = vmatprep.mubr.f32.mxu0 %v810
        %1032 = vmatmul.mubr.f32.gmra.mxu0 %v691
        %v1033 = vpop.f32.mrf.mxu0
        %v1034 = vadd.f32 0.0, %v1033
        %v1035 = vpop.f32.mrf.mxu0
        %1036 = vdwg.mxu0
        %1037 = vst.msk [vmem:[#allocation3] sm:$0xff] %vm659, %v879
        %1038 = vst.msk [vmem:[#allocation3 + $0x8] sm:$0xff] %vm659, %v884
        %1039 = vst.msk [vmem:[#allocation3 + $0x10] sm:$0xff] %vm659, %v889
        %1040 = vst.msk [vmem:[#allocation3 + $0x18] sm:$0xff] %vm659, %v894
        %1041 = vst.msk [vmem:[#allocation3 + $0x20] sm:$0xff] %vm659, %v899
        %1042 = vst.msk [vmem:[#allocation3 + $0x28] sm:$0xff] %vm659, %v904
        %1043 = vst.msk [vmem:[#allocation3 + $0x30] sm:$0xff] %vm659, %v909
        %1044 = vst.msk [vmem:[#allocation3 + $0x38] sm:$0xff] %vm659, %v914
        %1045 = vst.msk [vmem:[#allocation3 + $0x40] sm:$0xff] %vm659, %v919
        %1046 = vst.msk [vmem:[#allocation3 + $0x48] sm:$0xff] %vm659, %v924
        %1047 = vst.msk [vmem:[#allocation3 + $0x50] sm:$0xff] %vm659, %v929
        %1048 = vst.msk [vmem:[#allocation3 + $0x58] sm:$0xff] %vm659, %v934
        %1049 = vst.msk [vmem:[#allocation3 + $0x60] sm:$0xff] %vm659, %v939
        %1050 = vst.msk [vmem:[#allocation3 + $0x68] sm:$0xff] %vm659, %v944
        %1051 = vst.msk [vmem:[#allocation3 + $0x70] sm:$0xff] %vm659, %v949
        %1052 = vst.msk [vmem:[#allocation3 + $0x78] sm:$0xff] %vm659, %v954
        %1053 = vst.msk [vmem:[#allocation3 + $0x80] sm:$0xff] %vm659, %v959
        %1054 = vst.msk [vmem:[#allocation3 + $0x88] sm:$0xff] %vm659, %v964
        %1055 = vst.msk [vmem:[#allocation3 + $0x90] sm:$0xff] %vm659, %v969
        %1056 = vst.msk [vmem:[#allocation3 + $0x98] sm:$0xff] %vm659, %v974
        %1057 = vst.msk [vmem:[#allocation3 + $0xa0] sm:$0xff] %vm659, %v979
        %1058 = vst.msk [vmem:[#allocation3 + $0xa8] sm:$0xff] %vm659, %v984
        %1059 = vst.msk [vmem:[#allocation3 + $0xb0] sm:$0xff] %vm659, %v989
        %1060 = vst.msk [vmem:[#allocation3 + $0xb8] sm:$0xff] %vm659, %v994
        %1061 = vst.msk [vmem:[#allocation3 + $0xc0] sm:$0xff] %vm659, %v999
        %1062 = vst.msk [vmem:[#allocation3 + $0xc8] sm:$0xff] %vm659, %v1004
        %1063 = vst.msk [vmem:[#allocation3 + $0xd0] sm:$0xff] %vm659, %v1009
        %1064 = vst.msk [vmem:[#allocation3 + $0xd8] sm:$0xff] %vm659, %v1014
        %1065 = vst.msk [vmem:[#allocation3 + $0xe0] sm:$0xff] %vm659, %v1019
        %1066 = vst.msk [vmem:[#allocation3 + $0xe8] sm:$0xff] %vm659, %v1024
        %1067 = vst.msk [vmem:[#allocation3 + $0xf0] sm:$0xff] %vm659, %v1029
        %1068 = vst.msk [vmem:[#allocation3 + $0xf8] sm:$0xff] %vm659, %v1034
        %s1069 = scalar_lea.vmem [#allocation2], 24
        %v1070 = vld [vmem:[%s1069] sm:$0xff]
        %v1071 = vld [vmem:[%s1069 + $0x8] sm:$0xff]
        %v1072 = vld [vmem:[%s1069 + $0x18] sm:$0xff]
        %v1073 = vld [vmem:[%s1069 + $0x20] sm:$0xff]
        %v1074 = vld [vmem:[%s1069 + $0x30] sm:$0xff]
        %v1075 = vld [vmem:[%s1069 + $0x38] sm:$0xff]
        %v1076 = vld [vmem:[%s1069 + $0x48] sm:$0xff]
        %v1077 = vld [vmem:[%s1069 + $0x50] sm:$0xff]
        %v1078 = vld [vmem:[%s1069 + $0x60] sm:$0xff]
        %v1079 = vld [vmem:[%s1069 + $0x68] sm:$0xff]
        %v1080 = vld [vmem:[%s1069 + $0x78] sm:$0xff]
        %v1081 = vld [vmem:[%s1069 + $0x80] sm:$0xff]
        %v1082 = vld [vmem:[%s1069 + $0x90] sm:$0xff]
        %v1083 = vld [vmem:[%s1069 + $0x98] sm:$0xff]
        %v1084 = vld [vmem:[%s1069 + $0xa8] sm:$0xff]
        %v1085 = vld [vmem:[%s1069 + $0xb0] sm:$0xff]
        %v1086 = vld [vmem:[%s1069 + $0xc0] sm:$0xff]
        %v1087 = vld [vmem:[%s1069 + $0xc8] sm:$0xff]
        %v1088 = vld [vmem:[%s1069 + $0xd8] sm:$0xff]
        %v1089 = vld [vmem:[%s1069 + $0xe0] sm:$0xff]
        %v1090 = vld [vmem:[%s1069 + $0xf0] sm:$0xff]
        %v1091 = vld [vmem:[%s1069 + $0xf8] sm:$0xff]
        %v1092 = vld [vmem:[%s1069 + $0x108] sm:$0xff]
        %v1093 = vld [vmem:[%s1069 + $0x110] sm:$0xff]
        %v1094 = vld [vmem:[%s1069 + $0x120] sm:$0xff]
        %v1095 = vld [vmem:[%s1069 + $0x128] sm:$0xff]
        %v1096 = vld [vmem:[%s1069 + $0x138] sm:$0xff]
        %v1097 = vld [vmem:[%s1069 + $0x140] sm:$0xff]
        %v1098 = vld [vmem:[%s1069 + $0x150] sm:$0xff]
        %v1099 = vld [vmem:[%s1069 + $0x158] sm:$0xff]
        %v1100 = vld [vmem:[%s1069 + $0x168] sm:$0xff]
        %v1101 = vld [vmem:[%s1069 + $0x170] sm:$0xff]
        %v1102 = vld [vmem:[%s1069 + $0x1] sm:$0xff]
        %v1103 = vld [vmem:[%s1069 + $0x9] sm:$0xff]
        %v1104 = vld [vmem:[%s1069 + $0x19] sm:$0xff]
        %v1105 = vld [vmem:[%s1069 + $0x21] sm:$0xff]
        %v1106 = vld [vmem:[%s1069 + $0x31] sm:$0xff]
        %v1107 = vld [vmem:[%s1069 + $0x39] sm:$0xff]
        %v1108 = vld [vmem:[%s1069 + $0x49] sm:$0xff]
        %v1109 = vld [vmem:[%s1069 + $0x51] sm:$0xff]
        %v1110 = vld [vmem:[%s1069 + $0x61] sm:$0xff]
        %v1111 = vld [vmem:[%s1069 + $0x69] sm:$0xff]
        %v1112 = vld [vmem:[%s1069 + $0x79] sm:$0xff]
        %v1113 = vld [vmem:[%s1069 + $0x81] sm:$0xff]
        %v1114 = vld [vmem:[%s1069 + $0x91] sm:$0xff]
        %v1115 = vld [vmem:[%s1069 + $0x99] sm:$0xff]
        %v1116 = vld [vmem:[%s1069 + $0xa9] sm:$0xff]
        %v1117 = vld [vmem:[%s1069 + $0xb1] sm:$0xff]
        %v1118 = vld [vmem:[%s1069 + $0xc1] sm:$0xff]
        %v1119 = vld [vmem:[%s1069 + $0xc9] sm:$0xff]
        %v1120 = vld [vmem:[%s1069 + $0xd9] sm:$0xff]
        %v1121 = vld [vmem:[%s1069 + $0xe1] sm:$0xff]
        %v1122 = vld [vmem:[%s1069 + $0xf1] sm:$0xff]
        %v1123 = vld [vmem:[%s1069 + $0xf9] sm:$0xff]
        %v1124 = vld [vmem:[%s1069 + $0x109] sm:$0xff]
        %v1125 = vld [vmem:[%s1069 + $0x111] sm:$0xff]
        %v1126 = vld [vmem:[%s1069 + $0x121] sm:$0xff]
        %v1127 = vld [vmem:[%s1069 + $0x129] sm:$0xff]
        %v1128 = vld [vmem:[%s1069 + $0x139] sm:$0xff]
        %v1129 = vld [vmem:[%s1069 + $0x141] sm:$0xff]
        %v1130 = vld [vmem:[%s1069 + $0x151] sm:$0xff]
        %v1131 = vld [vmem:[%s1069 + $0x159] sm:$0xff]
        %v1132 = vld [vmem:[%s1069 + $0x169] sm:$0xff]
        %v1133 = vld [vmem:[%s1069 + $0x171] sm:$0xff]
        %v1134 = vld [vmem:[%s1069 + $0x2] sm:$0xff]
        %v1135 = vld [vmem:[%s1069 + $0xa] sm:$0xff]
        %v1136 = vld [vmem:[%s1069 + $0x1a] sm:$0xff]
        %v1137 = vld [vmem:[%s1069 + $0x22] sm:$0xff]
        %v1138 = vld [vmem:[%s1069 + $0x32] sm:$0xff]
        %v1139 = vld [vmem:[%s1069 + $0x3a] sm:$0xff]
        %v1140 = vld [vmem:[%s1069 + $0x4a] sm:$0xff]
        %v1141 = vld [vmem:[%s1069 + $0x52] sm:$0xff]
        %v1142 = vld [vmem:[%s1069 + $0x62] sm:$0xff]
        %v1143 = vld [vmem:[%s1069 + $0x6a] sm:$0xff]
        %v1144 = vld [vmem:[%s1069 + $0x7a] sm:$0xff]
        %v1145 = vld [vmem:[%s1069 + $0x82] sm:$0xff]
        %v1146 = vld [vmem:[%s1069 + $0x92] sm:$0xff]
        %v1147 = vld [vmem:[%s1069 + $0x9a] sm:$0xff]
        %v1148 = vld [vmem:[%s1069 + $0xaa] sm:$0xff]
        %v1149 = vld [vmem:[%s1069 + $0xb2] sm:$0xff]
        %v1150 = vld [vmem:[%s1069 + $0xc2] sm:$0xff]
        %v1151 = vld [vmem:[%s1069 + $0xca] sm:$0xff]
        %v1152 = vld [vmem:[%s1069 + $0xda] sm:$0xff]
        %v1153 = vld [vmem:[%s1069 + $0xe2] sm:$0xff]
        %v1154 = vld [vmem:[%s1069 + $0xf2] sm:$0xff]
        %v1155 = vld [vmem:[%s1069 + $0xfa] sm:$0xff]
        %v1156 = vld [vmem:[%s1069 + $0x10a] sm:$0xff]
        %v1157 = vld [vmem:[%s1069 + $0x112] sm:$0xff]
        %v1158 = vld [vmem:[%s1069 + $0x122] sm:$0xff]
        %v1159 = vld [vmem:[%s1069 + $0x12a] sm:$0xff]
        %v1160 = vld [vmem:[%s1069 + $0x13a] sm:$0xff]
        %v1161 = vld [vmem:[%s1069 + $0x142] sm:$0xff]
        %v1162 = vld [vmem:[%s1069 + $0x152] sm:$0xff]
        %v1163 = vld [vmem:[%s1069 + $0x15a] sm:$0xff]
        %v1164 = vld [vmem:[%s1069 + $0x16a] sm:$0xff]
        %v1165 = vld [vmem:[%s1069 + $0x172] sm:$0xff]
        %1198 = vrot.lane.b32.xlu0 %v1102, 64
        %v1199 = vpop.permute.xlu0 %1198
        %1200 = vrot.lane.b32.xlu0 %v1103, 64
        %v1201 = vpop.permute.xlu0 %1200
        %1202 = vrot.lane.b32.xlu0 %v1104, 64
        %v1203 = vpop.permute.xlu0 %1202
        %1204 = vrot.lane.b32.xlu0 %v1105, 64
        %v1205 = vpop.permute.xlu0 %1204
        %1206 = vrot.lane.b32.xlu0 %v1106, 64
        %v1207 = vpop.permute.xlu0 %1206
        %1208 = vrot.lane.b32.xlu0 %v1107, 64
        %v1209 = vpop.permute.xlu0 %1208
        %1210 = vrot.lane.b32.xlu0 %v1108, 64
        %v1211 = vpop.permute.xlu0 %1210
        %1212 = vrot.lane.b32.xlu0 %v1109, 64
        %v1213 = vpop.permute.xlu0 %1212
        %1214 = vrot.lane.b32.xlu0 %v1110, 64
        %v1215 = vpop.permute.xlu0 %1214
        %1216 = vrot.lane.b32.xlu0 %v1111, 64
        %v1217 = vpop.permute.xlu0 %1216
        %1218 = vrot.lane.b32.xlu0 %v1112, 64
        %v1219 = vpop.permute.xlu0 %1218
        %1220 = vrot.lane.b32.xlu0 %v1113, 64
        %v1221 = vpop.permute.xlu0 %1220
        %1222 = vrot.lane.b32.xlu0 %v1114, 64
        %v1223 = vpop.permute.xlu0 %1222
        %1224 = vrot.lane.b32.xlu0 %v1115, 64
        %v1225 = vpop.permute.xlu0 %1224
        %1226 = vrot.lane.b32.xlu0 %v1116, 64
        %v1227 = vpop.permute.xlu0 %1226
        %1228 = vrot.lane.b32.xlu0 %v1117, 64
        %v1229 = vpop.permute.xlu0 %1228
        %1230 = vrot.lane.b32.xlu0 %v1118, 64
        %v1231 = vpop.permute.xlu0 %1230
        %1232 = vrot.lane.b32.xlu0 %v1119, 64
        %v1233 = vpop.permute.xlu0 %1232
        %1234 = vrot.lane.b32.xlu0 %v1120, 64
        %v1235 = vpop.permute.xlu0 %1234
        %1236 = vrot.lane.b32.xlu0 %v1121, 64
        %v1237 = vpop.permute.xlu0 %1236
        %1238 = vrot.lane.b32.xlu0 %v1122, 64
        %v1239 = vpop.permute.xlu0 %1238
        %1240 = vrot.lane.b32.xlu0 %v1123, 64
        %v1241 = vpop.permute.xlu0 %1240
        %1242 = vrot.lane.b32.xlu0 %v1124, 64
        %v1243 = vpop.permute.xlu0 %1242
        %1244 = vrot.lane.b32.xlu0 %v1125, 64
        %v1245 = vpop.permute.xlu0 %1244
        %1246 = vrot.lane.b32.xlu0 %v1126, 64
        %v1247 = vpop.permute.xlu0 %1246
        %1248 = vrot.lane.b32.xlu0 %v1127, 64
        %v1249 = vpop.permute.xlu0 %1248
        %1250 = vrot.lane.b32.xlu0 %v1128, 64
        %v1251 = vpop.permute.xlu0 %1250
        %1252 = vrot.lane.b32.xlu0 %v1129, 64
        %v1253 = vpop.permute.xlu0 %1252
        %1254 = vrot.lane.b32.xlu0 %v1130, 64
        %v1255 = vpop.permute.xlu0 %1254
        %1256 = vrot.lane.b32.xlu0 %v1131, 64
        %v1257 = vpop.permute.xlu0 %1256
        %1258 = vrot.lane.b32.xlu0 %v1132, 64
        %v1259 = vpop.permute.xlu0 %1258
        %1260 = vrot.lane.b32.xlu0 %v1133, 64
        %v1261 = vpop.permute.xlu0 %1260
        %v1294 = vsel %vm659, %v1070, %v1199
        %v1295 = vsel %vm659, %v1071, %v1201
        %v1296 = vsel %vm659, %v1072, %v1203
        %v1297 = vsel %vm659, %v1073, %v1205
        %v1298 = vsel %vm659, %v1074, %v1207
        %v1299 = vsel %vm659, %v1075, %v1209
        %v1300 = vsel %vm659, %v1076, %v1211
        %v1301 = vsel %vm659, %v1077, %v1213
        %v1302 = vsel %vm659, %v1078, %v1215
        %v1303 = vsel %vm659, %v1079, %v1217
        %v1304 = vsel %vm659, %v1080, %v1219
        %v1305 = vsel %vm659, %v1081, %v1221
        %v1306 = vsel %vm659, %v1082, %v1223
        %v1307 = vsel %vm659, %v1083, %v1225
        %v1308 = vsel %vm659, %v1084, %v1227
        %v1309 = vsel %vm659, %v1085, %v1229
        %v1310 = vsel %vm659, %v1086, %v1231
        %v1311 = vsel %vm659, %v1087, %v1233
        %v1312 = vsel %vm659, %v1088, %v1235
        %v1313 = vsel %vm659, %v1089, %v1237
        %v1314 = vsel %vm659, %v1090, %v1239
        %v1315 = vsel %vm659, %v1091, %v1241
        %v1316 = vsel %vm659, %v1092, %v1243
        %v1317 = vsel %vm659, %v1093, %v1245
        %v1318 = vsel %vm659, %v1094, %v1247
        %v1319 = vsel %vm659, %v1095, %v1249
        %v1320 = vsel %vm659, %v1096, %v1251
        %v1321 = vsel %vm659, %v1097, %v1253
        %v1322 = vsel %vm659, %v1098, %v1255
        %v1323 = vsel %vm659, %v1099, %v1257
        %v1324 = vsel %vm659, %v1100, %v1259
        %v1325 = vsel %vm659, %v1101, %v1261
        %s1326 = scalar_lea.vmem %s303, 192
        %v1327 = vld [vmem:[%s1326] sm:$0xff]
        %v1328 = vld [vmem:[%s1326 + $0x8] sm:$0xff]
        %v1329 = vld [vmem:[%s1326 + $0x10] sm:$0xff]
        %v1330 = vld [vmem:[%s1326 + $0x18] sm:$0xff]
        %v1331 = vld [vmem:[%s1326 + $0x20] sm:$0xff]
        %v1332 = vld [vmem:[%s1326 + $0x28] sm:$0xff]
        %v1333 = vld [vmem:[%s1326 + $0x30] sm:$0xff]
        %v1334 = vld [vmem:[%s1326 + $0x38] sm:$0xff]
        %v1335 = vld [vmem:[%s1326 + $0x40] sm:$0xff]
        %v1336 = vld [vmem:[%s1326 + $0x48] sm:$0xff]
        %v1337 = vld [vmem:[%s1326 + $0x50] sm:$0xff]
        %v1338 = vld [vmem:[%s1326 + $0x58] sm:$0xff]
        %v1339 = vld [vmem:[%s1326 + $0x60] sm:$0xff]
        %v1340 = vld [vmem:[%s1326 + $0x68] sm:$0xff]
        %v1341 = vld [vmem:[%s1326 + $0x70] sm:$0xff]
        %v1342 = vld [vmem:[%s1326 + $0x78] sm:$0xff]
        %v1343 = vld [vmem:[%s1326 + $0x80] sm:$0xff]
        %v1344 = vld [vmem:[%s1326 + $0x88] sm:$0xff]
        %v1345 = vld [vmem:[%s1326 + $0x90] sm:$0xff]
        %v1346 = vld [vmem:[%s1326 + $0x98] sm:$0xff]
        %v1347 = vld [vmem:[%s1326 + $0xa0] sm:$0xff]
        %v1348 = vld [vmem:[%s1326 + $0xa8] sm:$0xff]
        %v1349 = vld [vmem:[%s1326 + $0xb0] sm:$0xff]
        %v1350 = vld [vmem:[%s1326 + $0xb8] sm:$0xff]
        %v1352 = vsel %vm659, %v1134, 0
        %v1355 = vsel %vm659, %v1135, 0
        %v1358 = vsel %vm659, %v1136, 0
        %v1361 = vsel %vm659, %v1137, 0
        %v1364 = vsel %vm659, %v1138, 0
        %v1367 = vsel %vm659, %v1139, 0
        %v1370 = vsel %vm659, %v1140, 0
        %v1373 = vsel %vm659, %v1141, 0
        %v1376 = vsel %vm659, %v1142, 0
        %v1379 = vsel %vm659, %v1143, 0
        %v1382 = vsel %vm659, %v1144, 0
        %v1385 = vsel %vm659, %v1145, 0
        %v1388 = vsel %vm659, %v1146, 0
        %v1391 = vsel %vm659, %v1147, 0
        %v1394 = vsel %vm659, %v1148, 0
        %v1397 = vsel %vm659, %v1149, 0
        %v1400 = vsel %vm659, %v1150, 0
        %v1403 = vsel %vm659, %v1151, 0
        %v1406 = vsel %vm659, %v1152, 0
        %v1409 = vsel %vm659, %v1153, 0
        %v1412 = vsel %vm659, %v1154, 0
        %v1415 = vsel %vm659, %v1155, 0
        %v1418 = vsel %vm659, %v1156, 0
        %v1421 = vsel %vm659, %v1157, 0
        %v1424 = vsel %vm659, %v1158, 0
        %v1427 = vsel %vm659, %v1159, 0
        %v1430 = vsel %vm659, %v1160, 0
        %v1433 = vsel %vm659, %v1161, 0
        %v1436 = vsel %vm659, %v1162, 0
        %v1439 = vsel %vm659, %v1163, 0
        %v1442 = vsel %vm659, %v1164, 0
        %v1445 = vsel %vm659, %v1165, 0
        %1447 = vmatprep.subr.mxu0 0.0
        %1448 = vmatpush1.msra.mxu0 %v1342
        %1449 = vmatprep.subr.mxu0 0.0
        %1450 = vmatpush1.msra.mxu0 %v1341
        %1451 = vmatprep.subr.mxu0 0.0
        %1452 = vmatpush1.msra.mxu0 %v1340
        %1453 = vmatprep.subr.mxu0 0.0
        %1454 = vmatpush1.msra.mxu0 %v1339
        %1455 = vmatprep.subr.mxu0 0.0
        %1456 = vmatpush1.msra.mxu0 %v1338
        %1457 = vmatprep.subr.mxu0 0.0
        %1458 = vmatpush1.msra.mxu0 %v1337
        %1459 = vmatprep.subr.mxu0 0.0
        %1460 = vmatpush1.msra.mxu0 %v1336
        %1461 = vmatprep.subr.mxu0 0.0
        %1462 = vmatpush1.msra.mxu0 %v1335
        %1463 = vmatprep.subr.mxu0 0.0
        %1464 = vmatpush1.msra.mxu0 %v1334
        %1465 = vmatprep.subr.mxu0 0.0
        %1466 = vmatpush1.msra.mxu0 %v1333
        %1467 = vmatprep.subr.mxu0 0.0
        %1468 = vmatpush1.msra.mxu0 %v1332
        %1469 = vmatprep.subr.mxu0 0.0
        %1470 = vmatpush1.msra.mxu0 %v1331
        %1471 = vmatprep.subr.mxu0 0.0
        %1472 = vmatpush1.msra.mxu0 %v1330
        %1473 = vmatprep.subr.mxu0 0.0
        %1474 = vmatpush1.msra.mxu0 %v1329
        %1475 = vmatprep.subr.mxu0 0.0
        %1476 = vmatpush1.msra.mxu0 %v1328
        %1477 = vmatprep.subr.mxu0 0.0
        %1478 = vmatpush1.msra.mxu0 %v1327
        %1479 = vmatprep.subr.mxu0 0.0
        %1480 = vmatpush2.msra.mxu0 0.0
        %1481 = vmatprep.subr.mxu0 0.0
        %1482 = vmatpush2.msra.mxu0 0.0
        %1483 = vmatprep.subr.mxu0 0.0
        %1484 = vmatpush2.msra.mxu0 0.0
        %1485 = vmatprep.subr.mxu0 0.0
        %1486 = vmatpush2.msra.mxu0 0.0
        %1487 = vmatprep.subr.mxu0 0.0
        %1488 = vmatpush2.msra.mxu0 0.0
        %1489 = vmatprep.subr.mxu0 0.0
        %1490 = vmatpush2.msra.mxu0 0.0
        %1491 = vmatprep.subr.mxu0 0.0
        %1492 = vmatpush2.msra.mxu0 0.0
        %1493 = vmatprep.subr.mxu0 0.0
        %1494 = vmatpush2.msra.mxu0 0.0
        %1495 = vmatprep.subr.mxu0 0.0
        %1496 = vmatpush2.msra.mxu0 %v1350
        %1497 = vmatprep.subr.mxu0 0.0
        %1498 = vmatpush2.msra.mxu0 %v1349
        %1499 = vmatprep.subr.mxu0 0.0
        %1500 = vmatpush2.msra.mxu0 %v1348
        %1501 = vmatprep.subr.mxu0 0.0
        %1502 = vmatpush2.msra.mxu0 %v1347
        %1503 = vmatprep.subr.mxu0 0.0
        %1504 = vmatpush2.msra.mxu0 %v1346
        %1505 = vmatprep.subr.mxu0 0.0
        %1506 = vmatpush2.msra.mxu0 %v1345
        %1507 = vmatprep.subr.mxu0 0.0
        %1508 = vmatpush2.msra.mxu0 %v1344
        %1509 = vmatprep.subr.mxu0 0.0
        %1510 = vmatpush2.msra.mxu0 %v1343
        %1511 = vmatprep.mubr.f32.mxu0 %v1352
        %1512 = vmatmul.mubr.f32.gmra.mxu0 %v1294
        %v1513 = vpop.f32.mrf.mxu0
        %v1514 = vadd.f32 0.0, %v1513
        %v1515 = vpop.f32.mrf.mxu0
        %1516 = vmatprep.mubr.f32.mxu0 %v1355
        %1517 = vmatmul.mubr.f32.gmra.mxu0 %v1295
        %v1518 = vpop.f32.mrf.mxu0
        %v1519 = vadd.f32 0.0, %v1518
        %v1520 = vpop.f32.mrf.mxu0
        %1521 = vmatprep.mubr.f32.mxu0 %v1358
        %1522 = vmatmul.mubr.f32.gmra.mxu0 %v1296
        %v1523 = vpop.f32.mrf.mxu0
        %v1524 = vadd.f32 0.0, %v1523
        %v1525 = vpop.f32.mrf.mxu0
        %1526 = vmatprep.mubr.f32.mxu0 %v1361
        %1527 = vmatmul.mubr.f32.gmra.mxu0 %v1297
        %v1528 = vpop.f32.mrf.mxu0
        %v1529 = vadd.f32 0.0, %v1528
        %v1530 = vpop.f32.mrf.mxu0
        %1531 = vmatprep.mubr.f32.mxu0 %v1364
        %1532 = vmatmul.mubr.f32.gmra.mxu0 %v1298
        %v1533 = vpop.f32.mrf.mxu0
        %v1534 = vadd.f32 0.0, %v1533
        %v1535 = vpop.f32.mrf.mxu0
        %1536 = vmatprep.mubr.f32.mxu0 %v1367
        %1537 = vmatmul.mubr.f32.gmra.mxu0 %v1299
        %v1538 = vpop.f32.mrf.mxu0
        %v1539 = vadd.f32 0.0, %v1538
        %v1540 = vpop.f32.mrf.mxu0
        %1541 = vmatprep.mubr.f32.mxu0 %v1370
        %1542 = vmatmul.mubr.f32.gmra.mxu0 %v1300
        %v1543 = vpop.f32.mrf.mxu0
        %v1544 = vadd.f32 0.0, %v1543
        %v1545 = vpop.f32.mrf.mxu0
        %1546 = vmatprep.mubr.f32.mxu0 %v1373
        %1547 = vmatmul.mubr.f32.gmra.mxu0 %v1301
        %v1548 = vpop.f32.mrf.mxu0
        %v1549 = vadd.f32 0.0, %v1548
        %v1550 = vpop.f32.mrf.mxu0
        %1551 = vmatprep.mubr.f32.mxu0 %v1376
        %1552 = vmatmul.mubr.f32.gmra.mxu0 %v1302
        %v1553 = vpop.f32.mrf.mxu0
        %v1554 = vadd.f32 0.0, %v1553
        %v1555 = vpop.f32.mrf.mxu0
        %1556 = vmatprep.mubr.f32.mxu0 %v1379
        %1557 = vmatmul.mubr.f32.gmra.mxu0 %v1303
        %v1558 = vpop.f32.mrf.mxu0
        %v1559 = vadd.f32 0.0, %v1558
        %v1560 = vpop.f32.mrf.mxu0
        %1561 = vmatprep.mubr.f32.mxu0 %v1382
        %1562 = vmatmul.mubr.f32.gmra.mxu0 %v1304
        %v1563 = vpop.f32.mrf.mxu0
        %v1564 = vadd.f32 0.0, %v1563
        %v1565 = vpop.f32.mrf.mxu0
        %1566 = vmatprep.mubr.f32.mxu0 %v1385
        %1567 = vmatmul.mubr.f32.gmra.mxu0 %v1305
        %v1568 = vpop.f32.mrf.mxu0
        %v1569 = vadd.f32 0.0, %v1568
        %v1570 = vpop.f32.mrf.mxu0
        %1571 = vmatprep.mubr.f32.mxu0 %v1388
        %1572 = vmatmul.mubr.f32.gmra.mxu0 %v1306
        %v1573 = vpop.f32.mrf.mxu0
        %v1574 = vadd.f32 0.0, %v1573
        %v1575 = vpop.f32.mrf.mxu0
        %1576 = vmatprep.mubr.f32.mxu0 %v1391
        %1577 = vmatmul.mubr.f32.gmra.mxu0 %v1307
        %v1578 = vpop.f32.mrf.mxu0
        %v1579 = vadd.f32 0.0, %v1578
        %v1580 = vpop.f32.mrf.mxu0
        %1581 = vmatprep.mubr.f32.mxu0 %v1394
        %1582 = vmatmul.mubr.f32.gmra.mxu0 %v1308
        %v1583 = vpop.f32.mrf.mxu0
        %v1584 = vadd.f32 0.0, %v1583
        %v1585 = vpop.f32.mrf.mxu0
        %1586 = vmatprep.mubr.f32.mxu0 %v1397
        %1587 = vmatmul.mubr.f32.gmra.mxu0 %v1309
        %v1588 = vpop.f32.mrf.mxu0
        %v1589 = vadd.f32 0.0, %v1588
        %v1590 = vpop.f32.mrf.mxu0
        %1591 = vmatprep.mubr.f32.mxu0 %v1400
        %1592 = vmatmul.mubr.f32.gmra.mxu0 %v1310
        %v1593 = vpop.f32.mrf.mxu0
        %v1594 = vadd.f32 0.0, %v1593
        %v1595 = vpop.f32.mrf.mxu0
        %1596 = vmatprep.mubr.f32.mxu0 %v1403
        %1597 = vmatmul.mubr.f32.gmra.mxu0 %v1311
        %v1598 = vpop.f32.mrf.mxu0
        %v1599 = vadd.f32 0.0, %v1598
        %v1600 = vpop.f32.mrf.mxu0
        %1601 = vmatprep.mubr.f32.mxu0 %v1406
        %1602 = vmatmul.mubr.f32.gmra.mxu0 %v1312
        %v1603 = vpop.f32.mrf.mxu0
        %v1604 = vadd.f32 0.0, %v1603
        %v1605 = vpop.f32.mrf.mxu0
        %1606 = vmatprep.mubr.f32.mxu0 %v1409
        %1607 = vmatmul.mubr.f32.gmra.mxu0 %v1313
        %v1608 = vpop.f32.mrf.mxu0
        %v1609 = vadd.f32 0.0, %v1608
        %v1610 = vpop.f32.mrf.mxu0
        %1611 = vmatprep.mubr.f32.mxu0 %v1412
        %1612 = vmatmul.mubr.f32.gmra.mxu0 %v1314
        %v1613 = vpop.f32.mrf.mxu0
        %v1614 = vadd.f32 0.0, %v1613
        %v1615 = vpop.f32.mrf.mxu0
        %1616 = vmatprep.mubr.f32.mxu0 %v1415
        %1617 = vmatmul.mubr.f32.gmra.mxu0 %v1315
        %v1618 = vpop.f32.mrf.mxu0
        %v1619 = vadd.f32 0.0, %v1618
        %v1620 = vpop.f32.mrf.mxu0
        %1621 = vmatprep.mubr.f32.mxu0 %v1418
        %1622 = vmatmul.mubr.f32.gmra.mxu0 %v1316
        %v1623 = vpop.f32.mrf.mxu0
        %v1624 = vadd.f32 0.0, %v1623
        %v1625 = vpop.f32.mrf.mxu0
        %1626 = vmatprep.mubr.f32.mxu0 %v1421
        %1627 = vmatmul.mubr.f32.gmra.mxu0 %v1317
        %v1628 = vpop.f32.mrf.mxu0
        %v1629 = vadd.f32 0.0, %v1628
        %v1630 = vpop.f32.mrf.mxu0
        %1631 = vmatprep.mubr.f32.mxu0 %v1424
        %1632 = vmatmul.mubr.f32.gmra.mxu0 %v1318
        %v1633 = vpop.f32.mrf.mxu0
        %v1634 = vadd.f32 0.0, %v1633
        %v1635 = vpop.f32.mrf.mxu0
        %1636 = vmatprep.mubr.f32.mxu0 %v1427
        %1637 = vmatmul.mubr.f32.gmra.mxu0 %v1319
        %v1638 = vpop.f32.mrf.mxu0
        %v1639 = vadd.f32 0.0, %v1638
        %v1640 = vpop.f32.mrf.mxu0
        %1641 = vmatprep.mubr.f32.mxu0 %v1430
        %1642 = vmatmul.mubr.f32.gmra.mxu0 %v1320
        %v1643 = vpop.f32.mrf.mxu0
        %v1644 = vadd.f32 0.0, %v1643
        %v1645 = vpop.f32.mrf.mxu0
        %1646 = vmatprep.mubr.f32.mxu0 %v1433
        %1647 = vmatmul.mubr.f32.gmra.mxu0 %v1321
        %v1648 = vpop.f32.mrf.mxu0
        %v1649 = vadd.f32 0.0, %v1648
        %v1650 = vpop.f32.mrf.mxu0
        %1651 = vmatprep.mubr.f32.mxu0 %v1436
        %1652 = vmatmul.mubr.f32.gmra.mxu0 %v1322
        %v1653 = vpop.f32.mrf.mxu0
        %v1654 = vadd.f32 0.0, %v1653
        %v1655 = vpop.f32.mrf.mxu0
        %1656 = vmatprep.mubr.f32.mxu0 %v1439
        %1657 = vmatmul.mubr.f32.gmra.mxu0 %v1323
        %v1658 = vpop.f32.mrf.mxu0
        %v1659 = vadd.f32 0.0, %v1658
        %v1660 = vpop.f32.mrf.mxu0
        %1661 = vmatprep.mubr.f32.mxu0 %v1442
        %1662 = vmatmul.mubr.f32.gmra.mxu0 %v1324
        %v1663 = vpop.f32.mrf.mxu0
        %v1664 = vadd.f32 0.0, %v1663
        %v1665 = vpop.f32.mrf.mxu0
        %1666 = vmatprep.mubr.f32.mxu0 %v1445
        %1667 = vmatmul.mubr.f32.gmra.mxu0 %v1325
        %v1668 = vpop.f32.mrf.mxu0
        %v1669 = vadd.f32 0.0, %v1668
        %v1670 = vpop.f32.mrf.mxu0
        %1671 = vdwg.mxu0
        %v1672 = vld [vmem:[#allocation3] sm:$0xff]
        %v1673 = vld [vmem:[#allocation3 + $0x8] sm:$0xff]
        %v1674 = vld [vmem:[#allocation3 + $0x10] sm:$0xff]
        %v1675 = vld [vmem:[#allocation3 + $0x18] sm:$0xff]
        %v1676 = vld [vmem:[#allocation3 + $0x20] sm:$0xff]
        %v1677 = vld [vmem:[#allocation3 + $0x28] sm:$0xff]
        %v1678 = vld [vmem:[#allocation3 + $0x30] sm:$0xff]
        %v1679 = vld [vmem:[#allocation3 + $0x38] sm:$0xff]
        %v1680 = vld [vmem:[#allocation3 + $0x40] sm:$0xff]
        %v1681 = vld [vmem:[#allocation3 + $0x48] sm:$0xff]
        %v1682 = vld [vmem:[#allocation3 + $0x50] sm:$0xff]
        %v1683 = vld [vmem:[#allocation3 + $0x58] sm:$0xff]
        %v1684 = vld [vmem:[#allocation3 + $0x60] sm:$0xff]
        %v1685 = vld [vmem:[#allocation3 + $0x68] sm:$0xff]
        %v1686 = vld [vmem:[#allocation3 + $0x70] sm:$0xff]
        %v1687 = vld [vmem:[#allocation3 + $0x78] sm:$0xff]
        %v1688 = vld [vmem:[#allocation3 + $0x80] sm:$0xff]
        %v1689 = vld [vmem:[#allocation3 + $0x88] sm:$0xff]
        %v1690 = vld [vmem:[#allocation3 + $0x90] sm:$0xff]
        %v1691 = vld [vmem:[#allocation3 + $0x98] sm:$0xff]
        %v1692 = vld [vmem:[#allocation3 + $0xa0] sm:$0xff]
        %v1693 = vld [vmem:[#allocation3 + $0xa8] sm:$0xff]
        %v1694 = vld [vmem:[#allocation3 + $0xb0] sm:$0xff]
        %v1695 = vld [vmem:[#allocation3 + $0xb8] sm:$0xff]
        %v1696 = vld [vmem:[#allocation3 + $0xc0] sm:$0xff]
        %v1697 = vld [vmem:[#allocation3 + $0xc8] sm:$0xff]
        %v1698 = vld [vmem:[#allocation3 + $0xd0] sm:$0xff]
        %v1699 = vld [vmem:[#allocation3 + $0xd8] sm:$0xff]
        %v1700 = vld [vmem:[#allocation3 + $0xe0] sm:$0xff]
        %v1701 = vld [vmem:[#allocation3 + $0xe8] sm:$0xff]
        %v1702 = vld [vmem:[#allocation3 + $0xf0] sm:$0xff]
        %v1703 = vld [vmem:[#allocation3 + $0xf8] sm:$0xff]
        %v1704 = vadd.f32 %v1672, %v1514
        %v1705 = vadd.f32 %v1673, %v1519
        %v1706 = vadd.f32 %v1674, %v1524
        %v1707 = vadd.f32 %v1675, %v1529
        %v1708 = vadd.f32 %v1676, %v1534
        %v1709 = vadd.f32 %v1677, %v1539
        %v1710 = vadd.f32 %v1678, %v1544
        %v1711 = vadd.f32 %v1679, %v1549
        %v1712 = vadd.f32 %v1680, %v1554
        %v1713 = vadd.f32 %v1681, %v1559
        %v1714 = vadd.f32 %v1682, %v1564
        %v1715 = vadd.f32 %v1683, %v1569
        %v1716 = vadd.f32 %v1684, %v1574
        %v1717 = vadd.f32 %v1685, %v1579
        %v1718 = vadd.f32 %v1686, %v1584
        %v1719 = vadd.f32 %v1687, %v1589
        %v1720 = vadd.f32 %v1688, %v1594
        %v1721 = vadd.f32 %v1689, %v1599
        %v1722 = vadd.f32 %v1690, %v1604
        %v1723 = vadd.f32 %v1691, %v1609
        %v1724 = vadd.f32 %v1692, %v1614
        %v1725 = vadd.f32 %v1693, %v1619
        %v1726 = vadd.f32 %v1694, %v1624
        %v1727 = vadd.f32 %v1695, %v1629
        %v1728 = vadd.f32 %v1696, %v1634
        %v1729 = vadd.f32 %v1697, %v1639
        %v1730 = vadd.f32 %v1698, %v1644
        %v1731 = vadd.f32 %v1699, %v1649
        %v1732 = vadd.f32 %v1700, %v1654
        %v1733 = vadd.f32 %v1701, %v1659
        %v1734 = vadd.f32 %v1702, %v1664
        %v1735 = vadd.f32 %v1703, %v1669
        %1736 = vst.msk [vmem:[#allocation3] sm:$0xff] %vm659, %v1704
        %1737 = vst.msk [vmem:[#allocation3 + $0x8] sm:$0xff] %vm659, %v1705
        %1738 = vst.msk [vmem:[#allocation3 + $0x10] sm:$0xff] %vm659, %v1706
        %1739 = vst.msk [vmem:[#allocation3 + $0x18] sm:$0xff] %vm659, %v1707
        %1740 = vst.msk [vmem:[#allocation3 + $0x20] sm:$0xff] %vm659, %v1708
        %1741 = vst.msk [vmem:[#allocation3 + $0x28] sm:$0xff] %vm659, %v1709
        %1742 = vst.msk [vmem:[#allocation3 + $0x30] sm:$0xff] %vm659, %v1710
        %1743 = vst.msk [vmem:[#allocation3 + $0x38] sm:$0xff] %vm659, %v1711
        %1744 = vst.msk [vmem:[#allocation3 + $0x40] sm:$0xff] %vm659, %v1712
        %1745 = vst.msk [vmem:[#allocation3 + $0x48] sm:$0xff] %vm659, %v1713
        %1746 = vst.msk [vmem:[#allocation3 + $0x50] sm:$0xff] %vm659, %v1714
        %1747 = vst.msk [vmem:[#allocation3 + $0x58] sm:$0xff] %vm659, %v1715
        %1748 = vst.msk [vmem:[#allocation3 + $0x60] sm:$0xff] %vm659, %v1716
        %1749 = vst.msk [vmem:[#allocation3 + $0x68] sm:$0xff] %vm659, %v1717
        %1750 = vst.msk [vmem:[#allocation3 + $0x70] sm:$0xff] %vm659, %v1718
        %1751 = vst.msk [vmem:[#allocation3 + $0x78] sm:$0xff] %vm659, %v1719
        %1752 = vst.msk [vmem:[#allocation3 + $0x80] sm:$0xff] %vm659, %v1720
        %1753 = vst.msk [vmem:[#allocation3 + $0x88] sm:$0xff] %vm659, %v1721
        %1754 = vst.msk [vmem:[#allocation3 + $0x90] sm:$0xff] %vm659, %v1722
        %1755 = vst.msk [vmem:[#allocation3 + $0x98] sm:$0xff] %vm659, %v1723
        %1756 = vst.msk [vmem:[#allocation3 + $0xa0] sm:$0xff] %vm659, %v1724
        %1757 = vst.msk [vmem:[#allocation3 + $0xa8] sm:$0xff] %vm659, %v1725
        %1758 = vst.msk [vmem:[#allocation3 + $0xb0] sm:$0xff] %vm659, %v1726
        %1759 = vst.msk [vmem:[#allocation3 + $0xb8] sm:$0xff] %vm659, %v1727
        %1760 = vst.msk [vmem:[#allocation3 + $0xc0] sm:$0xff] %vm659, %v1728
        %1761 = vst.msk [vmem:[#allocation3 + $0xc8] sm:$0xff] %vm659, %v1729
        %1762 = vst.msk [vmem:[#allocation3 + $0xd0] sm:$0xff] %vm659, %v1730
        %1763 = vst.msk [vmem:[#allocation3 + $0xd8] sm:$0xff] %vm659, %v1731
        %1764 = vst.msk [vmem:[#allocation3 + $0xe0] sm:$0xff] %vm659, %v1732
        %1765 = vst.msk [vmem:[#allocation3 + $0xe8] sm:$0xff] %vm659, %v1733
        %1766 = vst.msk [vmem:[#allocation3 + $0xf0] sm:$0xff] %vm659, %v1734
        %1767 = vst.msk [vmem:[#allocation3 + $0xf8] sm:$0xff] %vm659, %v1735
        %s1768 = scalar_lea.vmem [#allocation2], 48
        %v1769 = vld [vmem:[%s1768] sm:$0xff]
        %v1770 = vld [vmem:[%s1768 + $0x8] sm:$0xff]
        %v1771 = vld [vmem:[%s1768 + $0x18] sm:$0xff]
        %v1772 = vld [vmem:[%s1768 + $0x20] sm:$0xff]
        %v1773 = vld [vmem:[%s1768 + $0x30] sm:$0xff]
        %v1774 = vld [vmem:[%s1768 + $0x38] sm:$0xff]
        %v1775 = vld [vmem:[%s1768 + $0x48] sm:$0xff]
        %v1776 = vld [vmem:[%s1768 + $0x50] sm:$0xff]
        %v1777 = vld [vmem:[%s1768 + $0x60] sm:$0xff]
        %v1778 = vld [vmem:[%s1768 + $0x68] sm:$0xff]
        %v1779 = vld [vmem:[%s1768 + $0x78] sm:$0xff]
        %v1780 = vld [vmem:[%s1768 + $0x80] sm:$0xff]
        %v1781 = vld [vmem:[%s1768 + $0x90] sm:$0xff]
        %v1782 = vld [vmem:[%s1768 + $0x98] sm:$0xff]
        %v1783 = vld [vmem:[%s1768 + $0xa8] sm:$0xff]
        %v1784 = vld [vmem:[%s1768 + $0xb0] sm:$0xff]
        %v1785 = vld [vmem:[%s1768 + $0xc0] sm:$0xff]
        %v1786 = vld [vmem:[%s1768 + $0xc8] sm:$0xff]
        %v1787 = vld [vmem:[%s1768 + $0xd8] sm:$0xff]
        %v1788 = vld [vmem:[%s1768 + $0xe0] sm:$0xff]
        %v1789 = vld [vmem:[%s1768 + $0xf0] sm:$0xff]
        %v1790 = vld [vmem:[%s1768 + $0xf8] sm:$0xff]
        %v1791 = vld [vmem:[%s1768 + $0x108] sm:$0xff]
        %v1792 = vld [vmem:[%s1768 + $0x110] sm:$0xff]
        %v1793 = vld [vmem:[%s1768 + $0x120] sm:$0xff]
        %v1794 = vld [vmem:[%s1768 + $0x128] sm:$0xff]
        %v1795 = vld [vmem:[%s1768 + $0x138] sm:$0xff]
        %v1796 = vld [vmem:[%s1768 + $0x140] sm:$0xff]
        %v1797 = vld [vmem:[%s1768 + $0x150] sm:$0xff]
        %v1798 = vld [vmem:[%s1768 + $0x158] sm:$0xff]
        %v1799 = vld [vmem:[%s1768 + $0x168] sm:$0xff]
        %v1800 = vld [vmem:[%s1768 + $0x170] sm:$0xff]
        %v1801 = vld [vmem:[%s1768 + $0x1] sm:$0xff]
        %v1802 = vld [vmem:[%s1768 + $0x9] sm:$0xff]
        %v1803 = vld [vmem:[%s1768 + $0x19] sm:$0xff]
        %v1804 = vld [vmem:[%s1768 + $0x21] sm:$0xff]
        %v1805 = vld [vmem:[%s1768 + $0x31] sm:$0xff]
        %v1806 = vld [vmem:[%s1768 + $0x39] sm:$0xff]
        %v1807 = vld [vmem:[%s1768 + $0x49] sm:$0xff]
        %v1808 = vld [vmem:[%s1768 + $0x51] sm:$0xff]
        %v1809 = vld [vmem:[%s1768 + $0x61] sm:$0xff]
        %v1810 = vld [vmem:[%s1768 + $0x69] sm:$0xff]
        %v1811 = vld [vmem:[%s1768 + $0x79] sm:$0xff]
        %v1812 = vld [vmem:[%s1768 + $0x81] sm:$0xff]
        %v1813 = vld [vmem:[%s1768 + $0x91] sm:$0xff]
        %v1814 = vld [vmem:[%s1768 + $0x99] sm:$0xff]
        %v1815 = vld [vmem:[%s1768 + $0xa9] sm:$0xff]
        %v1816 = vld [vmem:[%s1768 + $0xb1] sm:$0xff]
        %v1817 = vld [vmem:[%s1768 + $0xc1] sm:$0xff]
        %v1818 = vld [vmem:[%s1768 + $0xc9] sm:$0xff]
        %v1819 = vld [vmem:[%s1768 + $0xd9] sm:$0xff]
        %v1820 = vld [vmem:[%s1768 + $0xe1] sm:$0xff]
        %v1821 = vld [vmem:[%s1768 + $0xf1] sm:$0xff]
        %v1822 = vld [vmem:[%s1768 + $0xf9] sm:$0xff]
        %v1823 = vld [vmem:[%s1768 + $0x109] sm:$0xff]
        %v1824 = vld [vmem:[%s1768 + $0x111] sm:$0xff]
        %v1825 = vld [vmem:[%s1768 + $0x121] sm:$0xff]
        %v1826 = vld [vmem:[%s1768 + $0x129] sm:$0xff]
        %v1827 = vld [vmem:[%s1768 + $0x139] sm:$0xff]
        %v1828 = vld [vmem:[%s1768 + $0x141] sm:$0xff]
        %v1829 = vld [vmem:[%s1768 + $0x151] sm:$0xff]
        %v1830 = vld [vmem:[%s1768 + $0x159] sm:$0xff]
        %v1831 = vld [vmem:[%s1768 + $0x169] sm:$0xff]
        %v1832 = vld [vmem:[%s1768 + $0x171] sm:$0xff]
        %v1833 = vld [vmem:[%s1768 + $0x2] sm:$0xff]
        %v1834 = vld [vmem:[%s1768 + $0xa] sm:$0xff]
        %v1835 = vld [vmem:[%s1768 + $0x1a] sm:$0xff]
        %v1836 = vld [vmem:[%s1768 + $0x22] sm:$0xff]
        %v1837 = vld [vmem:[%s1768 + $0x32] sm:$0xff]
        %v1838 = vld [vmem:[%s1768 + $0x3a] sm:$0xff]
        %v1839 = vld [vmem:[%s1768 + $0x4a] sm:$0xff]
        %v1840 = vld [vmem:[%s1768 + $0x52] sm:$0xff]
        %v1841 = vld [vmem:[%s1768 + $0x62] sm:$0xff]
        %v1842 = vld [vmem:[%s1768 + $0x6a] sm:$0xff]
        %v1843 = vld [vmem:[%s1768 + $0x7a] sm:$0xff]
        %v1844 = vld [vmem:[%s1768 + $0x82] sm:$0xff]
        %v1845 = vld [vmem:[%s1768 + $0x92] sm:$0xff]
        %v1846 = vld [vmem:[%s1768 + $0x9a] sm:$0xff]
        %v1847 = vld [vmem:[%s1768 + $0xaa] sm:$0xff]
        %v1848 = vld [vmem:[%s1768 + $0xb2] sm:$0xff]
        %v1849 = vld [vmem:[%s1768 + $0xc2] sm:$0xff]
        %v1850 = vld [vmem:[%s1768 + $0xca] sm:$0xff]
        %v1851 = vld [vmem:[%s1768 + $0xda] sm:$0xff]
        %v1852 = vld [vmem:[%s1768 + $0xe2] sm:$0xff]
        %v1853 = vld [vmem:[%s1768 + $0xf2] sm:$0xff]
        %v1854 = vld [vmem:[%s1768 + $0xfa] sm:$0xff]
        %v1855 = vld [vmem:[%s1768 + $0x10a] sm:$0xff]
        %v1856 = vld [vmem:[%s1768 + $0x112] sm:$0xff]
        %v1857 = vld [vmem:[%s1768 + $0x122] sm:$0xff]
        %v1858 = vld [vmem:[%s1768 + $0x12a] sm:$0xff]
        %v1859 = vld [vmem:[%s1768 + $0x13a] sm:$0xff]
        %v1860 = vld [vmem:[%s1768 + $0x142] sm:$0xff]
        %v1861 = vld [vmem:[%s1768 + $0x152] sm:$0xff]
        %v1862 = vld [vmem:[%s1768 + $0x15a] sm:$0xff]
        %v1863 = vld [vmem:[%s1768 + $0x16a] sm:$0xff]
        %v1864 = vld [vmem:[%s1768 + $0x172] sm:$0xff]
        %1897 = vrot.lane.b32.xlu0 %v1801, 64
        %v1898 = vpop.permute.xlu0 %1897
        %1899 = vrot.lane.b32.xlu0 %v1802, 64
        %v1900 = vpop.permute.xlu0 %1899
        %1901 = vrot.lane.b32.xlu0 %v1803, 64
        %v1902 = vpop.permute.xlu0 %1901
        %1903 = vrot.lane.b32.xlu0 %v1804, 64
        %v1904 = vpop.permute.xlu0 %1903
        %1905 = vrot.lane.b32.xlu0 %v1805, 64
        %v1906 = vpop.permute.xlu0 %1905
        %1907 = vrot.lane.b32.xlu0 %v1806, 64
        %v1908 = vpop.permute.xlu0 %1907
        %1909 = vrot.lane.b32.xlu0 %v1807, 64
        %v1910 = vpop.permute.xlu0 %1909
        %1911 = vrot.lane.b32.xlu0 %v1808, 64
        %v1912 = vpop.permute.xlu0 %1911
        %1913 = vrot.lane.b32.xlu0 %v1809, 64
        %v1914 = vpop.permute.xlu0 %1913
        %1915 = vrot.lane.b32.xlu0 %v1810, 64
        %v1916 = vpop.permute.xlu0 %1915
        %1917 = vrot.lane.b32.xlu0 %v1811, 64
        %v1918 = vpop.permute.xlu0 %1917
        %1919 = vrot.lane.b32.xlu0 %v1812, 64
        %v1920 = vpop.permute.xlu0 %1919
        %1921 = vrot.lane.b32.xlu0 %v1813, 64
        %v1922 = vpop.permute.xlu0 %1921
        %1923 = vrot.lane.b32.xlu0 %v1814, 64
        %v1924 = vpop.permute.xlu0 %1923
        %1925 = vrot.lane.b32.xlu0 %v1815, 64
        %v1926 = vpop.permute.xlu0 %1925
        %1927 = vrot.lane.b32.xlu0 %v1816, 64
        %v1928 = vpop.permute.xlu0 %1927
        %1929 = vrot.lane.b32.xlu0 %v1817, 64
        %v1930 = vpop.permute.xlu0 %1929
        %1931 = vrot.lane.b32.xlu0 %v1818, 64
        %v1932 = vpop.permute.xlu0 %1931
        %1933 = vrot.lane.b32.xlu0 %v1819, 64
        %v1934 = vpop.permute.xlu0 %1933
        %1935 = vrot.lane.b32.xlu0 %v1820, 64
        %v1936 = vpop.permute.xlu0 %1935
        %1937 = vrot.lane.b32.xlu0 %v1821, 64
        %v1938 = vpop.permute.xlu0 %1937
        %1939 = vrot.lane.b32.xlu0 %v1822, 64
        %v1940 = vpop.permute.xlu0 %1939
        %1941 = vrot.lane.b32.xlu0 %v1823, 64
        %v1942 = vpop.permute.xlu0 %1941
        %1943 = vrot.lane.b32.xlu0 %v1824, 64
        %v1944 = vpop.permute.xlu0 %1943
        %1945 = vrot.lane.b32.xlu0 %v1825, 64
        %v1946 = vpop.permute.xlu0 %1945
        %1947 = vrot.lane.b32.xlu0 %v1826, 64
        %v1948 = vpop.permute.xlu0 %1947
        %1949 = vrot.lane.b32.xlu0 %v1827, 64
        %v1950 = vpop.permute.xlu0 %1949
        %1951 = vrot.lane.b32.xlu0 %v1828, 64
        %v1952 = vpop.permute.xlu0 %1951
        %1953 = vrot.lane.b32.xlu0 %v1829, 64
        %v1954 = vpop.permute.xlu0 %1953
        %1955 = vrot.lane.b32.xlu0 %v1830, 64
        %v1956 = vpop.permute.xlu0 %1955
        %1957 = vrot.lane.b32.xlu0 %v1831, 64
        %v1958 = vpop.permute.xlu0 %1957
        %1959 = vrot.lane.b32.xlu0 %v1832, 64
        %v1960 = vpop.permute.xlu0 %1959
        %v1993 = vsel %vm659, %v1769, %v1898
        %v1994 = vsel %vm659, %v1770, %v1900
        %v1995 = vsel %vm659, %v1771, %v1902
        %v1996 = vsel %vm659, %v1772, %v1904
        %v1997 = vsel %vm659, %v1773, %v1906
        %v1998 = vsel %vm659, %v1774, %v1908
        %v1999 = vsel %vm659, %v1775, %v1910
        %v2000 = vsel %vm659, %v1776, %v1912
        %v2001 = vsel %vm659, %v1777, %v1914
        %v2002 = vsel %vm659, %v1778, %v1916
        %v2003 = vsel %vm659, %v1779, %v1918
        %v2004 = vsel %vm659, %v1780, %v1920
        %v2005 = vsel %vm659, %v1781, %v1922
        %v2006 = vsel %vm659, %v1782, %v1924
        %v2007 = vsel %vm659, %v1783, %v1926
        %v2008 = vsel %vm659, %v1784, %v1928
        %v2009 = vsel %vm659, %v1785, %v1930
        %v2010 = vsel %vm659, %v1786, %v1932
        %v2011 = vsel %vm659, %v1787, %v1934
        %v2012 = vsel %vm659, %v1788, %v1936
        %v2013 = vsel %vm659, %v1789, %v1938
        %v2014 = vsel %vm659, %v1790, %v1940
        %v2015 = vsel %vm659, %v1791, %v1942
        %v2016 = vsel %vm659, %v1792, %v1944
        %v2017 = vsel %vm659, %v1793, %v1946
        %v2018 = vsel %vm659, %v1794, %v1948
        %v2019 = vsel %vm659, %v1795, %v1950
        %v2020 = vsel %vm659, %v1796, %v1952
        %v2021 = vsel %vm659, %v1797, %v1954
        %v2022 = vsel %vm659, %v1798, %v1956
        %v2023 = vsel %vm659, %v1799, %v1958
        %v2024 = vsel %vm659, %v1800, %v1960
        %s2025 = scalar_lea.vmem %s303, 384
        %v2026 = vld [vmem:[%s2025] sm:$0xff]
        %v2027 = vld [vmem:[%s2025 + $0x8] sm:$0xff]
        %v2028 = vld [vmem:[%s2025 + $0x10] sm:$0xff]
        %v2029 = vld [vmem:[%s2025 + $0x18] sm:$0xff]
        %v2030 = vld [vmem:[%s2025 + $0x20] sm:$0xff]
        %v2031 = vld [vmem:[%s2025 + $0x28] sm:$0xff]
        %v2032 = vld [vmem:[%s2025 + $0x30] sm:$0xff]
        %v2033 = vld [vmem:[%s2025 + $0x38] sm:$0xff]
        %v2034 = vld [vmem:[%s2025 + $0x40] sm:$0xff]
        %v2035 = vld [vmem:[%s2025 + $0x48] sm:$0xff]
        %v2036 = vld [vmem:[%s2025 + $0x50] sm:$0xff]
        %v2037 = vld [vmem:[%s2025 + $0x58] sm:$0xff]
        %v2038 = vld [vmem:[%s2025 + $0x60] sm:$0xff]
        %v2039 = vld [vmem:[%s2025 + $0x68] sm:$0xff]
        %v2040 = vld [vmem:[%s2025 + $0x70] sm:$0xff]
        %v2041 = vld [vmem:[%s2025 + $0x78] sm:$0xff]
        %v2042 = vld [vmem:[%s2025 + $0x80] sm:$0xff]
        %v2043 = vld [vmem:[%s2025 + $0x88] sm:$0xff]
        %v2044 = vld [vmem:[%s2025 + $0x90] sm:$0xff]
        %v2045 = vld [vmem:[%s2025 + $0x98] sm:$0xff]
        %v2046 = vld [vmem:[%s2025 + $0xa0] sm:$0xff]
        %v2047 = vld [vmem:[%s2025 + $0xa8] sm:$0xff]
        %v2048 = vld [vmem:[%s2025 + $0xb0] sm:$0xff]
        %v2049 = vld [vmem:[%s2025 + $0xb8] sm:$0xff]
        %v2051 = vsel %vm659, %v1833, 0
        %v2054 = vsel %vm659, %v1834, 0
        %v2057 = vsel %vm659, %v1835, 0
        %v2060 = vsel %vm659, %v1836, 0
        %v2063 = vsel %vm659, %v1837, 0
        %v2066 = vsel %vm659, %v1838, 0
        %v2069 = vsel %vm659, %v1839, 0
        %v2072 = vsel %vm659, %v1840, 0
        %v2075 = vsel %vm659, %v1841, 0
        %v2078 = vsel %vm659, %v1842, 0
        %v2081 = vsel %vm659, %v1843, 0
        %v2084 = vsel %vm659, %v1844, 0
        %v2087 = vsel %vm659, %v1845, 0
        %v2090 = vsel %vm659, %v1846, 0
        %v2093 = vsel %vm659, %v1847, 0
        %v2096 = vsel %vm659, %v1848, 0
        %v2099 = vsel %vm659, %v1849, 0
        %v2102 = vsel %vm659, %v1850, 0
        %v2105 = vsel %vm659, %v1851, 0
        %v2108 = vsel %vm659, %v1852, 0
        %v2111 = vsel %vm659, %v1853, 0
        %v2114 = vsel %vm659, %v1854, 0
        %v2117 = vsel %vm659, %v1855, 0
        %v2120 = vsel %vm659, %v1856, 0
        %v2123 = vsel %vm659, %v1857, 0
        %v2126 = vsel %vm659, %v1858, 0
        %v2129 = vsel %vm659, %v1859, 0
        %v2132 = vsel %vm659, %v1860, 0
        %v2135 = vsel %vm659, %v1861, 0
        %v2138 = vsel %vm659, %v1862, 0
        %v2141 = vsel %vm659, %v1863, 0
        %v2144 = vsel %vm659, %v1864, 0
        %2146 = vmatprep.subr.mxu0 0.0
        %2147 = vmatpush1.msra.mxu0 %v2041
        %2148 = vmatprep.subr.mxu0 0.0
        %2149 = vmatpush1.msra.mxu0 %v2040
        %2150 = vmatprep.subr.mxu0 0.0
        %2151 = vmatpush1.msra.mxu0 %v2039
        %2152 = vmatprep.subr.mxu0 0.0
        %2153 = vmatpush1.msra.mxu0 %v2038
        %2154 = vmatprep.subr.mxu0 0.0
        %2155 = vmatpush1.msra.mxu0 %v2037
        %2156 = vmatprep.subr.mxu0 0.0
        %2157 = vmatpush1.msra.mxu0 %v2036
        %2158 = vmatprep.subr.mxu0 0.0
        %2159 = vmatpush1.msra.mxu0 %v2035
        %2160 = vmatprep.subr.mxu0 0.0
        %2161 = vmatpush1.msra.mxu0 %v2034
        %2162 = vmatprep.subr.mxu0 0.0
        %2163 = vmatpush1.msra.mxu0 %v2033
        %2164 = vmatprep.subr.mxu0 0.0
        %2165 = vmatpush1.msra.mxu0 %v2032
        %2166 = vmatprep.subr.mxu0 0.0
        %2167 = vmatpush1.msra.mxu0 %v2031
        %2168 = vmatprep.subr.mxu0 0.0
        %2169 = vmatpush1.msra.mxu0 %v2030
        %2170 = vmatprep.subr.mxu0 0.0
        %2171 = vmatpush1.msra.mxu0 %v2029
        %2172 = vmatprep.subr.mxu0 0.0
        %2173 = vmatpush1.msra.mxu0 %v2028
        %2174 = vmatprep.subr.mxu0 0.0
        %2175 = vmatpush1.msra.mxu0 %v2027
        %2176 = vmatprep.subr.mxu0 0.0
        %2177 = vmatpush1.msra.mxu0 %v2026
        %2178 = vmatprep.subr.mxu0 0.0
        %2179 = vmatpush2.msra.mxu0 0.0
        %2180 = vmatprep.subr.mxu0 0.0
        %2181 = vmatpush2.msra.mxu0 0.0
        %2182 = vmatprep.subr.mxu0 0.0
        %2183 = vmatpush2.msra.mxu0 0.0
        %2184 = vmatprep.subr.mxu0 0.0
        %2185 = vmatpush2.msra.mxu0 0.0
        %2186 = vmatprep.subr.mxu0 0.0
        %2187 = vmatpush2.msra.mxu0 0.0
        %2188 = vmatprep.subr.mxu0 0.0
        %2189 = vmatpush2.msra.mxu0 0.0
        %2190 = vmatprep.subr.mxu0 0.0
        %2191 = vmatpush2.msra.mxu0 0.0
        %2192 = vmatprep.subr.mxu0 0.0
        %2193 = vmatpush2.msra.mxu0 0.0
        %2194 = vmatprep.subr.mxu0 0.0
        %2195 = vmatpush2.msra.mxu0 %v2049
        %2196 = vmatprep.subr.mxu0 0.0
        %2197 = vmatpush2.msra.mxu0 %v2048
        %2198 = vmatprep.subr.mxu0 0.0
        %2199 = vmatpush2.msra.mxu0 %v2047
        %2200 = vmatprep.subr.mxu0 0.0
        %2201 = vmatpush2.msra.mxu0 %v2046
        %2202 = vmatprep.subr.mxu0 0.0
        %2203 = vmatpush2.msra.mxu0 %v2045
        %2204 = vmatprep.subr.mxu0 0.0
        %2205 = vmatpush2.msra.mxu0 %v2044
        %2206 = vmatprep.subr.mxu0 0.0
        %2207 = vmatpush2.msra.mxu0 %v2043
        %2208 = vmatprep.subr.mxu0 0.0
        %2209 = vmatpush2.msra.mxu0 %v2042
        %2210 = vmatprep.mubr.f32.mxu0 %v2051
        %2211 = vmatmul.mubr.f32.gmra.mxu0 %v1993
        %v2212 = vpop.f32.mrf.mxu0
        %v2213 = vadd.f32 0.0, %v2212
        %v2214 = vpop.f32.mrf.mxu0
        %2215 = vmatprep.mubr.f32.mxu0 %v2054
        %2216 = vmatmul.mubr.f32.gmra.mxu0 %v1994
        %v2217 = vpop.f32.mrf.mxu0
        %v2218 = vadd.f32 0.0, %v2217
        %v2219 = vpop.f32.mrf.mxu0
        %2220 = vmatprep.mubr.f32.mxu0 %v2057
        %2221 = vmatmul.mubr.f32.gmra.mxu0 %v1995
        %v2222 = vpop.f32.mrf.mxu0
        %v2223 = vadd.f32 0.0, %v2222
        %v2224 = vpop.f32.mrf.mxu0
        %2225 = vmatprep.mubr.f32.mxu0 %v2060
        %2226 = vmatmul.mubr.f32.gmra.mxu0 %v1996
        %v2227 = vpop.f32.mrf.mxu0
        %v2228 = vadd.f32 0.0, %v2227
        %v2229 = vpop.f32.mrf.mxu0
        %2230 = vmatprep.mubr.f32.mxu0 %v2063
        %2231 = vmatmul.mubr.f32.gmra.mxu0 %v1997
        %v2232 = vpop.f32.mrf.mxu0
        %v2233 = vadd.f32 0.0, %v2232
        %v2234 = vpop.f32.mrf.mxu0
        %2235 = vmatprep.mubr.f32.mxu0 %v2066
        %2236 = vmatmul.mubr.f32.gmra.mxu0 %v1998
        %v2237 = vpop.f32.mrf.mxu0
        %v2238 = vadd.f32 0.0, %v2237
        %v2239 = vpop.f32.mrf.mxu0
        %2240 = vmatprep.mubr.f32.mxu0 %v2069
        %2241 = vmatmul.mubr.f32.gmra.mxu0 %v1999
        %v2242 = vpop.f32.mrf.mxu0
        %v2243 = vadd.f32 0.0, %v2242
        %v2244 = vpop.f32.mrf.mxu0
        %2245 = vmatprep.mubr.f32.mxu0 %v2072
        %2246 = vmatmul.mubr.f32.gmra.mxu0 %v2000
        %v2247 = vpop.f32.mrf.mxu0
        %v2248 = vadd.f32 0.0, %v2247
        %v2249 = vpop.f32.mrf.mxu0
        %2250 = vmatprep.mubr.f32.mxu0 %v2075
        %2251 = vmatmul.mubr.f32.gmra.mxu0 %v2001
        %v2252 = vpop.f32.mrf.mxu0
        %v2253 = vadd.f32 0.0, %v2252
        %v2254 = vpop.f32.mrf.mxu0
        %2255 = vmatprep.mubr.f32.mxu0 %v2078
        %2256 = vmatmul.mubr.f32.gmra.mxu0 %v2002
        %v2257 = vpop.f32.mrf.mxu0
        %v2258 = vadd.f32 0.0, %v2257
        %v2259 = vpop.f32.mrf.mxu0
        %2260 = vmatprep.mubr.f32.mxu0 %v2081
        %2261 = vmatmul.mubr.f32.gmra.mxu0 %v2003
        %v2262 = vpop.f32.mrf.mxu0
        %v2263 = vadd.f32 0.0, %v2262
        %v2264 = vpop.f32.mrf.mxu0
        %2265 = vmatprep.mubr.f32.mxu0 %v2084
        %2266 = vmatmul.mubr.f32.gmra.mxu0 %v2004
        %v2267 = vpop.f32.mrf.mxu0
        %v2268 = vadd.f32 0.0, %v2267
        %v2269 = vpop.f32.mrf.mxu0
        %2270 = vmatprep.mubr.f32.mxu0 %v2087
        %2271 = vmatmul.mubr.f32.gmra.mxu0 %v2005
        %v2272 = vpop.f32.mrf.mxu0
        %v2273 = vadd.f32 0.0, %v2272
        %v2274 = vpop.f32.mrf.mxu0
        %2275 = vmatprep.mubr.f32.mxu0 %v2090
        %2276 = vmatmul.mubr.f32.gmra.mxu0 %v2006
        %v2277 = vpop.f32.mrf.mxu0
        %v2278 = vadd.f32 0.0, %v2277
        %v2279 = vpop.f32.mrf.mxu0
        %2280 = vmatprep.mubr.f32.mxu0 %v2093
        %2281 = vmatmul.mubr.f32.gmra.mxu0 %v2007
        %v2282 = vpop.f32.mrf.mxu0
        %v2283 = vadd.f32 0.0, %v2282
        %v2284 = vpop.f32.mrf.mxu0
        %2285 = vmatprep.mubr.f32.mxu0 %v2096
        %2286 = vmatmul.mubr.f32.gmra.mxu0 %v2008
        %v2287 = vpop.f32.mrf.mxu0
        %v2288 = vadd.f32 0.0, %v2287
        %v2289 = vpop.f32.mrf.mxu0
        %2290 = vmatprep.mubr.f32.mxu0 %v2099
        %2291 = vmatmul.mubr.f32.gmra.mxu0 %v2009
        %v2292 = vpop.f32.mrf.mxu0
        %v2293 = vadd.f32 0.0, %v2292
        %v2294 = vpop.f32.mrf.mxu0
        %2295 = vmatprep.mubr.f32.mxu0 %v2102
        %2296 = vmatmul.mubr.f32.gmra.mxu0 %v2010
        %v2297 = vpop.f32.mrf.mxu0
        %v2298 = vadd.f32 0.0, %v2297
        %v2299 = vpop.f32.mrf.mxu0
        %2300 = vmatprep.mubr.f32.mxu0 %v2105
        %2301 = vmatmul.mubr.f32.gmra.mxu0 %v2011
        %v2302 = vpop.f32.mrf.mxu0
        %v2303 = vadd.f32 0.0, %v2302
        %v2304 = vpop.f32.mrf.mxu0
        %2305 = vmatprep.mubr.f32.mxu0 %v2108
        %2306 = vmatmul.mubr.f32.gmra.mxu0 %v2012
        %v2307 = vpop.f32.mrf.mxu0
        %v2308 = vadd.f32 0.0, %v2307
        %v2309 = vpop.f32.mrf.mxu0
        %2310 = vmatprep.mubr.f32.mxu0 %v2111
        %2311 = vmatmul.mubr.f32.gmra.mxu0 %v2013
        %v2312 = vpop.f32.mrf.mxu0
        %v2313 = vadd.f32 0.0, %v2312
        %v2314 = vpop.f32.mrf.mxu0
        %2315 = vmatprep.mubr.f32.mxu0 %v2114
        %2316 = vmatmul.mubr.f32.gmra.mxu0 %v2014
        %v2317 = vpop.f32.mrf.mxu0
        %v2318 = vadd.f32 0.0, %v2317
        %v2319 = vpop.f32.mrf.mxu0
        %2320 = vmatprep.mubr.f32.mxu0 %v2117
        %2321 = vmatmul.mubr.f32.gmra.mxu0 %v2015
        %v2322 = vpop.f32.mrf.mxu0
        %v2323 = vadd.f32 0.0, %v2322
        %v2324 = vpop.f32.mrf.mxu0
        %2325 = vmatprep.mubr.f32.mxu0 %v2120
        %2326 = vmatmul.mubr.f32.gmra.mxu0 %v2016
        %v2327 = vpop.f32.mrf.mxu0
        %v2328 = vadd.f32 0.0, %v2327
        %v2329 = vpop.f32.mrf.mxu0
        %2330 = vmatprep.mubr.f32.mxu0 %v2123
        %2331 = vmatmul.mubr.f32.gmra.mxu0 %v2017
        %v2332 = vpop.f32.mrf.mxu0
        %v2333 = vadd.f32 0.0, %v2332
        %v2334 = vpop.f32.mrf.mxu0
        %2335 = vmatprep.mubr.f32.mxu0 %v2126
        %2336 = vmatmul.mubr.f32.gmra.mxu0 %v2018
        %v2337 = vpop.f32.mrf.mxu0
        %v2338 = vadd.f32 0.0, %v2337
        %v2339 = vpop.f32.mrf.mxu0
        %2340 = vmatprep.mubr.f32.mxu0 %v2129
        %2341 = vmatmul.mubr.f32.gmra.mxu0 %v2019
        %v2342 = vpop.f32.mrf.mxu0
        %v2343 = vadd.f32 0.0, %v2342
        %v2344 = vpop.f32.mrf.mxu0
        %2345 = vmatprep.mubr.f32.mxu0 %v2132
        %2346 = vmatmul.mubr.f32.gmra.mxu0 %v2020
        %v2347 = vpop.f32.mrf.mxu0
        %v2348 = vadd.f32 0.0, %v2347
        %v2349 = vpop.f32.mrf.mxu0
        %2350 = vmatprep.mubr.f32.mxu0 %v2135
        %2351 = vmatmul.mubr.f32.gmra.mxu0 %v2021
        %v2352 = vpop.f32.mrf.mxu0
        %v2353 = vadd.f32 0.0, %v2352
        %v2354 = vpop.f32.mrf.mxu0
        %2355 = vmatprep.mubr.f32.mxu0 %v2138
        %2356 = vmatmul.mubr.f32.gmra.mxu0 %v2022
        %v2357 = vpop.f32.mrf.mxu0
        %v2358 = vadd.f32 0.0, %v2357
        %v2359 = vpop.f32.mrf.mxu0
        %2360 = vmatprep.mubr.f32.mxu0 %v2141
        %2361 = vmatmul.mubr.f32.gmra.mxu0 %v2023
        %v2362 = vpop.f32.mrf.mxu0
        %v2363 = vadd.f32 0.0, %v2362
        %v2364 = vpop.f32.mrf.mxu0
        %2365 = vmatprep.mubr.f32.mxu0 %v2144
        %2366 = vmatmul.mubr.f32.gmra.mxu0 %v2024
        %v2367 = vpop.f32.mrf.mxu0
        %v2368 = vadd.f32 0.0, %v2367
        %v2369 = vpop.f32.mrf.mxu0
        %2370 = vdwg.mxu0
        %v2371 = vld [vmem:[#allocation3] sm:$0xff]
        %v2372 = vld [vmem:[#allocation3 + $0x8] sm:$0xff]
        %v2373 = vld [vmem:[#allocation3 + $0x10] sm:$0xff]
        %v2374 = vld [vmem:[#allocation3 + $0x18] sm:$0xff]
        %v2375 = vld [vmem:[#allocation3 + $0x20] sm:$0xff]
        %v2376 = vld [vmem:[#allocation3 + $0x28] sm:$0xff]
        %v2377 = vld [vmem:[#allocation3 + $0x30] sm:$0xff]
        %v2378 = vld [vmem:[#allocation3 + $0x38] sm:$0xff]
        %v2379 = vld [vmem:[#allocation3 + $0x40] sm:$0xff]
        %v2380 = vld [vmem:[#allocation3 + $0x48] sm:$0xff]
        %v2381 = vld [vmem:[#allocation3 + $0x50] sm:$0xff]
        %v2382 = vld [vmem:[#allocation3 + $0x58] sm:$0xff]
        %v2383 = vld [vmem:[#allocation3 + $0x60] sm:$0xff]
        %v2384 = vld [vmem:[#allocation3 + $0x68] sm:$0xff]
        %v2385 = vld [vmem:[#allocation3 + $0x70] sm:$0xff]
        %v2386 = vld [vmem:[#allocation3 + $0x78] sm:$0xff]
        %v2387 = vld [vmem:[#allocation3 + $0x80] sm:$0xff]
        %v2388 = vld [vmem:[#allocation3 + $0x88] sm:$0xff]
        %v2389 = vld [vmem:[#allocation3 + $0x90] sm:$0xff]
        %v2390 = vld [vmem:[#allocation3 + $0x98] sm:$0xff]
        %v2391 = vld [vmem:[#allocation3 + $0xa0] sm:$0xff]
        %v2392 = vld [vmem:[#allocation3 + $0xa8] sm:$0xff]
        %v2393 = vld [vmem:[#allocation3 + $0xb0] sm:$0xff]
        %v2394 = vld [vmem:[#allocation3 + $0xb8] sm:$0xff]
        %v2395 = vld [vmem:[#allocation3 + $0xc0] sm:$0xff]
        %v2396 = vld [vmem:[#allocation3 + $0xc8] sm:$0xff]
        %v2397 = vld [vmem:[#allocation3 + $0xd0] sm:$0xff]
        %v2398 = vld [vmem:[#allocation3 + $0xd8] sm:$0xff]
        %v2399 = vld [vmem:[#allocation3 + $0xe0] sm:$0xff]
        %v2400 = vld [vmem:[#allocation3 + $0xe8] sm:$0xff]
        %v2401 = vld [vmem:[#allocation3 + $0xf0] sm:$0xff]
        %v2402 = vld [vmem:[#allocation3 + $0xf8] sm:$0xff]
        %v2403 = vadd.f32 %v2371, %v2213
        %v2404 = vadd.f32 %v2372, %v2218
        %v2405 = vadd.f32 %v2373, %v2223
        %v2406 = vadd.f32 %v2374, %v2228
        %v2407 = vadd.f32 %v2375, %v2233
        %v2408 = vadd.f32 %v2376, %v2238
        %v2409 = vadd.f32 %v2377, %v2243
        %v2410 = vadd.f32 %v2378, %v2248
        %v2411 = vadd.f32 %v2379, %v2253
        %v2412 = vadd.f32 %v2380, %v2258
        %v2413 = vadd.f32 %v2381, %v2263
        %v2414 = vadd.f32 %v2382, %v2268
        %v2415 = vadd.f32 %v2383, %v2273
        %v2416 = vadd.f32 %v2384, %v2278
        %v2417 = vadd.f32 %v2385, %v2283
        %v2418 = vadd.f32 %v2386, %v2288
        %v2419 = vadd.f32 %v2387, %v2293
        %v2420 = vadd.f32 %v2388, %v2298
        %v2421 = vadd.f32 %v2389, %v2303
        %v2422 = vadd.f32 %v2390, %v2308
        %v2423 = vadd.f32 %v2391, %v2313
        %v2424 = vadd.f32 %v2392, %v2318
        %v2425 = vadd.f32 %v2393, %v2323
        %v2426 = vadd.f32 %v2394, %v2328
        %v2427 = vadd.f32 %v2395, %v2333
        %v2428 = vadd.f32 %v2396, %v2338
        %v2429 = vadd.f32 %v2397, %v2343
        %v2430 = vadd.f32 %v2398, %v2348
        %v2431 = vadd.f32 %v2399, %v2353
        %v2432 = vadd.f32 %v2400, %v2358
        %v2433 = vadd.f32 %v2401, %v2363
        %v2434 = vadd.f32 %v2402, %v2368
        %2435 = vst.msk [vmem:[#allocation3] sm:$0xff] %vm659, %v2403
        %2436 = vst.msk [vmem:[#allocation3 + $0x8] sm:$0xff] %vm659, %v2404
        %2437 = vst.msk [vmem:[#allocation3 + $0x10] sm:$0xff] %vm659, %v2405
        %2438 = vst.msk [vmem:[#allocation3 + $0x18] sm:$0xff] %vm659, %v2406
        %2439 = vst.msk [vmem:[#allocation3 + $0x20] sm:$0xff] %vm659, %v2407
        %2440 = vst.msk [vmem:[#allocation3 + $0x28] sm:$0xff] %vm659, %v2408
        %2441 = vst.msk [vmem:[#allocation3 + $0x30] sm:$0xff] %vm659, %v2409
        %2442 = vst.msk [vmem:[#allocation3 + $0x38] sm:$0xff] %vm659, %v2410
        %2443 = vst.msk [vmem:[#allocation3 + $0x40] sm:$0xff] %vm659, %v2411
        %2444 = vst.msk [vmem:[#allocation3 + $0x48] sm:$0xff] %vm659, %v2412
        %2445 = vst.msk [vmem:[#allocation3 + $0x50] sm:$0xff] %vm659, %v2413
        %2446 = vst.msk [vmem:[#allocation3 + $0x58] sm:$0xff] %vm659, %v2414
        %2447 = vst.msk [vmem:[#allocation3 + $0x60] sm:$0xff] %vm659, %v2415
        %2448 = vst.msk [vmem:[#allocation3 + $0x68] sm:$0xff] %vm659, %v2416
        %2449 = vst.msk [vmem:[#allocation3 + $0x70] sm:$0xff] %vm659, %v2417
        %2450 = vst.msk [vmem:[#allocation3 + $0x78] sm:$0xff] %vm659, %v2418
        %2451 = vst.msk [vmem:[#allocation3 + $0x80] sm:$0xff] %vm659, %v2419
        %2452 = vst.msk [vmem:[#allocation3 + $0x88] sm:$0xff] %vm659, %v2420
        %2453 = vst.msk [vmem:[#allocation3 + $0x90] sm:$0xff] %vm659, %v2421
        %2454 = vst.msk [vmem:[#allocation3 + $0x98] sm:$0xff] %vm659, %v2422
        %2455 = vst.msk [vmem:[#allocation3 + $0xa0] sm:$0xff] %vm659, %v2423
        %2456 = vst.msk [vmem:[#allocation3 + $0xa8] sm:$0xff] %vm659, %v2424
        %2457 = vst.msk [vmem:[#allocation3 + $0xb0] sm:$0xff] %vm659, %v2425
        %2458 = vst.msk [vmem:[#allocation3 + $0xb8] sm:$0xff] %vm659, %v2426
        %2459 = vst.msk [vmem:[#allocation3 + $0xc0] sm:$0xff] %vm659, %v2427
        %2460 = vst.msk [vmem:[#allocation3 + $0xc8] sm:$0xff] %vm659, %v2428
        %2461 = vst.msk [vmem:[#allocation3 + $0xd0] sm:$0xff] %vm659, %v2429
        %2462 = vst.msk [vmem:[#allocation3 + $0xd8] sm:$0xff] %vm659, %v2430
        %2463 = vst.msk [vmem:[#allocation3 + $0xe0] sm:$0xff] %vm659, %v2431
        %2464 = vst.msk [vmem:[#allocation3 + $0xe8] sm:$0xff] %vm659, %v2432
        %2465 = vst.msk [vmem:[#allocation3 + $0xf0] sm:$0xff] %vm659, %v2433
        %2466 = vst.msk [vmem:[#allocation3 + $0xf8] sm:$0xff] %vm659, %v2434
        %v2467 = vld [vmem:[%s306] sm:$0x1]
        %v2468 = vld [vmem:[%s309] sm:$0x1]
        %p2469 = scmp.lt.s32.totalorder %s25, 7
        // Predicated region
        $region49: #{tpu_custom_call.1} parent=43 // pred_check
          %p2470 = pneg %p2469
        $region50: #{tpu_custom_call.1} parent=43 // pred_check_branch
          %2472 = sbr.rel (%p2470) target = $region52
        $region51: #{tpu_custom_call.1} parent=43 // pred_region
          %v2473 = vld [vmem:[#allocation3] sm:$0xff]
          %v2474 = vld [vmem:[#allocation3 + $0x8] sm:$0xff]
          %v2475 = vld [vmem:[#allocation3 + $0x10] sm:$0xff]
          %v2476 = vld [vmem:[#allocation3 + $0x18] sm:$0xff]
          %v2477 = vld [vmem:[#allocation3 + $0x20] sm:$0xff]
          %v2478 = vld [vmem:[#allocation3 + $0x28] sm:$0xff]
          %v2479 = vld [vmem:[#allocation3 + $0x30] sm:$0xff]
          %v2480 = vld [vmem:[#allocation3 + $0x38] sm:$0xff]
          %v2481 = vld [vmem:[#allocation3 + $0x40] sm:$0xff]
          %v2482 = vld [vmem:[#allocation3 + $0x48] sm:$0xff]
          %v2483 = vld [vmem:[#allocation3 + $0x50] sm:$0xff]
          %v2484 = vld [vmem:[#allocation3 + $0x58] sm:$0xff]
          %v2485 = vld [vmem:[#allocation3 + $0x60] sm:$0xff]
          %v2486 = vld [vmem:[#allocation3 + $0x68] sm:$0xff]
          %v2487 = vld [vmem:[#allocation3 + $0x70] sm:$0xff]
          %v2488 = vld [vmem:[#allocation3 + $0x78] sm:$0xff]
          %v2489 = vld [vmem:[#allocation3 + $0x80] sm:$0xff]
          %v2490 = vld [vmem:[#allocation3 + $0x88] sm:$0xff]
          %v2491 = vld [vmem:[#allocation3 + $0x90] sm:$0xff]
          %v2492 = vld [vmem:[#allocation3 + $0x98] sm:$0xff]
          %v2493 = vld [vmem:[#allocation3 + $0xa0] sm:$0xff]
          %v2494 = vld [vmem:[#allocation3 + $0xa8] sm:$0xff]
          %v2495 = vld [vmem:[#allocation3 + $0xb0] sm:$0xff]
          %v2496 = vld [vmem:[#allocation3 + $0xb8] sm:$0xff]
          %v2497 = vld [vmem:[#allocation3 + $0xc0] sm:$0xff]
          %v2498 = vld [vmem:[#allocation3 + $0xc8] sm:$0xff]
          %v2499 = vld [vmem:[#allocation3 + $0xd0] sm:$0xff]
          %v2500 = vld [vmem:[#allocation3 + $0xd8] sm:$0xff]
          %v2501 = vld [vmem:[#allocation3 + $0xe0] sm:$0xff]
          %v2502 = vld [vmem:[#allocation3 + $0xe8] sm:$0xff]
          %v2503 = vld [vmem:[#allocation3 + $0xf0] sm:$0xff]
          %v2504 = vld [vmem:[#allocation3 + $0xf8] sm:$0xff]
          %v2505 = vld [vmem:[%s4] sm:$0xff]
          %v2506 = vld [vmem:[%s4 + $0x8] sm:$0xff]
          %v2507 = vld [vmem:[%s4 + $0x10] sm:$0xff]
          %v2508 = vld [vmem:[%s4 + $0x18] sm:$0xff]
          %v2509 = vld [vmem:[%s4 + $0x20] sm:$0xff]
          %v2510 = vld [vmem:[%s4 + $0x28] sm:$0xff]
          %v2511 = vld [vmem:[%s4 + $0x30] sm:$0xff]
          %v2512 = vld [vmem:[%s4 + $0x38] sm:$0xff]
          %v2513 = vld [vmem:[%s5] sm:$0xff]
          %v2514 = vld [vmem:[%s5 + $0x8] sm:$0xff]
          %v2515 = vld [vmem:[%s5 + $0x10] sm:$0xff]
          %v2516 = vld [vmem:[%s5 + $0x18] sm:$0xff]
          %v2518 = vsel %vm659, %v2473, 0
          %v2521 = vsel %vm659, %v2474, 0
          %v2524 = vsel %vm659, %v2475, 0
          %v2527 = vsel %vm659, %v2476, 0
          %v2530 = vsel %vm659, %v2477, 0
          %v2533 = vsel %vm659, %v2478, 0
          %v2536 = vsel %vm659, %v2479, 0
          %v2539 = vsel %vm659, %v2480, 0
          %v2542 = vsel %vm659, %v2481, 0
          %v2545 = vsel %vm659, %v2482, 0
          %v2548 = vsel %vm659, %v2483, 0
          %v2551 = vsel %vm659, %v2484, 0
          %v2554 = vsel %vm659, %v2485, 0
          %v2557 = vsel %vm659, %v2486, 0
          %v2560 = vsel %vm659, %v2487, 0
          %v2563 = vsel %vm659, %v2488, 0
          %v2566 = vsel %vm659, %v2489, 0
          %v2569 = vsel %vm659, %v2490, 0
          %v2572 = vsel %vm659, %v2491, 0
          %v2575 = vsel %vm659, %v2492, 0
          %v2578 = vsel %vm659, %v2493, 0
          %v2581 = vsel %vm659, %v2494, 0
          %v2584 = vsel %vm659, %v2495, 0
          %v2587 = vsel %vm659, %v2496, 0
          %v2590 = vsel %vm659, %v2497, 0
          %v2593 = vsel %vm659, %v2498, 0
          %v2596 = vsel %vm659, %v2499, 0
          %v2599 = vsel %vm659, %v2500, 0
          %v2602 = vsel %vm659, %v2501, 0
          %v2605 = vsel %vm659, %v2502, 0
          %v2608 = vsel %vm659, %v2503, 0
          %v2611 = vsel %vm659, %v2504, 0
          %2613 = vmatprep.subr.mxu0 0.0
          %2614 = vmatpush1.msra.mxu0 0.0
          %2615 = vmatprep.subr.mxu0 0.0
          %2616 = vmatpush1.msra.mxu0 0.0
          %2617 = vmatprep.subr.mxu0 0.0
          %2618 = vmatpush1.msra.mxu0 0.0
          %2619 = vmatprep.subr.mxu0 0.0
          %2620 = vmatpush1.msra.mxu0 0.0
          %2621 = vmatprep.subr.mxu0 0.0
          %2622 = vmatpush1.msra.mxu0 0.0
          %2623 = vmatprep.subr.mxu0 0.0
          %2624 = vmatpush1.msra.mxu0 0.0
          %2625 = vmatprep.subr.mxu0 0.0
          %2626 = vmatpush1.msra.mxu0 0.0
          %2627 = vmatprep.subr.mxu0 0.0
          %2628 = vmatpush1.msra.mxu0 0.0
          %2629 = vmatprep.subr.mxu0 0.0
          %2630 = vmatpush1.msra.mxu0 %v2512
          %2631 = vmatprep.subr.mxu0 0.0
          %2632 = vmatpush1.msra.mxu0 %v2511
          %2633 = vmatprep.subr.mxu0 0.0
          %2634 = vmatpush1.msra.mxu0 %v2510
          %2635 = vmatprep.subr.mxu0 0.0
          %2636 = vmatpush1.msra.mxu0 %v2509
          %2637 = vmatprep.subr.mxu0 0.0
          %2638 = vmatpush1.msra.mxu0 %v2508
          %2639 = vmatprep.subr.mxu0 0.0
          %2640 = vmatpush1.msra.mxu0 %v2507
          %2641 = vmatprep.subr.mxu0 0.0
          %2642 = vmatpush1.msra.mxu0 %v2506
          %2643 = vmatprep.subr.mxu0 0.0
          %2644 = vmatpush1.msra.mxu0 %v2505
          %2645 = vmatprep.subr.mxu0 0.0
          %2646 = vmatpush2.msra.mxu0 0.0
          %2647 = vmatprep.subr.mxu0 0.0
          %2648 = vmatpush2.msra.mxu0 0.0
          %2649 = vmatprep.subr.mxu0 0.0
          %2650 = vmatpush2.msra.mxu0 0.0
          %2651 = vmatprep.subr.mxu0 0.0
          %2652 = vmatpush2.msra.mxu0 0.0
          %2653 = vmatprep.subr.mxu0 0.0
          %2654 = vmatpush2.msra.mxu0 0.0
          %2655 = vmatprep.subr.mxu0 0.0
          %2656 = vmatpush2.msra.mxu0 0.0
          %2657 = vmatprep.subr.mxu0 0.0
          %2658 = vmatpush2.msra.mxu0 0.0
          %2659 = vmatprep.subr.mxu0 0.0
          %2660 = vmatpush2.msra.mxu0 0.0
          %2661 = vmatprep.subr.mxu0 0.0
          %2662 = vmatpush2.msra.mxu0 0.0
          %2663 = vmatprep.subr.mxu0 0.0
          %2664 = vmatpush2.msra.mxu0 0.0
          %2665 = vmatprep.subr.mxu0 0.0
          %2666 = vmatpush2.msra.mxu0 0.0
          %2667 = vmatprep.subr.mxu0 0.0
          %2668 = vmatpush2.msra.mxu0 0.0
          %2669 = vmatprep.subr.mxu0 0.0
          %2670 = vmatpush2.msra.mxu0 0.0
          %2671 = vmatprep.subr.mxu0 0.0
          %2672 = vmatpush2.msra.mxu0 0.0
          %2673 = vmatprep.subr.mxu0 0.0
          %2674 = vmatpush2.msra.mxu0 0.0
          %2675 = vmatprep.subr.mxu0 0.0
          %2676 = vmatpush2.msra.mxu0 0.0
          %2677 = vmatprep.mubr.f32.mxu0 0.0
          %2678 = vmatmul.mubr.f32.gmra.mxu0 %v2518
          %v2679 = vpop.f32.mrf.mxu0
          %v2680 = vadd.f32 0.0, %v2679
          %v2681 = vpop.f32.mrf.mxu0
          %2682 = vmatprep.mubr.f32.mxu0 0.0
          %2683 = vmatmul.mubr.f32.gmra.mxu0 %v2521
          %v2684 = vpop.f32.mrf.mxu0
          %v2685 = vadd.f32 0.0, %v2684
          %v2686 = vpop.f32.mrf.mxu0
          %2687 = vmatprep.mubr.f32.mxu0 0.0
          %2688 = vmatmul.mubr.f32.gmra.mxu0 %v2524
          %v2689 = vpop.f32.mrf.mxu0
          %v2690 = vadd.f32 0.0, %v2689
          %v2691 = vpop.f32.mrf.mxu0
          %2692 = vmatprep.mubr.f32.mxu0 0.0
          %2693 = vmatmul.mubr.f32.gmra.mxu0 %v2527
          %v2694 = vpop.f32.mrf.mxu0
          %v2695 = vadd.f32 0.0, %v2694
          %v2696 = vpop.f32.mrf.mxu0
          %2697 = vmatprep.mubr.f32.mxu0 0.0
          %2698 = vmatmul.mubr.f32.gmra.mxu0 %v2530
          %v2699 = vpop.f32.mrf.mxu0
          %v2700 = vadd.f32 0.0, %v2699
          %v2701 = vpop.f32.mrf.mxu0
          %2702 = vmatprep.mubr.f32.mxu0 0.0
          %2703 = vmatmul.mubr.f32.gmra.mxu0 %v2533
          %v2704 = vpop.f32.mrf.mxu0
          %v2705 = vadd.f32 0.0, %v2704
          %v2706 = vpop.f32.mrf.mxu0
          %2707 = vmatprep.mubr.f32.mxu0 0.0
          %2708 = vmatmul.mubr.f32.gmra.mxu0 %v2536
          %v2709 = vpop.f32.mrf.mxu0
          %v2710 = vadd.f32 0.0, %v2709
          %v2711 = vpop.f32.mrf.mxu0
          %2712 = vmatprep.mubr.f32.mxu0 0.0
          %2713 = vmatmul.mubr.f32.gmra.mxu0 %v2539
          %v2714 = vpop.f32.mrf.mxu0
          %v2715 = vadd.f32 0.0, %v2714
          %v2716 = vpop.f32.mrf.mxu0
          %2717 = vmatprep.mubr.f32.mxu0 0.0
          %2718 = vmatmul.mubr.f32.gmra.mxu0 %v2542
          %v2719 = vpop.f32.mrf.mxu0
          %v2720 = vadd.f32 0.0, %v2719
          %v2721 = vpop.f32.mrf.mxu0
          %2722 = vmatprep.mubr.f32.mxu0 0.0
          %2723 = vmatmul.mubr.f32.gmra.mxu0 %v2545
          %v2724 = vpop.f32.mrf.mxu0
          %v2725 = vadd.f32 0.0, %v2724
          %v2726 = vpop.f32.mrf.mxu0
          %2727 = vmatprep.mubr.f32.mxu0 0.0
          %2728 = vmatmul.mubr.f32.gmra.mxu0 %v2548
          %v2729 = vpop.f32.mrf.mxu0
          %v2730 = vadd.f32 0.0, %v2729
          %v2731 = vpop.f32.mrf.mxu0
          %2732 = vmatprep.mubr.f32.mxu0 0.0
          %2733 = vmatmul.mubr.f32.gmra.mxu0 %v2551
          %v2734 = vpop.f32.mrf.mxu0
          %v2735 = vadd.f32 0.0, %v2734
          %v2736 = vpop.f32.mrf.mxu0
          %2737 = vmatprep.mubr.f32.mxu0 0.0
          %2738 = vmatmul.mubr.f32.gmra.mxu0 %v2554
          %v2739 = vpop.f32.mrf.mxu0
          %v2740 = vadd.f32 0.0, %v2739
          %v2741 = vpop.f32.mrf.mxu0
          %2742 = vmatprep.mubr.f32.mxu0 0.0
          %2743 = vmatmul.mubr.f32.gmra.mxu0 %v2557
          %v2744 = vpop.f32.mrf.mxu0
          %v2745 = vadd.f32 0.0, %v2744
          %v2746 = vpop.f32.mrf.mxu0
          %2747 = vmatprep.mubr.f32.mxu0 0.0
          %2748 = vmatmul.mubr.f32.gmra.mxu0 %v2560
          %v2749 = vpop.f32.mrf.mxu0
          %v2750 = vadd.f32 0.0, %v2749
          %v2751 = vpop.f32.mrf.mxu0
          %2752 = vmatprep.mubr.f32.mxu0 0.0
          %2753 = vmatmul.mubr.f32.gmra.mxu0 %v2563
          %v2754 = vpop.f32.mrf.mxu0
          %v2755 = vadd.f32 0.0, %v2754
          %v2756 = vpop.f32.mrf.mxu0
          %2757 = vmatprep.mubr.f32.mxu0 0.0
          %2758 = vmatmul.mubr.f32.gmra.mxu0 %v2566
          %v2759 = vpop.f32.mrf.mxu0
          %v2760 = vadd.f32 0.0, %v2759
          %v2761 = vpop.f32.mrf.mxu0
          %2762 = vmatprep.mubr.f32.mxu0 0.0
          %2763 = vmatmul.mubr.f32.gmra.mxu0 %v2569
          %v2764 = vpop.f32.mrf.mxu0
          %v2765 = vadd.f32 0.0, %v2764
          %v2766 = vpop.f32.mrf.mxu0
          %2767 = vmatprep.mubr.f32.mxu0 0.0
          %2768 = vmatmul.mubr.f32.gmra.mxu0 %v2572
          %v2769 = vpop.f32.mrf.mxu0
          %v2770 = vadd.f32 0.0, %v2769
          %v2771 = vpop.f32.mrf.mxu0
          %2772 = vmatprep.mubr.f32.mxu0 0.0
          %2773 = vmatmul.mubr.f32.gmra.mxu0 %v2575
          %v2774 = vpop.f32.mrf.mxu0
          %v2775 = vadd.f32 0.0, %v2774
          %v2776 = vpop.f32.mrf.mxu0
          %2777 = vmatprep.mubr.f32.mxu0 0.0
          %2778 = vmatmul.mubr.f32.gmra.mxu0 %v2578
          %v2779 = vpop.f32.mrf.mxu0
          %v2780 = vadd.f32 0.0, %v2779
          %v2781 = vpop.f32.mrf.mxu0
          %2782 = vmatprep.mubr.f32.mxu0 0.0
          %2783 = vmatmul.mubr.f32.gmra.mxu0 %v2581
          %v2784 = vpop.f32.mrf.mxu0
          %v2785 = vadd.f32 0.0, %v2784
          %v2786 = vpop.f32.mrf.mxu0
          %2787 = vmatprep.mubr.f32.mxu0 0.0
          %2788 = vmatmul.mubr.f32.gmra.mxu0 %v2584
          %v2789 = vpop.f32.mrf.mxu0
          %v2790 = vadd.f32 0.0, %v2789
          %v2791 = vpop.f32.mrf.mxu0
          %2792 = vmatprep.mubr.f32.mxu0 0.0
          %2793 = vmatmul.mubr.f32.gmra.mxu0 %v2587
          %v2794 = vpop.f32.mrf.mxu0
          %v2795 = vadd.f32 0.0, %v2794
          %v2796 = vpop.f32.mrf.mxu0
          %2797 = vmatprep.mubr.f32.mxu0 0.0
          %2798 = vmatmul.mubr.f32.gmra.mxu0 %v2590
          %v2799 = vpop.f32.mrf.mxu0
          %v2800 = vadd.f32 0.0, %v2799
          %v2801 = vpop.f32.mrf.mxu0
          %2802 = vmatprep.mubr.f32.mxu0 0.0
          %2803 = vmatmul.mubr.f32.gmra.mxu0 %v2593
          %v2804 = vpop.f32.mrf.mxu0
          %v2805 = vadd.f32 0.0, %v2804
          %v2806 = vpop.f32.mrf.mxu0
          %2807 = vmatprep.mubr.f32.mxu0 0.0
          %2808 = vmatmul.mubr.f32.gmra.mxu0 %v2596
          %v2809 = vpop.f32.mrf.mxu0
          %v2810 = vadd.f32 0.0, %v2809
          %v2811 = vpop.f32.mrf.mxu0
          %2812 = vmatprep.mubr.f32.mxu0 0.0
          %2813 = vmatmul.mubr.f32.gmra.mxu0 %v2599
          %v2814 = vpop.f32.mrf.mxu0
          %v2815 = vadd.f32 0.0, %v2814
          %v2816 = vpop.f32.mrf.mxu0
          %2817 = vmatprep.mubr.f32.mxu0 0.0
          %2818 = vmatmul.mubr.f32.gmra.mxu0 %v2602
          %v2819 = vpop.f32.mrf.mxu0
          %v2820 = vadd.f32 0.0, %v2819
          %v2821 = vpop.f32.mrf.mxu0
          %2822 = vmatprep.mubr.f32.mxu0 0.0
          %2823 = vmatmul.mubr.f32.gmra.mxu0 %v2605
          %v2824 = vpop.f32.mrf.mxu0
          %v2825 = vadd.f32 0.0, %v2824
          %v2826 = vpop.f32.mrf.mxu0
          %2827 = vmatprep.mubr.f32.mxu0 0.0
          %2828 = vmatmul.mubr.f32.gmra.mxu0 %v2608
          %v2829 = vpop.f32.mrf.mxu0
          %v2830 = vadd.f32 0.0, %v2829
          %v2831 = vpop.f32.mrf.mxu0
          %2832 = vmatprep.mubr.f32.mxu0 0.0
          %2833 = vmatmul.mubr.f32.gmra.mxu0 %v2611
          %v2834 = vpop.f32.mrf.mxu0
          %v2835 = vadd.f32 0.0, %v2834
          %v2836 = vpop.f32.mrf.mxu0
          %2837 = vdwg.mxu0
          %vm2838 = vcmask 261120
          %v2839 = vsel %vm2838, %v2680, 0.0
          %v2840 = vsel %vm2838, %v2685, 0.0
          %v2841 = vadd.f32 %v2839, %v2840
          %v2842 = vsel %vm2838, %v2690, 0.0
          %v2843 = vadd.f32 %v2841, %v2842
          %v2844 = vsel %vm2838, %v2695, 0.0
          %v2845 = vadd.f32 %v2843, %v2844
          %v2846 = vsel %vm2838, %v2700, 0.0
          %v2847 = vadd.f32 %v2845, %v2846
          %v2848 = vsel %vm2838, %v2705, 0.0
          %v2849 = vadd.f32 %v2847, %v2848
          %v2850 = vsel %vm2838, %v2710, 0.0
          %v2851 = vadd.f32 %v2849, %v2850
          %v2852 = vsel %vm2838, %v2715, 0.0
          %v2853 = vadd.f32 %v2851, %v2852
          %v2854 = vsel %vm2838, %v2720, 0.0
          %v2855 = vadd.f32 %v2853, %v2854
          %v2856 = vsel %vm2838, %v2725, 0.0
          %v2857 = vadd.f32 %v2855, %v2856
          %v2858 = vsel %vm2838, %v2730, 0.0
          %v2859 = vadd.f32 %v2857, %v2858
          %v2860 = vsel %vm2838, %v2735, 0.0
          %v2861 = vadd.f32 %v2859, %v2860
          %v2862 = vsel %vm2838, %v2740, 0.0
          %v2863 = vadd.f32 %v2861, %v2862
          %v2864 = vsel %vm2838, %v2745, 0.0
          %v2865 = vadd.f32 %v2863, %v2864
          %v2866 = vsel %vm2838, %v2750, 0.0
          %v2867 = vadd.f32 %v2865, %v2866
          %v2868 = vsel %vm2838, %v2755, 0.0
          %v2869 = vadd.f32 %v2867, %v2868
          %v2870 = vsel %vm2838, %v2760, 0.0
          %v2871 = vadd.f32 %v2869, %v2870
          %v2872 = vsel %vm2838, %v2765, 0.0
          %v2873 = vadd.f32 %v2871, %v2872
          %v2874 = vsel %vm2838, %v2770, 0.0
          %v2875 = vadd.f32 %v2873, %v2874
          %v2876 = vsel %vm2838, %v2775, 0.0
          %v2877 = vadd.f32 %v2875, %v2876
          %v2878 = vsel %vm2838, %v2780, 0.0
          %v2879 = vadd.f32 %v2877, %v2878
          %v2880 = vsel %vm2838, %v2785, 0.0
          %v2881 = vadd.f32 %v2879, %v2880
          %v2882 = vsel %vm2838, %v2790, 0.0
          %v2883 = vadd.f32 %v2881, %v2882
          %v2884 = vsel %vm2838, %v2795, 0.0
          %v2885 = vadd.f32 %v2883, %v2884
          %v2886 = vsel %vm2838, %v2800, 0.0
          %v2887 = vadd.f32 %v2885, %v2886
          %v2888 = vsel %vm2838, %v2805, 0.0
          %v2889 = vadd.f32 %v2887, %v2888
          %v2890 = vsel %vm2838, %v2810, 0.0
          %v2891 = vadd.f32 %v2889, %v2890
          %v2892 = vsel %vm2838, %v2815, 0.0
          %v2893 = vadd.f32 %v2891, %v2892
          %v2894 = vsel %vm2838, %v2820, 0.0
          %v2895 = vadd.f32 %v2893, %v2894
          %v2896 = vsel %vm2838, %v2825, 0.0
          %v2897 = vadd.f32 %v2895, %v2896
          %v2898 = vsel %vm2838, %v2830, 0.0
          %v2899 = vadd.f32 %v2897, %v2898
          %v2900 = vsel %vm2838, %v2835, 0.0
          %v2901 = vadd.f32 %v2899, %v2900
          %v2902 = vrot.slane %v2901, 4
          %v2903 = vadd.f32 %v2901, %v2902
          %v2904 = vrot.slane %v2903, 2
          %v2905 = vadd.f32 %v2903, %v2904
          %v2906 = vrot.slane %v2905, 1
          %v2907 = vadd.f32 %v2905, %v2906
          %v2908 = vmul.f32 %v2473, %v2473
          %v2909 = vmul.f32 %v2474, %v2474
          %v2910 = vmul.f32 %v2475, %v2475
          %v2911 = vmul.f32 %v2476, %v2476
          %v2912 = vmul.f32 %v2477, %v2477
          %v2913 = vmul.f32 %v2478, %v2478
          %v2914 = vmul.f32 %v2479, %v2479
          %v2915 = vmul.f32 %v2480, %v2480
          %v2916 = vmul.f32 %v2481, %v2481
          %v2917 = vmul.f32 %v2482, %v2482
          %v2918 = vmul.f32 %v2483, %v2483
          %v2919 = vmul.f32 %v2484, %v2484
          %v2920 = vmul.f32 %v2485, %v2485
          %v2921 = vmul.f32 %v2486, %v2486
          %v2922 = vmul.f32 %v2487, %v2487
          %v2923 = vmul.f32 %v2488, %v2488
          %v2924 = vmul.f32 %v2489, %v2489
          %v2925 = vmul.f32 %v2490, %v2490
          %v2926 = vmul.f32 %v2491, %v2491
          %v2927 = vmul.f32 %v2492, %v2492
          %v2928 = vmul.f32 %v2493, %v2493
          %v2929 = vmul.f32 %v2494, %v2494
          %v2930 = vmul.f32 %v2495, %v2495
          %v2931 = vmul.f32 %v2496, %v2496
          %v2932 = vmul.f32 %v2497, %v2497
          %v2933 = vmul.f32 %v2498, %v2498
          %v2934 = vmul.f32 %v2499, %v2499
          %v2935 = vmul.f32 %v2500, %v2500
          %v2936 = vmul.f32 %v2501, %v2501
          %v2937 = vmul.f32 %v2502, %v2502
          %v2938 = vmul.f32 %v2503, %v2503
          %v2939 = vmul.f32 %v2504, %v2504
          %v2941 = vsel %vm659, %v2908, 0
          %v2944 = vsel %vm659, %v2909, 0
          %v2947 = vsel %vm659, %v2910, 0
          %v2950 = vsel %vm659, %v2911, 0
          %v2953 = vsel %vm659, %v2912, 0
          %v2956 = vsel %vm659, %v2913, 0
          %v2959 = vsel %vm659, %v2914, 0
          %v2962 = vsel %vm659, %v2915, 0
          %v2965 = vsel %vm659, %v2916, 0
          %v2968 = vsel %vm659, %v2917, 0
          %v2971 = vsel %vm659, %v2918, 0
          %v2974 = vsel %vm659, %v2919, 0
          %v2977 = vsel %vm659, %v2920, 0
          %v2980 = vsel %vm659, %v2921, 0
          %v2983 = vsel %vm659, %v2922, 0
          %v2986 = vsel %vm659, %v2923, 0
          %v2989 = vsel %vm659, %v2924, 0
          %v2992 = vsel %vm659, %v2925, 0
          %v2995 = vsel %vm659, %v2926, 0
          %v2998 = vsel %vm659, %v2927, 0
          %v3001 = vsel %vm659, %v2928, 0
          %v3004 = vsel %vm659, %v2929, 0
          %v3007 = vsel %vm659, %v2930, 0
          %v3010 = vsel %vm659, %v2931, 0
          %v3013 = vsel %vm659, %v2932, 0
          %v3016 = vsel %vm659, %v2933, 0
          %v3019 = vsel %vm659, %v2934, 0
          %v3022 = vsel %vm659, %v2935, 0
          %v3025 = vsel %vm659, %v2936, 0
          %v3028 = vsel %vm659, %v2937, 0
          %v3031 = vsel %vm659, %v2938, 0
          %v3034 = vsel %vm659, %v2939, 0
          %3036 = vmatprep.subr.mxu0 0.0
          %3037 = vmatpush1.msra.mxu0 0.0
          %3038 = vmatprep.subr.mxu0 0.0
          %3039 = vmatpush1.msra.mxu0 0.0
          %3040 = vmatprep.subr.mxu0 0.0
          %3041 = vmatpush1.msra.mxu0 0.0
          %3042 = vmatprep.subr.mxu0 0.0
          %3043 = vmatpush1.msra.mxu0 0.0
          %3044 = vmatprep.subr.mxu0 0.0
          %3045 = vmatpush1.msra.mxu0 0.0
          %3046 = vmatprep.subr.mxu0 0.0
          %3047 = vmatpush1.msra.mxu0 0.0
          %3048 = vmatprep.subr.mxu0 0.0
          %3049 = vmatpush1.msra.mxu0 0.0
          %3050 = vmatprep.subr.mxu0 0.0
          %3051 = vmatpush1.msra.mxu0 0.0
          %3052 = vmatprep.subr.mxu0 0.0
          %3053 = vmatpush1.msra.mxu0 %v2512
          %3054 = vmatprep.subr.mxu0 0.0
          %3055 = vmatpush1.msra.mxu0 %v2511
          %3056 = vmatprep.subr.mxu0 0.0
          %3057 = vmatpush1.msra.mxu0 %v2510
          %3058 = vmatprep.subr.mxu0 0.0
          %3059 = vmatpush1.msra.mxu0 %v2509
          %3060 = vmatprep.subr.mxu0 0.0
          %3061 = vmatpush1.msra.mxu0 %v2508
          %3062 = vmatprep.subr.mxu0 0.0
          %3063 = vmatpush1.msra.mxu0 %v2507
          %3064 = vmatprep.subr.mxu0 0.0
          %3065 = vmatpush1.msra.mxu0 %v2506
          %3066 = vmatprep.subr.mxu0 0.0
          %3067 = vmatpush1.msra.mxu0 %v2505
          %3068 = vmatprep.subr.mxu0 0.0
          %3069 = vmatpush2.msra.mxu0 0.0
          %3070 = vmatprep.subr.mxu0 0.0
          %3071 = vmatpush2.msra.mxu0 0.0
          %3072 = vmatprep.subr.mxu0 0.0
          %3073 = vmatpush2.msra.mxu0 0.0
          %3074 = vmatprep.subr.mxu0 0.0
          %3075 = vmatpush2.msra.mxu0 0.0
          %3076 = vmatprep.subr.mxu0 0.0
          %3077 = vmatpush2.msra.mxu0 0.0
          %3078 = vmatprep.subr.mxu0 0.0
          %3079 = vmatpush2.msra.mxu0 0.0
          %3080 = vmatprep.subr.mxu0 0.0
          %3081 = vmatpush2.msra.mxu0 0.0
          %3082 = vmatprep.subr.mxu0 0.0
          %3083 = vmatpush2.msra.mxu0 0.0
          %3084 = vmatprep.subr.mxu0 0.0
          %3085 = vmatpush2.msra.mxu0 0.0
          %3086 = vmatprep.subr.mxu0 0.0
          %3087 = vmatpush2.msra.mxu0 0.0
          %3088 = vmatprep.subr.mxu0 0.0
          %3089 = vmatpush2.msra.mxu0 0.0
          %3090 = vmatprep.subr.mxu0 0.0
          %3091 = vmatpush2.msra.mxu0 0.0
          %3092 = vmatprep.subr.mxu0 0.0
          %3093 = vmatpush2.msra.mxu0 0.0
          %3094 = vmatprep.subr.mxu0 0.0
          %3095 = vmatpush2.msra.mxu0 0.0
          %3096 = vmatprep.subr.mxu0 0.0
          %3097 = vmatpush2.msra.mxu0 0.0
          %3098 = vmatprep.subr.mxu0 0.0
          %3099 = vmatpush2.msra.mxu0 0.0
          %3100 = vmatprep.mubr.f32.mxu0 0.0
          %3101 = vmatmul.mubr.f32.gmra.mxu0 %v2941
          %v3102 = vpop.f32.mrf.mxu0
          %v3103 = vadd.f32 0.0, %v3102
          %v3104 = vpop.f32.mrf.mxu0
          %3105 = vmatprep.mubr.f32.mxu0 0.0
          %3106 = vmatmul.mubr.f32.gmra.mxu0 %v2944
          %v3107 = vpop.f32.mrf.mxu0
          %v3108 = vadd.f32 0.0, %v3107
          %v3109 = vpop.f32.mrf.mxu0
          %3110 = vmatprep.mubr.f32.mxu0 0.0
          %3111 = vmatmul.mubr.f32.gmra.mxu0 %v2947
          %v3112 = vpop.f32.mrf.mxu0
          %v3113 = vadd.f32 0.0, %v3112
          %v3114 = vpop.f32.mrf.mxu0
          %3115 = vmatprep.mubr.f32.mxu0 0.0
          %3116 = vmatmul.mubr.f32.gmra.mxu0 %v2950
          %v3117 = vpop.f32.mrf.mxu0
          %v3118 = vadd.f32 0.0, %v3117
          %v3119 = vpop.f32.mrf.mxu0
          %3120 = vmatprep.mubr.f32.mxu0 0.0
          %3121 = vmatmul.mubr.f32.gmra.mxu0 %v2953
          %v3122 = vpop.f32.mrf.mxu0
          %v3123 = vadd.f32 0.0, %v3122
          %v3124 = vpop.f32.mrf.mxu0
          %3125 = vmatprep.mubr.f32.mxu0 0.0
          %3126 = vmatmul.mubr.f32.gmra.mxu0 %v2956
          %v3127 = vpop.f32.mrf.mxu0
          %v3128 = vadd.f32 0.0, %v3127
          %v3129 = vpop.f32.mrf.mxu0
          %3130 = vmatprep.mubr.f32.mxu0 0.0
          %3131 = vmatmul.mubr.f32.gmra.mxu0 %v2959
          %v3132 = vpop.f32.mrf.mxu0
          %v3133 = vadd.f32 0.0, %v3132
          %v3134 = vpop.f32.mrf.mxu0
          %3135 = vmatprep.mubr.f32.mxu0 0.0
          %3136 = vmatmul.mubr.f32.gmra.mxu0 %v2962
          %v3137 = vpop.f32.mrf.mxu0
          %v3138 = vadd.f32 0.0, %v3137
          %v3139 = vpop.f32.mrf.mxu0
          %3140 = vmatprep.mubr.f32.mxu0 0.0
          %3141 = vmatmul.mubr.f32.gmra.mxu0 %v2965
          %v3142 = vpop.f32.mrf.mxu0
          %v3143 = vadd.f32 0.0, %v3142
          %v3144 = vpop.f32.mrf.mxu0
          %3145 = vmatprep.mubr.f32.mxu0 0.0
          %3146 = vmatmul.mubr.f32.gmra.mxu0 %v2968
          %v3147 = vpop.f32.mrf.mxu0
          %v3148 = vadd.f32 0.0, %v3147
          %v3149 = vpop.f32.mrf.mxu0
          %3150 = vmatprep.mubr.f32.mxu0 0.0
          %3151 = vmatmul.mubr.f32.gmra.mxu0 %v2971
          %v3152 = vpop.f32.mrf.mxu0
          %v3153 = vadd.f32 0.0, %v3152
          %v3154 = vpop.f32.mrf.mxu0
          %3155 = vmatprep.mubr.f32.mxu0 0.0
          %3156 = vmatmul.mubr.f32.gmra.mxu0 %v2974
          %v3157 = vpop.f32.mrf.mxu0
          %v3158 = vadd.f32 0.0, %v3157
          %v3159 = vpop.f32.mrf.mxu0
          %3160 = vmatprep.mubr.f32.mxu0 0.0
          %3161 = vmatmul.mubr.f32.gmra.mxu0 %v2977
          %v3162 = vpop.f32.mrf.mxu0
          %v3163 = vadd.f32 0.0, %v3162
          %v3164 = vpop.f32.mrf.mxu0
          %3165 = vmatprep.mubr.f32.mxu0 0.0
          %3166 = vmatmul.mubr.f32.gmra.mxu0 %v2980
          %v3167 = vpop.f32.mrf.mxu0
          %v3168 = vadd.f32 0.0, %v3167
          %v3169 = vpop.f32.mrf.mxu0
          %3170 = vmatprep.mubr.f32.mxu0 0.0
          %3171 = vmatmul.mubr.f32.gmra.mxu0 %v2983
          %v3172 = vpop.f32.mrf.mxu0
          %v3173 = vadd.f32 0.0, %v3172
          %v3174 = vpop.f32.mrf.mxu0
          %3175 = vmatprep.mubr.f32.mxu0 0.0
          %3176 = vmatmul.mubr.f32.gmra.mxu0 %v2986
          %v3177 = vpop.f32.mrf.mxu0
          %v3178 = vadd.f32 0.0, %v3177
          %v3179 = vpop.f32.mrf.mxu0
          %3180 = vmatprep.mubr.f32.mxu0 0.0
          %3181 = vmatmul.mubr.f32.gmra.mxu0 %v2989
          %v3182 = vpop.f32.mrf.mxu0
          %v3183 = vadd.f32 0.0, %v3182
          %v3184 = vpop.f32.mrf.mxu0
          %3185 = vmatprep.mubr.f32.mxu0 0.0
          %3186 = vmatmul.mubr.f32.gmra.mxu0 %v2992
          %v3187 = vpop.f32.mrf.mxu0
          %v3188 = vadd.f32 0.0, %v3187
          %v3189 = vpop.f32.mrf.mxu0
          %3190 = vmatprep.mubr.f32.mxu0 0.0
          %3191 = vmatmul.mubr.f32.gmra.mxu0 %v2995
          %v3192 = vpop.f32.mrf.mxu0
          %v3193 = vadd.f32 0.0, %v3192
          %v3194 = vpop.f32.mrf.mxu0
          %3195 = vmatprep.mubr.f32.mxu0 0.0
          %3196 = vmatmul.mubr.f32.gmra.mxu0 %v2998
          %v3197 = vpop.f32.mrf.mxu0
          %v3198 = vadd.f32 0.0, %v3197
          %v3199 = vpop.f32.mrf.mxu0
          %3200 = vmatprep.mubr.f32.mxu0 0.0
          %3201 = vmatmul.mubr.f32.gmra.mxu0 %v3001
          %v3202 = vpop.f32.mrf.mxu0
          %v3203 = vadd.f32 0.0, %v3202
          %v3204 = vpop.f32.mrf.mxu0
          %3205 = vmatprep.mubr.f32.mxu0 0.0
          %3206 = vmatmul.mubr.f32.gmra.mxu0 %v3004
          %v3207 = vpop.f32.mrf.mxu0
          %v3208 = vadd.f32 0.0, %v3207
          %v3209 = vpop.f32.mrf.mxu0
          %3210 = vmatprep.mubr.f32.mxu0 0.0
          %3211 = vmatmul.mubr.f32.gmra.mxu0 %v3007
          %v3212 = vpop.f32.mrf.mxu0
          %v3213 = vadd.f32 0.0, %v3212
          %v3214 = vpop.f32.mrf.mxu0
          %3215 = vmatprep.mubr.f32.mxu0 0.0
          %3216 = vmatmul.mubr.f32.gmra.mxu0 %v3010
          %v3217 = vpop.f32.mrf.mxu0
          %v3218 = vadd.f32 0.0, %v3217
          %v3219 = vpop.f32.mrf.mxu0
          %3220 = vmatprep.mubr.f32.mxu0 0.0
          %3221 = vmatmul.mubr.f32.gmra.mxu0 %v3013
          %v3222 = vpop.f32.mrf.mxu0
          %v3223 = vadd.f32 0.0, %v3222
          %v3224 = vpop.f32.mrf.mxu0
          %3225 = vmatprep.mubr.f32.mxu0 0.0
          %3226 = vmatmul.mubr.f32.gmra.mxu0 %v3016
          %v3227 = vpop.f32.mrf.mxu0
          %v3228 = vadd.f32 0.0, %v3227
          %v3229 = vpop.f32.mrf.mxu0
          %3230 = vmatprep.mubr.f32.mxu0 0.0
          %3231 = vmatmul.mubr.f32.gmra.mxu0 %v3019
          %v3232 = vpop.f32.mrf.mxu0
          %v3233 = vadd.f32 0.0, %v3232
          %v3234 = vpop.f32.mrf.mxu0
          %3235 = vmatprep.mubr.f32.mxu0 0.0
          %3236 = vmatmul.mubr.f32.gmra.mxu0 %v3022
          %v3237 = vpop.f32.mrf.mxu0
          %v3238 = vadd.f32 0.0, %v3237
          %v3239 = vpop.f32.mrf.mxu0
          %3240 = vmatprep.mubr.f32.mxu0 0.0
          %3241 = vmatmul.mubr.f32.gmra.mxu0 %v3025
          %v3242 = vpop.f32.mrf.mxu0
          %v3243 = vadd.f32 0.0, %v3242
          %v3244 = vpop.f32.mrf.mxu0
          %3245 = vmatprep.mubr.f32.mxu0 0.0
          %3246 = vmatmul.mubr.f32.gmra.mxu0 %v3028
          %v3247 = vpop.f32.mrf.mxu0
          %v3248 = vadd.f32 0.0, %v3247
          %v3249 = vpop.f32.mrf.mxu0
          %3250 = vmatprep.mubr.f32.mxu0 0.0
          %3251 = vmatmul.mubr.f32.gmra.mxu0 %v3031
          %v3252 = vpop.f32.mrf.mxu0
          %v3253 = vadd.f32 0.0, %v3252
          %v3254 = vpop.f32.mrf.mxu0
          %3255 = vmatprep.mubr.f32.mxu0 0.0
          %3256 = vmatmul.mubr.f32.gmra.mxu0 %v3034
          %v3257 = vpop.f32.mrf.mxu0
          %v3258 = vadd.f32 0.0, %v3257
          %v3259 = vpop.f32.mrf.mxu0
          %3260 = vdwg.mxu0
          %v3261 = vsel %vm2838, %v3103, 0.0
          %v3262 = vsel %vm2838, %v3108, 0.0
          %v3263 = vadd.f32 %v3261, %v3262
          %v3264 = vsel %vm2838, %v3113, 0.0
          %v3265 = vadd.f32 %v3263, %v3264
          %v3266 = vsel %vm2838, %v3118, 0.0
          %v3267 = vadd.f32 %v3265, %v3266
          %v3268 = vsel %vm2838, %v3123, 0.0
          %v3269 = vadd.f32 %v3267, %v3268
          %v3270 = vsel %vm2838, %v3128, 0.0
          %v3271 = vadd.f32 %v3269, %v3270
          %v3272 = vsel %vm2838, %v3133, 0.0
          %v3273 = vadd.f32 %v3271, %v3272
          %v3274 = vsel %vm2838, %v3138, 0.0
          %v3275 = vadd.f32 %v3273, %v3274
          %v3276 = vsel %vm2838, %v3143, 0.0
          %v3277 = vadd.f32 %v3275, %v3276
          %v3278 = vsel %vm2838, %v3148, 0.0
          %v3279 = vadd.f32 %v3277, %v3278
          %v3280 = vsel %vm2838, %v3153, 0.0
          %v3281 = vadd.f32 %v3279, %v3280
          %v3282 = vsel %vm2838, %v3158, 0.0
          %v3283 = vadd.f32 %v3281, %v3282
          %v3284 = vsel %vm2838, %v3163, 0.0
          %v3285 = vadd.f32 %v3283, %v3284
          %v3286 = vsel %vm2838, %v3168, 0.0
          %v3287 = vadd.f32 %v3285, %v3286
          %v3288 = vsel %vm2838, %v3173, 0.0
          %v3289 = vadd.f32 %v3287, %v3288
          %v3290 = vsel %vm2838, %v3178, 0.0
          %v3291 = vadd.f32 %v3289, %v3290
          %v3292 = vsel %vm2838, %v3183, 0.0
          %v3293 = vadd.f32 %v3291, %v3292
          %v3294 = vsel %vm2838, %v3188, 0.0
          %v3295 = vadd.f32 %v3293, %v3294
          %v3296 = vsel %vm2838, %v3193, 0.0
          %v3297 = vadd.f32 %v3295, %v3296
          %v3298 = vsel %vm2838, %v3198, 0.0
          %v3299 = vadd.f32 %v3297, %v3298
          %v3300 = vsel %vm2838, %v3203, 0.0
          %v3301 = vadd.f32 %v3299, %v3300
          %v3302 = vsel %vm2838, %v3208, 0.0
          %v3303 = vadd.f32 %v3301, %v3302
          %v3304 = vsel %vm2838, %v3213, 0.0
          %v3305 = vadd.f32 %v3303, %v3304
          %v3306 = vsel %vm2838, %v3218, 0.0
          %v3307 = vadd.f32 %v3305, %v3306
          %v3308 = vsel %vm2838, %v3223, 0.0
          %v3309 = vadd.f32 %v3307, %v3308
          %v3310 = vsel %vm2838, %v3228, 0.0
          %v3311 = vadd.f32 %v3309, %v3310
          %v3312 = vsel %vm2838, %v3233, 0.0
          %v3313 = vadd.f32 %v3311, %v3312
          %v3314 = vsel %vm2838, %v3238, 0.0
          %v3315 = vadd.f32 %v3313, %v3314
          %v3316 = vsel %vm2838, %v3243, 0.0
          %v3317 = vadd.f32 %v3315, %v3316
          %v3318 = vsel %vm2838, %v3248, 0.0
          %v3319 = vadd.f32 %v3317, %v3318
          %v3320 = vsel %vm2838, %v3253, 0.0
          %v3321 = vadd.f32 %v3319, %v3320
          %v3322 = vsel %vm2838, %v3258, 0.0
          %v3323 = vadd.f32 %v3321, %v3322
          %v3324 = vrot.slane %v3323, 4
          %v3325 = vadd.f32 %v3323, %v3324
          %v3326 = vrot.slane %v3325, 2
          %v3327 = vadd.f32 %v3325, %v3326
          %v3328 = vrot.slane %v3327, 1
          %v3329 = vadd.f32 %v3327, %v3328
          %v3330 = vrcp.pop 512.0
          %v3331 = vmul.f32 %v2907, %v3330
          %v3332 = vmul.f32 %v3329, %v3330
          %v3333 = vmul.f32 %v3331, %v3331
          %v3334 = vsub.f32 %v3332, %v3333
          %v3336 = vsel %vm2838, %v3331, 0
          %3338 = vmatprep.subr.mxu0 0.0
          %3339 = vmatpush1.msra.mxu0 0.0
          %3340 = vmatprep.subr.mxu0 0.0
          %3341 = vmatpush1.msra.mxu0 0.0
          %3342 = vmatprep.subr.mxu0 0.0
          %3343 = vmatpush1.msra.mxu0 0.0
          %3344 = vmatprep.subr.mxu0 0.0
          %3345 = vmatpush1.msra.mxu0 0.0
          %3346 = vmatprep.subr.mxu0 0.0
          %3347 = vmatpush1.msra.mxu0 0.0
          %3348 = vmatprep.subr.mxu0 0.0
          %3349 = vmatpush1.msra.mxu0 0.0
          %3350 = vmatprep.subr.mxu0 0.0
          %3351 = vmatpush1.msra.mxu0 0.0
          %3352 = vmatprep.subr.mxu0 0.0
          %3353 = vmatpush1.msra.mxu0 0.0
          %3354 = vmatprep.subr.mxu0 0.0
          %3355 = vmatpush1.msra.mxu0 0.0
          %3356 = vmatprep.subr.mxu0 0.0
          %3357 = vmatpush1.msra.mxu0 0.0
          %3358 = vmatprep.subr.mxu0 0.0
          %3359 = vmatpush1.msra.mxu0 0.0
          %3360 = vmatprep.subr.mxu0 0.0
          %3361 = vmatpush1.msra.mxu0 0.0
          %3362 = vmatprep.subr.mxu0 0.0
          %3363 = vmatpush1.msra.mxu0 %v2516
          %3364 = vmatprep.subr.mxu0 0.0
          %3365 = vmatpush1.msra.mxu0 %v2515
          %3366 = vmatprep.subr.mxu0 0.0
          %3367 = vmatpush1.msra.mxu0 %v2514
          %3368 = vmatprep.subr.mxu0 0.0
          %3369 = vmatpush1.msra.mxu0 %v2513
          %3370 = vmatprep.subr.mxu0 0.0
          %3371 = vmatpush2.msra.mxu0 0.0
          %3372 = vmatprep.subr.mxu0 0.0
          %3373 = vmatpush2.msra.mxu0 0.0
          %3374 = vmatprep.subr.mxu0 0.0
          %3375 = vmatpush2.msra.mxu0 0.0
          %3376 = vmatprep.subr.mxu0 0.0
          %3377 = vmatpush2.msra.mxu0 0.0
          %3378 = vmatprep.subr.mxu0 0.0
          %3379 = vmatpush2.msra.mxu0 0.0
          %3380 = vmatprep.subr.mxu0 0.0
          %3381 = vmatpush2.msra.mxu0 0.0
          %3382 = vmatprep.subr.mxu0 0.0
          %3383 = vmatpush2.msra.mxu0 0.0
          %3384 = vmatprep.subr.mxu0 0.0
          %3385 = vmatpush2.msra.mxu0 0.0
          %3386 = vmatprep.subr.mxu0 0.0
          %3387 = vmatpush2.msra.mxu0 0.0
          %3388 = vmatprep.subr.mxu0 0.0
          %3389 = vmatpush2.msra.mxu0 0.0
          %3390 = vmatprep.subr.mxu0 0.0
          %3391 = vmatpush2.msra.mxu0 0.0
          %3392 = vmatprep.subr.mxu0 0.0
          %3393 = vmatpush2.msra.mxu0 0.0
          %3394 = vmatprep.subr.mxu0 0.0
          %3395 = vmatpush2.msra.mxu0 0.0
          %3396 = vmatprep.subr.mxu0 0.0
          %3397 = vmatpush2.msra.mxu0 0.0
          %3398 = vmatprep.subr.mxu0 0.0
          %3399 = vmatpush2.msra.mxu0 0.0
          %3400 = vmatprep.subr.mxu0 0.0
          %3401 = vmatpush2.msra.mxu0 0.0
          %3402 = vmatprep.mubr.f32.mxu0 0.0
          %3403 = vmatmul.mubr.f32.gmra.mxu0 %v3336
          %v3404 = vpop.f32.mrf.mxu0
          %v3405 = vadd.f32 0.0, %v3404
          %v3406 = vpop.f32.mrf.mxu0
          %3407 = vdwg.mxu0
          %v3409 = vsel %vm2838, %v3334, 0
          %3411 = vmatprep.subr.mxu0 0.0
          %3412 = vmatpush1.msra.mxu0 0.0
          %3413 = vmatprep.subr.mxu0 0.0
          %3414 = vmatpush1.msra.mxu0 0.0
          %3415 = vmatprep.subr.mxu0 0.0
          %3416 = vmatpush1.msra.mxu0 0.0
          %3417 = vmatprep.subr.mxu0 0.0
          %3418 = vmatpush1.msra.mxu0 0.0
          %3419 = vmatprep.subr.mxu0 0.0
          %3420 = vmatpush1.msra.mxu0 0.0
          %3421 = vmatprep.subr.mxu0 0.0
          %3422 = vmatpush1.msra.mxu0 0.0
          %3423 = vmatprep.subr.mxu0 0.0
          %3424 = vmatpush1.msra.mxu0 0.0
          %3425 = vmatprep.subr.mxu0 0.0
          %3426 = vmatpush1.msra.mxu0 0.0
          %3427 = vmatprep.subr.mxu0 0.0
          %3428 = vmatpush1.msra.mxu0 0.0
          %3429 = vmatprep.subr.mxu0 0.0
          %3430 = vmatpush1.msra.mxu0 0.0
          %3431 = vmatprep.subr.mxu0 0.0
          %3432 = vmatpush1.msra.mxu0 0.0
          %3433 = vmatprep.subr.mxu0 0.0
          %3434 = vmatpush1.msra.mxu0 0.0
          %3435 = vmatprep.subr.mxu0 0.0
          %3436 = vmatpush1.msra.mxu0 %v2516
          %3437 = vmatprep.subr.mxu0 0.0
          %3438 = vmatpush1.msra.mxu0 %v2515
          %3439 = vmatprep.subr.mxu0 0.0
          %3440 = vmatpush1.msra.mxu0 %v2514
          %3441 = vmatprep.subr.mxu0 0.0
          %3442 = vmatpush1.msra.mxu0 %v2513
          %3443 = vmatprep.subr.mxu0 0.0
          %3444 = vmatpush2.msra.mxu0 0.0
          %3445 = vmatprep.subr.mxu0 0.0
          %3446 = vmatpush2.msra.mxu0 0.0
          %3447 = vmatprep.subr.mxu0 0.0
          %3448 = vmatpush2.msra.mxu0 0.0
          %3449 = vmatprep.subr.mxu0 0.0
          %3450 = vmatpush2.msra.mxu0 0.0
          %3451 = vmatprep.subr.mxu0 0.0
          %3452 = vmatpush2.msra.mxu0 0.0
          %3453 = vmatprep.subr.mxu0 0.0
          %3454 = vmatpush2.msra.mxu0 0.0
          %3455 = vmatprep.subr.mxu0 0.0
          %3456 = vmatpush2.msra.mxu0 0.0
          %3457 = vmatprep.subr.mxu0 0.0
          %3458 = vmatpush2.msra.mxu0 0.0
          %3459 = vmatprep.subr.mxu0 0.0
          %3460 = vmatpush2.msra.mxu0 0.0
          %3461 = vmatprep.subr.mxu0 0.0
          %3462 = vmatpush2.msra.mxu0 0.0
          %3463 = vmatprep.subr.mxu0 0.0
          %3464 = vmatpush2.msra.mxu0 0.0
          %3465 = vmatprep.subr.mxu0 0.0
          %3466 = vmatpush2.msra.mxu0 0.0
          %3467 = vmatprep.subr.mxu0 0.0
          %3468 = vmatpush2.msra.mxu0 0.0
          %3469 = vmatprep.subr.mxu0 0.0
          %3470 = vmatpush2.msra.mxu0 0.0
          %3471 = vmatprep.subr.mxu0 0.0
          %3472 = vmatpush2.msra.mxu0 0.0
          %3473 = vmatprep.subr.mxu0 0.0
          %3474 = vmatpush2.msra.mxu0 0.0
          %3475 = vmatprep.mubr.f32.mxu0 0.0
          %3476 = vmatmul.mubr.f32.gmra.mxu0 %v3409
          %v3477 = vpop.f32.mrf.mxu0
          %v3478 = vadd.f32 1e-05, %v3477
          %v3479 = vpop.f32.mrf.mxu0
          %3480 = vdwg.mxu0
          %v3481 = vrsqrt.pop %v3478
          %v3482 = vmul.f32 %v3481, %v2467
          %v3483 = vmul.f32 %v3405, %v3482
          %v3484 = vsub.f32 %v2468, %v3483
          %v3485 = vlaneseq
          %v3486 = vshrl.u32 %v3485, 7
          %v3487 = vsub.s32 0, %v3486
          %v3488 = vrot.slane %v3482, %v3487
          %v3489 = vmul.f32 %v2473, %v3488
          %v3490 = vmul.f32 %v2474, %v3488
          %v3491 = vmul.f32 %v2475, %v3488
          %v3492 = vmul.f32 %v2476, %v3488
          %v3493 = vmul.f32 %v2477, %v3488
          %v3494 = vmul.f32 %v2478, %v3488
          %v3495 = vmul.f32 %v2479, %v3488
          %v3496 = vmul.f32 %v2480, %v3488
          %v3497 = vmul.f32 %v2481, %v3488
          %v3498 = vmul.f32 %v2482, %v3488
          %v3499 = vmul.f32 %v2483, %v3488
          %v3500 = vmul.f32 %v2484, %v3488
          %v3501 = vmul.f32 %v2485, %v3488
          %v3502 = vmul.f32 %v2486, %v3488
          %v3503 = vmul.f32 %v2487, %v3488
          %v3504 = vmul.f32 %v2488, %v3488
          %v3505 = vmul.f32 %v2489, %v3488
          %v3506 = vmul.f32 %v2490, %v3488
          %v3507 = vmul.f32 %v2491, %v3488
          %v3508 = vmul.f32 %v2492, %v3488
          %v3509 = vmul.f32 %v2493, %v3488
          %v3510 = vmul.f32 %v2494, %v3488
          %v3511 = vmul.f32 %v2495, %v3488
          %v3512 = vmul.f32 %v2496, %v3488
          %v3513 = vmul.f32 %v2497, %v3488
          %v3514 = vmul.f32 %v2498, %v3488
          %v3515 = vmul.f32 %v2499, %v3488
          %v3516 = vmul.f32 %v2500, %v3488
          %v3517 = vmul.f32 %v2501, %v3488
          %v3518 = vmul.f32 %v2502, %v3488
          %v3519 = vmul.f32 %v2503, %v3488
          %v3520 = vmul.f32 %v2504, %v3488
          %v3522 = vlaneseq
          %v3523 = vshrl.u32 %v3522, 7
          %v3524 = vsub.s32 0, %v3523
          %v3525 = vrot.slane %v3484, %v3524
          %v3527 = vadd.f32 %v3489, %v3525
          %v3528 = vadd.f32 %v3490, %v3525
          %v3529 = vadd.f32 %v3491, %v3525
          %v3530 = vadd.f32 %v3492, %v3525
          %v3531 = vadd.f32 %v3493, %v3525
          %v3532 = vadd.f32 %v3494, %v3525
          %v3533 = vadd.f32 %v3495, %v3525
          %v3534 = vadd.f32 %v3496, %v3525
          %v3535 = vadd.f32 %v3497, %v3525
          %v3536 = vadd.f32 %v3498, %v3525
          %v3537 = vadd.f32 %v3499, %v3525
          %v3538 = vadd.f32 %v3500, %v3525
          %v3539 = vadd.f32 %v3501, %v3525
          %v3540 = vadd.f32 %v3502, %v3525
          %v3541 = vadd.f32 %v3503, %v3525
          %v3542 = vadd.f32 %v3504, %v3525
          %v3543 = vadd.f32 %v3505, %v3525
          %v3544 = vadd.f32 %v3506, %v3525
          %v3545 = vadd.f32 %v3507, %v3525
          %v3546 = vadd.f32 %v3508, %v3525
          %v3547 = vadd.f32 %v3509, %v3525
          %v3548 = vadd.f32 %v3510, %v3525
          %v3549 = vadd.f32 %v3511, %v3525
          %v3550 = vadd.f32 %v3512, %v3525
          %v3551 = vadd.f32 %v3513, %v3525
          %v3552 = vadd.f32 %v3514, %v3525
          %v3553 = vadd.f32 %v3515, %v3525
          %v3554 = vadd.f32 %v3516, %v3525
          %v3555 = vadd.f32 %v3517, %v3525
          %v3556 = vadd.f32 %v3518, %v3525
          %v3557 = vadd.f32 %v3519, %v3525
          %v3558 = vadd.f32 %v3520, %v3525
          %v3559 = vmax.f32 %v3527, 0.0
          %v3560 = vmax.f32 %v3528, 0.0
          %v3561 = vmax.f32 %v3529, 0.0
          %v3562 = vmax.f32 %v3530, 0.0
          %v3563 = vmax.f32 %v3531, 0.0
          %v3564 = vmax.f32 %v3532, 0.0
          %v3565 = vmax.f32 %v3533, 0.0
          %v3566 = vmax.f32 %v3534, 0.0
          %v3567 = vmax.f32 %v3535, 0.0
          %v3568 = vmax.f32 %v3536, 0.0
          %v3569 = vmax.f32 %v3537, 0.0
          %v3570 = vmax.f32 %v3538, 0.0
          %v3571 = vmax.f32 %v3539, 0.0
          %v3572 = vmax.f32 %v3540, 0.0
          %v3573 = vmax.f32 %v3541, 0.0
          %v3574 = vmax.f32 %v3542, 0.0
          %v3575 = vmax.f32 %v3543, 0.0
          %v3576 = vmax.f32 %v3544, 0.0
          %v3577 = vmax.f32 %v3545, 0.0
          %v3578 = vmax.f32 %v3546, 0.0
          %v3579 = vmax.f32 %v3547, 0.0
          %v3580 = vmax.f32 %v3548, 0.0
          %v3581 = vmax.f32 %v3549, 0.0
          %v3582 = vmax.f32 %v3550, 0.0
          %v3583 = vmax.f32 %v3551, 0.0
          %v3584 = vmax.f32 %v3552, 0.0
          %v3585 = vmax.f32 %v3553, 0.0
          %v3586 = vmax.f32 %v3554, 0.0
          %v3587 = vmax.f32 %v3555, 0.0
          %v3588 = vmax.f32 %v3556, 0.0
          %v3589 = vmax.f32 %v3557, 0.0
          %v3590 = vmax.f32 %v3558, 0.0
          %3591 = vst.msk [vmem:[%s1069 + $0x1] sm:$0xff] %vm659, %v3559
          %3592 = vst.msk [vmem:[%s1069 + $0x9] sm:$0xff] %vm659, %v3560
          %3593 = vst.msk [vmem:[%s1069 + $0x19] sm:$0xff] %vm659, %v3561
          %3594 = vst.msk [vmem:[%s1069 + $0x21] sm:$0xff] %vm659, %v3562
          %3595 = vst.msk [vmem:[%s1069 + $0x31] sm:$0xff] %vm659, %v3563
          %3596 = vst.msk [vmem:[%s1069 + $0x39] sm:$0xff] %vm659, %v3564
          %3597 = vst.msk [vmem:[%s1069 + $0x49] sm:$0xff] %vm659, %v3565
          %3598 = vst.msk [vmem:[%s1069 + $0x51] sm:$0xff] %vm659, %v3566
          %3599 = vst.msk [vmem:[%s1069 + $0x61] sm:$0xff] %vm659, %v3567
          %3600 = vst.msk [vmem:[%s1069 + $0x69] sm:$0xff] %vm659, %v3568
          %3601 = vst.msk [vmem:[%s1069 + $0x79] sm:$0xff] %vm659, %v3569
          %3602 = vst.msk [vmem:[%s1069 + $0x81] sm:$0xff] %vm659, %v3570
          %3603 = vst.msk [vmem:[%s1069 + $0x91] sm:$0xff] %vm659, %v3571
          %3604 = vst.msk [vmem:[%s1069 + $0x99] sm:$0xff] %vm659, %v3572
          %3605 = vst.msk [vmem:[%s1069 + $0xa9] sm:$0xff] %vm659, %v3573
          %3606 = vst.msk [vmem:[%s1069 + $0xb1] sm:$0xff] %vm659, %v3574
          %3607 = vst.msk [vmem:[%s1069 + $0xc1] sm:$0xff] %vm659, %v3575
          %3608 = vst.msk [vmem:[%s1069 + $0xc9] sm:$0xff] %vm659, %v3576
          %3609 = vst.msk [vmem:[%s1069 + $0xd9] sm:$0xff] %vm659, %v3577
          %3610 = vst.msk [vmem:[%s1069 + $0xe1] sm:$0xff] %vm659, %v3578
          %3611 = vst.msk [vmem:[%s1069 + $0xf1] sm:$0xff] %vm659, %v3579
          %3612 = vst.msk [vmem:[%s1069 + $0xf9] sm:$0xff] %vm659, %v3580
          %3613 = vst.msk [vmem:[%s1069 + $0x109] sm:$0xff] %vm659, %v3581
          %3614 = vst.msk [vmem:[%s1069 + $0x111] sm:$0xff] %vm659, %v3582
          %3615 = vst.msk [vmem:[%s1069 + $0x121] sm:$0xff] %vm659, %v3583
          %3616 = vst.msk [vmem:[%s1069 + $0x129] sm:$0xff] %vm659, %v3584
          %3617 = vst.msk [vmem:[%s1069 + $0x139] sm:$0xff] %vm659, %v3585
          %3618 = vst.msk [vmem:[%s1069 + $0x141] sm:$0xff] %vm659, %v3586
          %3619 = vst.msk [vmem:[%s1069 + $0x151] sm:$0xff] %vm659, %v3587
          %3620 = vst.msk [vmem:[%s1069 + $0x159] sm:$0xff] %vm659, %v3588
          %3621 = vst.msk [vmem:[%s1069 + $0x169] sm:$0xff] %vm659, %v3589
          %3622 = vst.msk [vmem:[%s1069 + $0x171] sm:$0xff] %vm659, %v3590
        $region52: #{tpu_custom_call.1} parent=43 // pred_fallthru
          _
        %p3623 = scmp.eq.s32.totalorder %s25, 7
        // Predicated region
        $region53: #{tpu_custom_call.1} parent=43 // pred_check
          %p3624 = pneg %p3623
        $region54: #{tpu_custom_call.1} parent=43 // pred_check_branch
          %3626 = sbr.rel (%p3624) target = $region56
        $region55: #{tpu_custom_call.1} parent=43 // pred_region
          %v3627 = vld [vmem:[#allocation3] sm:$0xff]
          %v3628 = vld [vmem:[#allocation3 + $0x8] sm:$0xff]
          %v3629 = vld [vmem:[#allocation3 + $0x10] sm:$0xff]
          %v3630 = vld [vmem:[#allocation3 + $0x18] sm:$0xff]
          %v3631 = vld [vmem:[#allocation3 + $0x20] sm:$0xff]
          %v3632 = vld [vmem:[#allocation3 + $0x28] sm:$0xff]
          %v3633 = vld [vmem:[#allocation3 + $0x30] sm:$0xff]
          %v3634 = vld [vmem:[#allocation3 + $0x38] sm:$0xff]
          %v3635 = vld [vmem:[#allocation3 + $0x40] sm:$0xff]
          %v3636 = vld [vmem:[#allocation3 + $0x48] sm:$0xff]
          %v3637 = vld [vmem:[#allocation3 + $0x50] sm:$0xff]
          %v3638 = vld [vmem:[#allocation3 + $0x58] sm:$0xff]
          %v3639 = vld [vmem:[#allocation3 + $0x60] sm:$0xff]
          %v3640 = vld [vmem:[#allocation3 + $0x68] sm:$0xff]
          %v3641 = vld [vmem:[#allocation3 + $0x70] sm:$0xff]
          %v3642 = vld [vmem:[#allocation3 + $0x78] sm:$0xff]
          %v3643 = vld [vmem:[#allocation3 + $0x80] sm:$0xff]
          %v3644 = vld [vmem:[#allocation3 + $0x88] sm:$0xff]
          %v3645 = vld [vmem:[#allocation3 + $0x90] sm:$0xff]
          %v3646 = vld [vmem:[#allocation3 + $0x98] sm:$0xff]
          %v3647 = vld [vmem:[#allocation3 + $0xa0] sm:$0xff]
          %v3648 = vld [vmem:[#allocation3 + $0xa8] sm:$0xff]
          %v3649 = vld [vmem:[#allocation3 + $0xb0] sm:$0xff]
          %v3650 = vld [vmem:[#allocation3 + $0xb8] sm:$0xff]
          %v3651 = vld [vmem:[#allocation3 + $0xc0] sm:$0xff]
          %v3652 = vld [vmem:[#allocation3 + $0xc8] sm:$0xff]
          %v3653 = vld [vmem:[#allocation3 + $0xd0] sm:$0xff]
          %v3654 = vld [vmem:[#allocation3 + $0xd8] sm:$0xff]
          %v3655 = vld [vmem:[#allocation3 + $0xe0] sm:$0xff]
          %v3656 = vld [vmem:[#allocation3 + $0xe8] sm:$0xff]
          %v3657 = vld [vmem:[#allocation3 + $0xf0] sm:$0xff]
          %v3658 = vld [vmem:[#allocation3 + $0xf8] sm:$0xff]
          %v3660 = vlaneseq
          %v3661 = vshrl.u32 %v3660, 7
          %v3662 = vsub.s32 0, %v3661
          %v3663 = vrot.slane %v2468, %v3662
          %v3665 = vadd.f32 %v3627, %v3663
          %v3666 = vadd.f32 %v3628, %v3663
          %v3667 = vadd.f32 %v3629, %v3663
          %v3668 = vadd.f32 %v3630, %v3663
          %v3669 = vadd.f32 %v3631, %v3663
          %v3670 = vadd.f32 %v3632, %v3663
          %v3671 = vadd.f32 %v3633, %v3663
          %v3672 = vadd.f32 %v3634, %v3663
          %v3673 = vadd.f32 %v3635, %v3663
          %v3674 = vadd.f32 %v3636, %v3663
          %v3675 = vadd.f32 %v3637, %v3663
          %v3676 = vadd.f32 %v3638, %v3663
          %v3677 = vadd.f32 %v3639, %v3663
          %v3678 = vadd.f32 %v3640, %v3663
          %v3679 = vadd.f32 %v3641, %v3663
          %v3680 = vadd.f32 %v3642, %v3663
          %v3681 = vadd.f32 %v3643, %v3663
          %v3682 = vadd.f32 %v3644, %v3663
          %v3683 = vadd.f32 %v3645, %v3663
          %v3684 = vadd.f32 %v3646, %v3663
          %v3685 = vadd.f32 %v3647, %v3663
          %v3686 = vadd.f32 %v3648, %v3663
          %v3687 = vadd.f32 %v3649, %v3663
          %v3688 = vadd.f32 %v3650, %v3663
          %v3689 = vadd.f32 %v3651, %v3663
          %v3690 = vadd.f32 %v3652, %v3663
          %v3691 = vadd.f32 %v3653, %v3663
          %v3692 = vadd.f32 %v3654, %v3663
          %v3693 = vadd.f32 %v3655, %v3663
          %v3694 = vadd.f32 %v3656, %v3663
          %v3695 = vadd.f32 %v3657, %v3663
          %v3696 = vadd.f32 %v3658, %v3663
          %v3697 = vxor.u32 %v3665, 2147483648
          %v3698 = vxor.u32 %v3666, 2147483648
          %v3699 = vxor.u32 %v3667, 2147483648
          %v3700 = vxor.u32 %v3668, 2147483648
          %v3701 = vxor.u32 %v3669, 2147483648
          %v3702 = vxor.u32 %v3670, 2147483648
          %v3703 = vxor.u32 %v3671, 2147483648
          %v3704 = vxor.u32 %v3672, 2147483648
          %v3705 = vxor.u32 %v3673, 2147483648
          %v3706 = vxor.u32 %v3674, 2147483648
          %v3707 = vxor.u32 %v3675, 2147483648
          %v3708 = vxor.u32 %v3676, 2147483648
          %v3709 = vxor.u32 %v3677, 2147483648
          %v3710 = vxor.u32 %v3678, 2147483648
          %v3711 = vxor.u32 %v3679, 2147483648
          %v3712 = vxor.u32 %v3680, 2147483648
          %v3713 = vxor.u32 %v3681, 2147483648
          %v3714 = vxor.u32 %v3682, 2147483648
          %v3715 = vxor.u32 %v3683, 2147483648
          %v3716 = vxor.u32 %v3684, 2147483648
          %v3717 = vxor.u32 %v3685, 2147483648
          %v3718 = vxor.u32 %v3686, 2147483648
          %v3719 = vxor.u32 %v3687, 2147483648
          %v3720 = vxor.u32 %v3688, 2147483648
          %v3721 = vxor.u32 %v3689, 2147483648
          %v3722 = vxor.u32 %v3690, 2147483648
          %v3723 = vxor.u32 %v3691, 2147483648
          %v3724 = vxor.u32 %v3692, 2147483648
          %v3725 = vxor.u32 %v3693, 2147483648
          %v3726 = vxor.u32 %v3694, 2147483648
          %v3727 = vxor.u32 %v3695, 2147483648
          %v3728 = vxor.u32 %v3696, 2147483648
          %v3729 = vmul.f32 %v3697, 1.442695
          %v3730 = vpow.pop %v3729
          %v3731 = vmul.f32 %v3698, 1.442695
          %v3732 = vpow.pop %v3731
          %v3733 = vmul.f32 %v3699, 1.442695
          %v3734 = vpow.pop %v3733
          %v3735 = vmul.f32 %v3700, 1.442695
          %v3736 = vpow.pop %v3735
          %v3737 = vmul.f32 %v3701, 1.442695
          %v3738 = vpow.pop %v3737
          %v3739 = vmul.f32 %v3702, 1.442695
          %v3740 = vpow.pop %v3739
          %v3741 = vmul.f32 %v3703, 1.442695
          %v3742 = vpow.pop %v3741
          %v3743 = vmul.f32 %v3704, 1.442695
          %v3744 = vpow.pop %v3743
          %v3745 = vmul.f32 %v3705, 1.442695
          %v3746 = vpow.pop %v3745
          %v3747 = vmul.f32 %v3706, 1.442695
          %v3748 = vpow.pop %v3747
          %v3749 = vmul.f32 %v3707, 1.442695
          %v3750 = vpow.pop %v3749
          %v3751 = vmul.f32 %v3708, 1.442695
          %v3752 = vpow.pop %v3751
          %v3753 = vmul.f32 %v3709, 1.442695
          %v3754 = vpow.pop %v3753
          %v3755 = vmul.f32 %v3710, 1.442695
          %v3756 = vpow.pop %v3755
          %v3757 = vmul.f32 %v3711, 1.442695
          %v3758 = vpow.pop %v3757
          %v3759 = vmul.f32 %v3712, 1.442695
          %v3760 = vpow.pop %v3759
          %v3761 = vmul.f32 %v3713, 1.442695
          %v3762 = vpow.pop %v3761
          %v3763 = vmul.f32 %v3714, 1.442695
          %v3764 = vpow.pop %v3763
          %v3765 = vmul.f32 %v3715, 1.442695
          %v3766 = vpow.pop %v3765
          %v3767 = vmul.f32 %v3716, 1.442695
          %v3768 = vpow.pop %v3767
          %v3769 = vmul.f32 %v3717, 1.442695
          %v3770 = vpow.pop %v3769
          %v3771 = vmul.f32 %v3718, 1.442695
          %v3772 = vpow.pop %v3771
          %v3773 = vmul.f32 %v3719, 1.442695
          %v3774 = vpow.pop %v3773
          %v3775 = vmul.f32 %v3720, 1.442695
          %v3776 = vpow.pop %v3775
          %v3777 = vmul.f32 %v3721, 1.442695
          %v3778 = vpow.pop %v3777
          %v3779 = vmul.f32 %v3722, 1.442695
          %v3780 = vpow.pop %v3779
          %v3781 = vmul.f32 %v3723, 1.442695
          %v3782 = vpow.pop %v3781
          %v3783 = vmul.f32 %v3724, 1.442695
          %v3784 = vpow.pop %v3783
          %v3785 = vmul.f32 %v3725, 1.442695
          %v3786 = vpow.pop %v3785
          %v3787 = vmul.f32 %v3726, 1.442695
          %v3788 = vpow.pop %v3787
          %v3789 = vmul.f32 %v3727, 1.442695
          %v3790 = vpow.pop %v3789
          %v3791 = vmul.f32 %v3728, 1.442695
          %v3792 = vpow.pop %v3791
          %v3793 = vadd.f32 %v3730, 1.0
          %v3794 = vadd.f32 %v3732, 1.0
          %v3795 = vadd.f32 %v3734, 1.0
          %v3796 = vadd.f32 %v3736, 1.0
          %v3797 = vadd.f32 %v3738, 1.0
          %v3798 = vadd.f32 %v3740, 1.0
          %v3799 = vadd.f32 %v3742, 1.0
          %v3800 = vadd.f32 %v3744, 1.0
          %v3801 = vadd.f32 %v3746, 1.0
          %v3802 = vadd.f32 %v3748, 1.0
          %v3803 = vadd.f32 %v3750, 1.0
          %v3804 = vadd.f32 %v3752, 1.0
          %v3805 = vadd.f32 %v3754, 1.0
          %v3806 = vadd.f32 %v3756, 1.0
          %v3807 = vadd.f32 %v3758, 1.0
          %v3808 = vadd.f32 %v3760, 1.0
          %v3809 = vadd.f32 %v3762, 1.0
          %v3810 = vadd.f32 %v3764, 1.0
          %v3811 = vadd.f32 %v3766, 1.0
          %v3812 = vadd.f32 %v3768, 1.0
          %v3813 = vadd.f32 %v3770, 1.0
          %v3814 = vadd.f32 %v3772, 1.0
          %v3815 = vadd.f32 %v3774, 1.0
          %v3816 = vadd.f32 %v3776, 1.0
          %v3817 = vadd.f32 %v3778, 1.0
          %v3818 = vadd.f32 %v3780, 1.0
          %v3819 = vadd.f32 %v3782, 1.0
          %v3820 = vadd.f32 %v3784, 1.0
          %v3821 = vadd.f32 %v3786, 1.0
          %v3822 = vadd.f32 %v3788, 1.0
          %v3823 = vadd.f32 %v3790, 1.0
          %v3824 = vadd.f32 %v3792, 1.0
          %v3825 = vrcp.pop %v3793
          %v3826 = vmul.f32 1.0, %v3825
          %v3827 = vrcp.pop %v3794
          %v3828 = vmul.f32 1.0, %v3827
          %v3829 = vrcp.pop %v3795
          %v3830 = vmul.f32 1.0, %v3829
          %v3831 = vrcp.pop %v3796
          %v3832 = vmul.f32 1.0, %v3831
          %v3833 = vrcp.pop %v3797
          %v3834 = vmul.f32 1.0, %v3833
          %v3835 = vrcp.pop %v3798
          %v3836 = vmul.f32 1.0, %v3835
          %v3837 = vrcp.pop %v3799
          %v3838 = vmul.f32 1.0, %v3837
          %v3839 = vrcp.pop %v3800
          %v3840 = vmul.f32 1.0, %v3839
          %v3841 = vrcp.pop %v3801
          %v3842 = vmul.f32 1.0, %v3841
          %v3843 = vrcp.pop %v3802
          %v3844 = vmul.f32 1.0, %v3843
          %v3845 = vrcp.pop %v3803
          %v3846 = vmul.f32 1.0, %v3845
          %v3847 = vrcp.pop %v3804
          %v3848 = vmul.f32 1.0, %v3847
          %v3849 = vrcp.pop %v3805
          %v3850 = vmul.f32 1.0, %v3849
          %v3851 = vrcp.pop %v3806
          %v3852 = vmul.f32 1.0, %v3851
          %v3853 = vrcp.pop %v3807
          %v3854 = vmul.f32 1.0, %v3853
          %v3855 = vrcp.pop %v3808
          %v3856 = vmul.f32 1.0, %v3855
          %v3857 = vrcp.pop %v3809
          %v3858 = vmul.f32 1.0, %v3857
          %v3859 = vrcp.pop %v3810
          %v3860 = vmul.f32 1.0, %v3859
          %v3861 = vrcp.pop %v3811
          %v3862 = vmul.f32 1.0, %v3861
          %v3863 = vrcp.pop %v3812
          %v3864 = vmul.f32 1.0, %v3863
          %v3865 = vrcp.pop %v3813
          %v3866 = vmul.f32 1.0, %v3865
          %v3867 = vrcp.pop %v3814
          %v3868 = vmul.f32 1.0, %v3867
          %v3869 = vrcp.pop %v3815
          %v3870 = vmul.f32 1.0, %v3869
          %v3871 = vrcp.pop %v3816
          %v3872 = vmul.f32 1.0, %v3871
          %v3873 = vrcp.pop %v3817
          %v3874 = vmul.f32 1.0, %v3873
          %v3875 = vrcp.pop %v3818
          %v3876 = vmul.f32 1.0, %v3875
          %v3877 = vrcp.pop %v3819
          %v3878 = vmul.f32 1.0, %v3877
          %v3879 = vrcp.pop %v3820
          %v3880 = vmul.f32 1.0, %v3879
          %v3881 = vrcp.pop %v3821
          %v3882 = vmul.f32 1.0, %v3881
          %v3883 = vrcp.pop %v3822
          %v3884 = vmul.f32 1.0, %v3883
          %v3885 = vrcp.pop %v3823
          %v3886 = vmul.f32 1.0, %v3885
          %v3887 = vrcp.pop %v3824
          %v3888 = vmul.f32 1.0, %v3887
          %3889 = vst.msk [vmem:[%s293] sm:$0xff] %vm659, %v3826
          %3890 = vst.msk [vmem:[%s293 + $0x8] sm:$0xff] %vm659, %v3828
          %3891 = vst.msk [vmem:[%s293 + $0x10] sm:$0xff] %vm659, %v3830
          %3892 = vst.msk [vmem:[%s293 + $0x18] sm:$0xff] %vm659, %v3832
          %3893 = vst.msk [vmem:[%s293 + $0x20] sm:$0xff] %vm659, %v3834
          %3894 = vst.msk [vmem:[%s293 + $0x28] sm:$0xff] %vm659, %v3836
          %3895 = vst.msk [vmem:[%s293 + $0x30] sm:$0xff] %vm659, %v3838
          %3896 = vst.msk [vmem:[%s293 + $0x38] sm:$0xff] %vm659, %v3840
          %3897 = vst.msk [vmem:[%s293 + $0x40] sm:$0xff] %vm659, %v3842
          %3898 = vst.msk [vmem:[%s293 + $0x48] sm:$0xff] %vm659, %v3844
          %3899 = vst.msk [vmem:[%s293 + $0x50] sm:$0xff] %vm659, %v3846
          %3900 = vst.msk [vmem:[%s293 + $0x58] sm:$0xff] %vm659, %v3848
          %3901 = vst.msk [vmem:[%s293 + $0x60] sm:$0xff] %vm659, %v3850
          %3902 = vst.msk [vmem:[%s293 + $0x68] sm:$0xff] %vm659, %v3852
          %3903 = vst.msk [vmem:[%s293 + $0x70] sm:$0xff] %vm659, %v3854
          %3904 = vst.msk [vmem:[%s293 + $0x78] sm:$0xff] %vm659, %v3856
          %3905 = vst.msk [vmem:[%s293 + $0x80] sm:$0xff] %vm659, %v3858
          %3906 = vst.msk [vmem:[%s293 + $0x88] sm:$0xff] %vm659, %v3860
          %3907 = vst.msk [vmem:[%s293 + $0x90] sm:$0xff] %vm659, %v3862
          %3908 = vst.msk [vmem:[%s293 + $0x98] sm:$0xff] %vm659, %v3864
          %3909 = vst.msk [vmem:[%s293 + $0xa0] sm:$0xff] %vm659, %v3866
          %3910 = vst.msk [vmem:[%s293 + $0xa8] sm:$0xff] %vm659, %v3868
          %3911 = vst.msk [vmem:[%s293 + $0xb0] sm:$0xff] %vm659, %v3870
          %3912 = vst.msk [vmem:[%s293 + $0xb8] sm:$0xff] %vm659, %v3872
          %3913 = vst.msk [vmem:[%s293 + $0xc0] sm:$0xff] %vm659, %v3874
          %3914 = vst.msk [vmem:[%s293 + $0xc8] sm:$0xff] %vm659, %v3876
          %3915 = vst.msk [vmem:[%s293 + $0xd0] sm:$0xff] %vm659, %v3878
          %3916 = vst.msk [vmem:[%s293 + $0xd8] sm:$0xff] %vm659, %v3880
          %3917 = vst.msk [vmem:[%s293 + $0xe0] sm:$0xff] %vm659, %v3882
          %3918 = vst.msk [vmem:[%s293 + $0xe8] sm:$0xff] %vm659, %v3884
          %3919 = vst.msk [vmem:[%s293 + $0xf0] sm:$0xff] %vm659, %v3886
          %3920 = vst.msk [vmem:[%s293 + $0xf8] sm:$0xff] %vm659, %v3888
        $region56: #{tpu_custom_call.1} parent=43 // pred_fallthru
          _
        %s3921 = sand.u32 %s186, 1
        %s3922 = scalar_lea.sflag [#allocation5], %s3921
        %s3923 = sand.u32 %s186, 1
        %s3924 = smul.addr %s3923, 256
        %s3925 = scalar_lea.vmem [#allocation4], %s3924
        // Predicated region
        $region57: #{tpu_custom_call.1} parent=43 // pred_check
          %p3926 = pneg %p196
        $region58: #{tpu_custom_call.1} parent=43 // pred_check_branch
          %3928 = sbr.rel (%p3926) target = $region60
        $region59: #{tpu_custom_call.1} parent=43 // pred_region
          %s3930 = ssub.s32 4096, 4096
          %3931 = vsyncadd %s3922, %s3930
          %s3932 = smul.addr %s24, 32
          %s3933 = smul.addr %s3932, 128
          %s3934 = scalar_lea.hbm %s6, %s3933
          %s3935 = sshll.u32 %s3925, 4
          %s3936 = int_to_ptr.vmem [resolvable:$true] %s3935
          %3941 = dma.vmem_to_hbm [thread:$0]  %s3936, 4096, %s3934, %s3922, 128, 128, 8
        $region60: #{tpu_custom_call.1} parent=43 // pred_fallthru
          _
      $region44: #{tpu_custom_call.1} parent=5 // pred_fallthru
        _
      %p3942 = scmp.le.s32.totalorder 2, %s15
      // Predicated region
      $region61: #{tpu_custom_call.1} parent=5 // pred_check
        %p3943 = pneg %p3942
      $region62: #{tpu_custom_call.1} parent=5 // pred_check_branch
        %3945 = sbr.rel (%p3943) target = $region64
      $region63: #{tpu_custom_call.1} parent=5 // pred_region
        %s3946 = ssub.s32 %s15, 2
        // Predicated region
        $region65: #{tpu_custom_call.1} parent=63 // pred_check
          %p3947 = pneg %p202
        $region66: #{tpu_custom_call.1} parent=63 // pred_check_branch
          %3949 = sbr.rel (%p3947) target = $region68
        $region67: #{tpu_custom_call.1} parent=63 // pred_region
          %s3950 = sand.u32 %s187, 1
          %s3951 = scalar_lea.sflag [#allocation5], %s3950
          %s3952 = sand.u32 %s187, 1
          %s3953 = smul.addr %s3952, 256
          %s3954 = scalar_lea.vmem [#allocation4], %s3953
          %3955 = dma.done %s3951, 4096
        $region68: #{tpu_custom_call.1} parent=63 // pred_fallthru
          _
      $region64: #{tpu_custom_call.1} parent=5 // pred_fallthru
        _
    $region6: #{tpu_custom_call.1} parent=1 // loop_footer
      %s19 = sadd.s32 1, %s15
    $region7: #{tpu_custom_call.1} parent=1 // loop_footer_branch
      %14 = sbr.rel target = $region3
    $region8: #{tpu_custom_call.1} parent=1 // loop_exit
      _
    %3956 = vsyncpa [#allocation5], 1
    %s3957 = scalar_lea.sflag [#allocation5], 1
    %3958 = vsyncpa %s3957, 1

</llo_original>
